<compile_context>
chip_gen: v7x
topology: tpu7x:2x2x1
jax: 0.10.0
libtpu: 0.0.40
codegen_flags: <defaults>
</compile_context>

<pallas_src>
import jax
import jax.numpy as jnp
from jax.experimental import pallas as pl


# ----------------------------------------------------------------------------
# Pallas kernel: full forward in one gridless invocation.
# ----------------------------------------------------------------------------
def _ias_kernel(x_ref, m_ref,
                wih0_ref, whh0_ref, b0_ref,
                wih1_ref, whh1_ref, b1_ref,
                wslot_ref, bslot_ref, wint_ref, bint_ref,
                slots_ref, intent_ref):
    T, Bp, _ = m_ref.shape
    H = whh0_ref.shape[0]
    Pslot = wslot_ref.shape[1]
    dtype = x_ref.dtype                      # MXU operand dtype (f32 or bf16)

    # Hoist weight loads and bias broadcasts out of the unrolled time loop.
    whh0 = whh0_ref[...]
    wih1 = wih1_ref[...]
    whh1 = whh1_ref[...]
    wslot = wslot_ref[...]
    b1 = jnp.broadcast_to(b1_ref[...], (Bp, 4 * H))
    bslot = jnp.broadcast_to(bslot_ref[...], (Bp, Pslot))

    # Layer-0 input projection for all timesteps: one off-critical-path matmul
    # with the layer-0 bias folded in.  Per step we just slice 8 sublane rows.
    xproj = (jnp.dot(x_ref[...], wih0_ref[...],
                     preferred_element_type=jnp.float32)
             + b0_ref[...])                                   # (T*Bp, 4H) f32

    def gates_to_hc(gates, c_prev):
        # Wrapper pre-scales the g-gate (2H:3H) columns by 2, so
        # tanh(x) == 2*sigmoid(2x) - 1 reuses the full-vreg sigmoid.
        s = jax.nn.sigmoid(gates)
        i = s[:, 0:H]
        f = s[:, H:2 * H]
        g = 2.0 * s[:, 2 * H:3 * H] - 1.0
        o = s[:, 3 * H:4 * H]
        c_new = f * c_prev + i * g
        h_new = o * jnp.tanh(c_new)
        return h_new, c_new

    zeros = jnp.zeros((Bp, H), jnp.float32)
    h0, c0, h1, c1 = zeros, zeros, zeros, zeros

    # Static unroll: T is small here.
    # TODO(synk): for large T switch to lax.fori_loop(..., unroll=4..8) to cap
    # code size / vreg pressure while keeping LLO scheduling visibility.
    for t in range(T):
        valid = m_ref[t] > 0.0                               # (Bp, 1) bool
        # Layer 0: single dependent dot on the serial critical path.
        g0 = (xproj[t * Bp:(t + 1) * Bp, :]
              + jnp.dot(h0.astype(dtype), whh0,
                        preferred_element_type=jnp.float32))
        h0n, c0n = gates_to_hc(g0, c0)
        # Layer 1: two accumulating dots instead of a 64-lane concat.
        g1 = (jnp.dot(h0n.astype(dtype), wih1,
                      preferred_element_type=jnp.float32)
              + jnp.dot(h1.astype(dtype), whh1,
                        preferred_element_type=jnp.float32)
              + b1)
        h1n, c1n = gates_to_hc(g1, c1)
        # Packed-sequence semantics: state only advances on valid steps.
        h0 = jnp.where(valid, h0n, h0)
        c0 = jnp.where(valid, c0n, c0)
        h1 = jnp.where(valid, h1n, h1)
        c1 = jnp.where(valid, c1n, c1)
        out_t = jnp.where(valid, h1n, 0.0)      # pad_packed_sequence zero-fill
        # Per-step lane-dense slot projection: hides under recurrence latency.
        slots_ref[pl.ds(t * Bp, Bp), :] = (
            jnp.dot(out_t.astype(dtype), wslot,
                    preferred_element_type=jnp.float32) + bslot)

    # Intent from the final carried h1 (== packed LSTM h_n of the top layer).
    intent_ref[...] = (jnp.dot(h1.astype(dtype), wint_ref[...],
                               preferred_element_type=jnp.float32)
                       + bint_ref[...])


# ----------------------------------------------------------------------------
# Wrapper: embedding gather, padding, gate pre-scaling, pallas_call plumbing.
# ----------------------------------------------------------------------------
def _round_up(x, m):
    return ((x + m - 1) // m) * m


def _forward_impl(params, utterance, seq_lengths, matmul_dtype):
    """utterance: (B, T) int32, seq_lengths: (B,) int32.
    Returns (slots, intent): slots (B, out_slot, T), intent (B, out_int)."""
    B, T = utterance.shape
    H = params["whh0"].shape[0]
    out_slot = params["wslot"].shape[1]
    out_int = params["wint"].shape[1]

    Bp = _round_up(B, 8)              # sublane-pad the batch
    Pslot = _round_up(out_slot, 128)  # lane-dense head outputs
    Pint = _round_up(out_int, 128)

    # Embedding lookup + dropout(p=0) identity, time-major, batch-padded, then
    # flattened to (T*Bp, E) so the kernel's layer-0 projection is one matmul.
    emb = params["embedding"][utterance]                    # (B, T, E)
    emb = jnp.transpose(emb, (1, 0, 2))                     # (T, B, E)
    emb = jnp.pad(emb, ((0, 0), (0, Bp - B), (0, 0)))       # (T, Bp, E)
    emb = emb.reshape(T * Bp, -1).astype(matmul_dtype)      # (T*Bp, E)

    # Validity mask (replaces pack_padded_sequence): 1.0 at valid (t, b).
    mask = (jnp.arange(T)[:, None] < seq_lengths[None, :].astype(jnp.int32))
    mask = mask.astype(jnp.float32)                         # (T, B)
    mask = jnp.pad(mask, ((0, 0), (0, Bp - B)))[:, :, None]  # (T, Bp, 1)

    # Pre-scale g-gate columns by 2: tanh(x) = 2*sigmoid(2x) - 1 in the kernel.
    idx = jnp.arange(4 * H)
    gate_scale = jnp.where((idx >= 2 * H) & (idx < 3 * H), 2.0, 1.0)

    wih0 = (params["wih0"] * gate_scale).astype(matmul_dtype)
    whh0 = (params["whh0"] * gate_scale).astype(matmul_dtype)
    b0 = params["b0"] * gate_scale
    wih1 = (params["wih1"] * gate_scale).astype(matmul_dtype)
    whh1 = (params["whh1"] * gate_scale).astype(matmul_dtype)
    b1 = params["b1"] * gate_scale

    # Lane-dense (zero-padded to 128) head weights/biases.
    wslot_p = jnp.pad(params["wslot"],
                      ((0, 0), (0, Pslot - out_slot))).astype(matmul_dtype)
    bslot_p = jnp.pad(params["bslot"], ((0, 0), (0, Pslot - out_slot)))
    wint_p = jnp.pad(params["wint"],
                     ((0, 0), (0, Pint - out_int))).astype(matmul_dtype)
    bint_p = jnp.pad(params["bint"], ((0, 0), (0, Pint - out_int)))

    slots_flat, intent_p = pl.pallas_call(
        _ias_kernel,
        out_shape=(
            jax.ShapeDtypeStruct((T * Bp, Pslot), jnp.float32),
            jax.ShapeDtypeStruct((Bp, Pint), jnp.float32),
        ),
    )(emb, mask, wih0, whh0, b0, wih1, whh1, b1,
      wslot_p, bslot_p, wint_p, bint_p)

    slots = slots_flat.reshape(T, Bp, Pslot)[:, :B, :out_slot]  # (T, B, out_slot)
    slots = jnp.transpose(slots, (1, 2, 0))                     # (B, out_slot, T)
    intent = intent_p[:B, :out_int]                             # (B, out_int)
    return slots, intent


model_ias_forward = jax.jit(_forward_impl, static_argnames=("matmul_dtype",))


# ----------------------------------------------------------------------------
# Pure-JAX reference (mirrors the PyTorch forward) for validation.
# ----------------------------------------------------------------------------
def model_ias_reference(params, utterance, seq_lengths):
    emb = params["embedding"][utterance]
    emb = jnp.transpose(emb, (1, 0, 2))                    # (T, B, E)
    T, B, _E = emb.shape
    H = params["whh0"].shape[0]

    def cell(x, h, c, wih, whh, b):
        g = x @ wih + h @ whh + b
        i = jax.nn.sigmoid(g[:, 0:H])
        f = jax.nn.sigmoid(g[:, H:2 * H])
        gg = jnp.tanh(g[:, 2 * H:3 * H])
        o = jax.nn.sigmoid(g[:, 3 * H:4 * H])
        c_new = f * c + i * gg
        h_new = o * jnp.tanh(c_new)
        return h_new, c_new

    h0 = c0 = h1 = c1 = jnp.zeros((B, H), jnp.float32)
    lengths = seq_lengths.astype(jnp.int32).reshape(B, 1)
    outs = []
    for t in range(T):
        m = t < lengths
        h0n, c0n = cell(emb[t], h0, c0, params["wih0"], params["whh0"], params["b0"])
        h1n, c1n = cell(h0n, h1, c1, params["wih1"], params["whh1"], params["b1"])
        h0 = jnp.where(m, h0n, h0); c0 = jnp.where(m, c0n, c0)
        h1 = jnp.where(m, h1n, h1); c1 = jnp.where(m, c1n, c1)
        outs.append(jnp.where(m, h1n, 0.0))
    utt_encoded = jnp.stack(outs)                            # (T, B, H)
    slots = utt_encoded @ params["wslot"] + params["bslot"]  # (T, B, out_slot)
    intent = h1 @ params["wint"] + params["bint"]            # (B, out_int)
    return jnp.transpose(slots, (1, 2, 0)), intent


# ----------------------------------------------------------------------------
# Deterministic parameter construction (shapes from ModelIAS.__init__).
# ----------------------------------------------------------------------------
def init_params(key, vocab_len, emb_size, hid_size, out_slot, out_int):
    ks = jax.random.split(key, 12)
    s = 0.1
    emb = s * jax.random.normal(ks[0], (vocab_len, emb_size), jnp.float32)
    emb = emb.at[0].set(0.0)                    # padding_idx = 0
    return {
        "embedding": emb,
        # layer 0 (input emb_size), stored pre-transposed: x @ W -> (B, 4H)
        "wih0": s * jax.random.normal(ks[1], (emb_size, 4 * hid_size), jnp.float32),
        "whh0": s * jax.random.normal(ks[2], (hid_size, 4 * hid_size), jnp.float32),
        "b0": s * jax.random.normal(ks[3], (1, 4 * hid_size), jnp.float32),  # b_ih+b_hh
        # layer 1 (input hid_size)
        "wih1": s * jax.random.normal(ks[4], (hid_size, 4 * hid_size), jnp.float32),
        "whh1": s * jax.random.normal(ks[5], (hid_size, 4 * hid_size), jnp.float32),
        "b1": s * jax.random.normal(ks[6], (1, 4 * hid_size), jnp.float32),
        # heads
        "wslot": s * jax.random.normal(ks[7], (hid_size, out_slot), jnp.float32),
        "bslot": s * jax.random.normal(ks[8], (1, out_slot), jnp.float32),
        "wint": s * jax.random.normal(ks[9], (hid_size, out_int), jnp.float32),
        "bint": s * jax.random.normal(ks[10], (1, out_int), jnp.float32),
    }


if __name__ == "__main__":
    # Small config: hid_size=32, emb_size=16, vocab=30, out_slot=12, out_int=6,
    # n_layer=2, dropout_prob=0 (identity), bidirectional=False.
    vocab_len, emb_size, hid_size, out_slot, out_int = 30, 16, 32, 12, 6
    B, T = 2, 8

    key = jax.random.PRNGKey(0)
    pkey, tkey = jax.random.split(key)
    params = init_params(pkey, vocab_len, emb_size, hid_size, out_slot, out_int)

    # Tokens (pad index 0 at padded positions); longest sequence fills T, so
    # the static-T kernel output matches pad_packed_sequence exactly.
    seq_lengths = jnp.array([8, 5], dtype=jnp.int32)
    utterance = jax.random.randint(tkey, (B, T), 1, vocab_len, dtype=jnp.int32)
    pad_mask = jnp.arange(T)[None, :] < seq_lengths[:, None]
    utterance = jnp.where(pad_mask, utterance, 0)

    slots_gold, intent_gold = model_ias_reference(params, utterance, seq_lengths)

    # f32-operand build (validation-grade; also the right operand dtype on v5e).
    slots32, intent32 = model_ias_forward(params, utterance, seq_lengths,
                                          matmul_dtype=jnp.float32)
    jax.block_until_ready((slots32, intent32))
    assert slots32.shape == (B, out_slot, T) and intent32.shape == (B, out_int)
    assert jnp.allclose(slots32, slots_gold, rtol=1e-3, atol=1e-3)
    assert jnp.allclose(intent32, intent_gold, rtol=1e-3, atol=1e-3)

    # bf16-operand build (fast path on v6e/v7x; f32 accumulation & state math).
    slots16, intent16 = model_ias_forward(params, utterance, seq_lengths,
                                          matmul_dtype=jnp.bfloat16)
    jax.block_until_ready((slots16, intent16))
    assert slots16.shape == (B, out_slot, T) and intent16.shape == (B, out_int)
    assert jnp.allclose(slots16, slots_gold, rtol=5e-2, atol=5e-2)
    assert jnp.allclose(intent16, intent_gold, rtol=5e-2, atol=5e-2)

    print("KERNEL_OK")
</pallas_src>

<mosaic_0001>
module attributes {stable_mosaic.version = 11 : i64} {
  func.func @_ias_kernel(%arg0: memref<64x16xf32, #tpu.memory_space<vmem>>, %arg1: memref<8x8x1xf32, #tpu.memory_space<vmem>>, %arg2: memref<16x128xf32, #tpu.memory_space<vmem>>, %arg3: memref<32x128xf32, #tpu.memory_space<vmem>>, %arg4: memref<1x128xf32, #tpu.memory_space<vmem>>, %arg5: memref<32x128xf32, #tpu.memory_space<vmem>>, %arg6: memref<32x128xf32, #tpu.memory_space<vmem>>, %arg7: memref<1x128xf32, #tpu.memory_space<vmem>>, %arg8: memref<32x128xf32, #tpu.memory_space<vmem>>, %arg9: memref<1x128xf32, #tpu.memory_space<vmem>>, %arg10: memref<32x128xf32, #tpu.memory_space<vmem>>, %arg11: memref<1x128xf32, #tpu.memory_space<vmem>>, %arg12: memref<64x128xf32, #tpu.memory_space<vmem>>, %arg13: memref<8x128xf32, #tpu.memory_space<vmem>>) attributes {dimension_semantics = [], scalar_prefetch = 0 : i64, scratch_operands = 0 : i64, tpu.core_type = #tpu.core_type<tc>} {
    %c0 = arith.constant 0 : index
    %c0_0 = arith.constant 0 : index
    %0 = vector.load %arg3[%c0, %c0_0] : memref<32x128xf32, #tpu.memory_space<vmem>>, vector<32x128xf32>
    %c0_1 = arith.constant 0 : index
    %c0_2 = arith.constant 0 : index
    %1 = vector.load %arg5[%c0_1, %c0_2] : memref<32x128xf32, #tpu.memory_space<vmem>>, vector<32x128xf32>
    %c0_3 = arith.constant 0 : index
    %c0_4 = arith.constant 0 : index
    %2 = vector.load %arg6[%c0_3, %c0_4] : memref<32x128xf32, #tpu.memory_space<vmem>>, vector<32x128xf32>
    %c0_5 = arith.constant 0 : index
    %c0_6 = arith.constant 0 : index
    %3 = vector.load %arg8[%c0_5, %c0_6] : memref<32x128xf32, #tpu.memory_space<vmem>>, vector<32x128xf32>
    %c0_7 = arith.constant 0 : index
    %c0_8 = arith.constant 0 : index
    %4 = vector.load %arg7[%c0_7, %c0_8] : memref<1x128xf32, #tpu.memory_space<vmem>>, vector<1x128xf32>
    %5 = vector.shape_cast %4 : vector<1x128xf32> to vector<1x128xf32>
    %6 = vector.broadcast %5 : vector<1x128xf32> to vector<8x128xf32>
    %c0_9 = arith.constant 0 : index
    %c0_10 = arith.constant 0 : index
    %7 = vector.load %arg9[%c0_9, %c0_10] : memref<1x128xf32, #tpu.memory_space<vmem>>, vector<1x128xf32>
    %8 = vector.shape_cast %7 : vector<1x128xf32> to vector<1x128xf32>
    %9 = vector.broadcast %8 : vector<1x128xf32> to vector<8x128xf32>
    %c0_11 = arith.constant 0 : index
    %c0_12 = arith.constant 0 : index
    %10 = vector.load %arg0[%c0_11, %c0_12] : memref<64x16xf32, #tpu.memory_space<vmem>>, vector<64x16xf32>
    %c0_13 = arith.constant 0 : index
    %c0_14 = arith.constant 0 : index
    %11 = vector.load %arg2[%c0_13, %c0_14] : memref<16x128xf32, #tpu.memory_space<vmem>>, vector<16x128xf32>
    %cst = arith.constant dense<0.000000e+00> : vector<64x128xf32>
    %12 = tpu.matmul %10, %11, %cst {dimension_numbers = #tpu.dot_dimension_numbers<[1], [0], [0], [1], [0, 0, 1, 1], [], []>} : vector<64x16xf32>, vector<16x128xf32>, vector<64x128xf32> -> vector<64x128xf32>
    %c0_15 = arith.constant 0 : index
    %c0_16 = arith.constant 0 : index
    %13 = vector.load %arg4[%c0_15, %c0_16] : memref<1x128xf32, #tpu.memory_space<vmem>>, vector<1x128xf32>
    %14 = vector.broadcast %13 : vector<1x128xf32> to vector<64x128xf32>
    %15 = arith.addf %12, %14 : vector<64x128xf32>
    %cst_17 = arith.constant 0.000000e+00 : f32
    %16 = vector.broadcast %cst_17 : f32 to vector<8x32xf32>
    %c0_18 = arith.constant 0 : index
    %c0_19 = arith.constant 0 : index
    %c0_20 = arith.constant 0 : index
    %17 = vector.load %arg1[%c0_18, %c0_19, %c0_20] : memref<8x8x1xf32, #tpu.memory_space<vmem>>, vector<1x8x1xf32>
    %18 = vector.shape_cast %17 : vector<1x8x1xf32> to vector<8x1xf32>
    %cst_21 = arith.constant 0.000000e+00 : f32
    %19 = vector.broadcast %cst_21 : f32 to vector<8x1xf32>
    %20 = arith.cmpf ogt, %18, %19 : vector<8x1xf32>
    %21 = vector.extract_strided_slice %15 {offsets = [0, 0], sizes = [8, 128], strides = [1, 1]} : vector<64x128xf32> to vector<8x128xf32>
    %cst_22 = arith.constant dense<0.000000e+00> : vector<8x128xf32>
    %22 = tpu.matmul %16, %0, %cst_22 {dimension_numbers = #tpu.dot_dimension_numbers<[1], [0], [0], [1], [0, 0, 1, 1], [], []>} : vector<8x32xf32>, vector<32x128xf32>, vector<8x128xf32> -> vector<8x128xf32>
    %23 = arith.addf %21, %22 : vector<8x128xf32>
    %24 = arith.negf %23 : vector<8x128xf32>
    %25 = math.exp %24 : vector<8x128xf32>
    %cst_23 = arith.constant 1.000000e+00 : f32
    %26 = vector.broadcast %cst_23 : f32 to vector<8x128xf32>
    %27 = arith.addf %26, %25 : vector<8x128xf32>
    %28 = arith.divf %26, %27 : vector<8x128xf32>
    %29 = vector.extract_strided_slice %28 {offsets = [0, 0], sizes = [8, 32], strides = [1, 1]} : vector<8x128xf32> to vector<8x32xf32>
    %30 = vector.extract_strided_slice %28 {offsets = [0, 32], sizes = [8, 32], strides = [1, 1]} : vector<8x128xf32> to vector<8x32xf32>
    %31 = vector.extract_strided_slice %28 {offsets = [0, 64], sizes = [8, 32], strides = [1, 1]} : vector<8x128xf32> to vector<8x32xf32>
    %cst_24 = arith.constant 2.000000e+00 : f32
    %32 = vector.broadcast %cst_24 : f32 to vector<8x32xf32>
    %33 = arith.mulf %32, %31 : vector<8x32xf32>
    %cst_25 = arith.constant 1.000000e+00 : f32
    %34 = vector.broadcast %cst_25 : f32 to vector<8x32xf32>
    %35 = arith.subf %33, %34 : vector<8x32xf32>
    %36 = vector.extract_strided_slice %28 {offsets = [0, 96], sizes = [8, 32], strides = [1, 1]} : vector<8x128xf32> to vector<8x32xf32>
    %37 = arith.mulf %30, %16 : vector<8x32xf32>
    %38 = arith.mulf %29, %35 : vector<8x32xf32>
    %39 = arith.addf %37, %38 : vector<8x32xf32>
    %40 = math.tanh %39 : vector<8x32xf32>
    %41 = arith.mulf %36, %40 : vector<8x32xf32>
    %cst_26 = arith.constant dense<0.000000e+00> : vector<8x128xf32>
    %42 = tpu.matmul %41, %1, %cst_26 {dimension_numbers = #tpu.dot_dimension_numbers<[1], [0], [0], [1], [0, 0, 1, 1], [], []>} : vector<8x32xf32>, vector<32x128xf32>, vector<8x128xf32> -> vector<8x128xf32>
    %cst_27 = arith.constant dense<0.000000e+00> : vector<8x128xf32>
    %43 = tpu.matmul %16, %2, %cst_27 {dimension_numbers = #tpu.dot_dimension_numbers<[1], [0], [0], [1], [0, 0, 1, 1], [], []>} : vector<8x32xf32>, vector<32x128xf32>, vector<8x128xf32> -> vector<8x128xf32>
    %44 = arith.addf %42, %43 : vector<8x128xf32>
    %45 = arith.addf %44, %6 : vector<8x128xf32>
    %46 = arith.negf %45 : vector<8x128xf32>
    %47 = math.exp %46 : vector<8x128xf32>
    %cst_28 = arith.constant 1.000000e+00 : f32
    %48 = vector.broadcast %cst_28 : f32 to vector<8x128xf32>
    %49 = arith.addf %48, %47 : vector<8x128xf32>
    %50 = arith.divf %48, %49 : vector<8x128xf32>
    %51 = vector.extract_strided_slice %50 {offsets = [0, 0], sizes = [8, 32], strides = [1, 1]} : vector<8x128xf32> to vector<8x32xf32>
    %52 = vector.extract_strided_slice %50 {offsets = [0, 32], sizes = [8, 32], strides = [1, 1]} : vector<8x128xf32> to vector<8x32xf32>
    %53 = vector.extract_strided_slice %50 {offsets = [0, 64], sizes = [8, 32], strides = [1, 1]} : vector<8x128xf32> to vector<8x32xf32>
    %cst_29 = arith.constant 2.000000e+00 : f32
    %54 = vector.broadcast %cst_29 : f32 to vector<8x32xf32>
    %55 = arith.mulf %54, %53 : vector<8x32xf32>
    %cst_30 = arith.constant 1.000000e+00 : f32
    %56 = vector.broadcast %cst_30 : f32 to vector<8x32xf32>
    %57 = arith.subf %55, %56 : vector<8x32xf32>
    %58 = vector.extract_strided_slice %50 {offsets = [0, 96], sizes = [8, 32], strides = [1, 1]} : vector<8x128xf32> to vector<8x32xf32>
    %59 = arith.mulf %52, %16 : vector<8x32xf32>
    %60 = arith.mulf %51, %57 : vector<8x32xf32>
    %61 = arith.addf %59, %60 : vector<8x32xf32>
    %62 = math.tanh %61 : vector<8x32xf32>
    %63 = arith.mulf %58, %62 : vector<8x32xf32>
    %64 = vector.shape_cast %20 : vector<8x1xi1> to vector<8x1xi1>
    %65 = vector.broadcast %64 : vector<8x1xi1> to vector<8x32xi1>
    %66 = arith.select %65, %41, %16 : vector<8x32xi1>, vector<8x32xf32>
    %67 = vector.shape_cast %20 : vector<8x1xi1> to vector<8x1xi1>
    %68 = vector.broadcast %67 : vector<8x1xi1> to vector<8x32xi1>
    %69 = arith.select %68, %39, %16 : vector<8x32xi1>, vector<8x32xf32>
    %70 = vector.shape_cast %20 : vector<8x1xi1> to vector<8x1xi1>
    %71 = vector.broadcast %70 : vector<8x1xi1> to vector<8x32xi1>
    %72 = arith.select %71, %63, %16 : vector<8x32xi1>, vector<8x32xf32>
    %73 = vector.shape_cast %20 : vector<8x1xi1> to vector<8x1xi1>
    %74 = vector.broadcast %73 : vector<8x1xi1> to vector<8x32xi1>
    %75 = arith.select %74, %61, %16 : vector<8x32xi1>, vector<8x32xf32>
    %cst_31 = arith.constant 0.000000e+00 : f32
    %76 = vector.shape_cast %20 : vector<8x1xi1> to vector<8x1xi1>
    %77 = vector.broadcast %76 : vector<8x1xi1> to vector<8x32xi1>
    %78 = vector.broadcast %cst_31 : f32 to vector<8x32xf32>
    %79 = arith.select %77, %63, %78 : vector<8x32xi1>, vector<8x32xf32>
    %cst_32 = arith.constant dense<0.000000e+00> : vector<8x128xf32>
    %80 = tpu.matmul %79, %3, %cst_32 {dimension_numbers = #tpu.dot_dimension_numbers<[1], [0], [0], [1], [0, 0, 1, 1], [], []>} : vector<8x32xf32>, vector<32x128xf32>, vector<8x128xf32> -> vector<8x128xf32>
    %81 = arith.addf %80, %9 : vector<8x128xf32>
    %c0_33 = arith.constant 0 : index
    %c0_34 = arith.constant 0 : index
    %82 = vector.load %arg12[%c0_33, %c0_34] : memref<64x128xf32, #tpu.memory_space<vmem>>, vector<8x128xf32>
    tpu.vector_store %arg12[%c0_33, %c0_34], %81 {strides = array<i32>} : memref<64x128xf32, #tpu.memory_space<vmem>>, vector<8x128xf32>,
    %c1 = arith.constant 1 : index
    %c0_35 = arith.constant 0 : index
    %c0_36 = arith.constant 0 : index
    %83 = vector.load %arg1[%c1, %c0_35, %c0_36] : memref<8x8x1xf32, #tpu.memory_space<vmem>>, vector<1x8x1xf32>
    %84 = vector.shape_cast %83 : vector<1x8x1xf32> to vector<8x1xf32>
    %cst_37 = arith.constant 0.000000e+00 : f32
    %85 = vector.broadcast %cst_37 : f32 to vector<8x1xf32>
    %86 = arith.cmpf ogt, %84, %85 : vector<8x1xf32>
    %87 = vector.extract_strided_slice %15 {offsets = [8, 0], sizes = [8, 128], strides = [1, 1]} : vector<64x128xf32> to vector<8x128xf32>
    %cst_38 = arith.constant dense<0.000000e+00> : vector<8x128xf32>
    %88 = tpu.matmul %66, %0, %cst_38 {dimension_numbers = #tpu.dot_dimension_numbers<[1], [0], [0], [1], [0, 0, 1, 1], [], []>} : vector<8x32xf32>, vector<32x128xf32>, vector<8x128xf32> -> vector<8x128xf32>
    %89 = arith.addf %87, %88 : vector<8x128xf32>
    %90 = arith.negf %89 : vector<8x128xf32>
    %91 = math.exp %90 : vector<8x128xf32>
    %cst_39 = arith.constant 1.000000e+00 : f32
    %92 = vector.broadcast %cst_39 : f32 to vector<8x128xf32>
    %93 = arith.addf %92, %91 : vector<8x128xf32>
    %94 = arith.divf %92, %93 : vector<8x128xf32>
    %95 = vector.extract_strided_slice %94 {offsets = [0, 0], sizes = [8, 32], strides = [1, 1]} : vector<8x128xf32> to vector<8x32xf32>
    %96 = vector.extract_strided_slice %94 {offsets = [0, 32], sizes = [8, 32], strides = [1, 1]} : vector<8x128xf32> to vector<8x32xf32>
    %97 = vector.extract_strided_slice %94 {offsets = [0, 64], sizes = [8, 32], strides = [1, 1]} : vector<8x128xf32> to vector<8x32xf32>
    %cst_40 = arith.constant 2.000000e+00 : f32
    %98 = vector.broadcast %cst_40 : f32 to vector<8x32xf32>
    %99 = arith.mulf %98, %97 : vector<8x32xf32>
    %cst_41 = arith.constant 1.000000e+00 : f32
    %100 = vector.broadcast %cst_41 : f32 to vector<8x32xf32>
    %101 = arith.subf %99, %100 : vector<8x32xf32>
    %102 = vector.extract_strided_slice %94 {offsets = [0, 96], sizes = [8, 32], strides = [1, 1]} : vector<8x128xf32> to vector<8x32xf32>
    %103 = arith.mulf %96, %69 : vector<8x32xf32>
    %104 = arith.mulf %95, %101 : vector<8x32xf32>
    %105 = arith.addf %103, %104 : vector<8x32xf32>
    %106 = math.tanh %105 : vector<8x32xf32>
    %107 = arith.mulf %102, %106 : vector<8x32xf32>
    %cst_42 = arith.constant dense<0.000000e+00> : vector<8x128xf32>
    %108 = tpu.matmul %107, %1, %cst_42 {dimension_numbers = #tpu.dot_dimension_numbers<[1], [0], [0], [1], [0, 0, 1, 1], [], []>} : vector<8x32xf32>, vector<32x128xf32>, vector<8x128xf32> -> vector<8x128xf32>
    %cst_43 = arith.constant dense<0.000000e+00> : vector<8x128xf32>
    %109 = tpu.matmul %72, %2, %cst_43 {dimension_numbers = #tpu.dot_dimension_numbers<[1], [0], [0], [1], [0, 0, 1, 1], [], []>} : vector<8x32xf32>, vector<32x128xf32>, vector<8x128xf32> -> vector<8x128xf32>
    %110 = arith.addf %108, %109 : vector<8x128xf32>
    %111 = arith.addf %110, %6 : vector<8x128xf32>
    %112 = arith.negf %111 : vector<8x128xf32>
    %113 = math.exp %112 : vector<8x128xf32>
    %cst_44 = arith.constant 1.000000e+00 : f32
    %114 = vector.broadcast %cst_44 : f32 to vector<8x128xf32>
    %115 = arith.addf %114, %113 : vector<8x128xf32>
    %116 = arith.divf %114, %115 : vector<8x128xf32>
    %117 = vector.extract_strided_slice %116 {offsets = [0, 0], sizes = [8, 32], strides = [1, 1]} : vector<8x128xf32> to vector<8x32xf32>
    %118 = vector.extract_strided_slice %116 {offsets = [0, 32], sizes = [8, 32], strides = [1, 1]} : vector<8x128xf32> to vector<8x32xf32>
    %119 = vector.extract_strided_slice %116 {offsets = [0, 64], sizes = [8, 32], strides = [1, 1]} : vector<8x128xf32> to vector<8x32xf32>
    %cst_45 = arith.constant 2.000000e+00 : f32
    %120 = vector.broadcast %cst_45 : f32 to vector<8x32xf32>
    %121 = arith.mulf %120, %119 : vector<8x32xf32>
    %cst_46 = arith.constant 1.000000e+00 : f32
    %122 = vector.broadcast %cst_46 : f32 to vector<8x32xf32>
    %123 = arith.subf %121, %122 : vector<8x32xf32>
    %124 = vector.extract_strided_slice %116 {offsets = [0, 96], sizes = [8, 32], strides = [1, 1]} : vector<8x128xf32> to vector<8x32xf32>
    %125 = arith.mulf %118, %75 : vector<8x32xf32>
    %126 = arith.mulf %117, %123 : vector<8x32xf32>
    %127 = arith.addf %125, %126 : vector<8x32xf32>
    %128 = math.tanh %127 : vector<8x32xf32>
    %129 = arith.mulf %124, %128 : vector<8x32xf32>
    %130 = vector.shape_cast %86 : vector<8x1xi1> to vector<8x1xi1>
    %131 = vector.broadcast %130 : vector<8x1xi1> to vector<8x32xi1>
    %132 = arith.select %131, %107, %66 : vector<8x32xi1>, vector<8x32xf32>
    %133 = vector.shape_cast %86 : vector<8x1xi1> to vector<8x1xi1>
    %134 = vector.broadcast %133 : vector<8x1xi1> to vector<8x32xi1>
    %135 = arith.select %134, %105, %69 : vector<8x32xi1>, vector<8x32xf32>
    %136 = vector.shape_cast %86 : vector<8x1xi1> to vector<8x1xi1>
    %137 = vector.broadcast %136 : vector<8x1xi1> to vector<8x32xi1>
    %138 = arith.select %137, %129, %72 : vector<8x32xi1>, vector<8x32xf32>
    %139 = vector.shape_cast %86 : vector<8x1xi1> to vector<8x1xi1>
    %140 = vector.broadcast %139 : vector<8x1xi1> to vector<8x32xi1>
    %141 = arith.select %140, %127, %75 : vector<8x32xi1>, vector<8x32xf32>
    %cst_47 = arith.constant 0.000000e+00 : f32
    %142 = vector.shape_cast %86 : vector<8x1xi1> to vector<8x1xi1>
    %143 = vector.broadcast %142 : vector<8x1xi1> to vector<8x32xi1>
    %144 = vector.broadcast %cst_47 : f32 to vector<8x32xf32>
    %145 = arith.select %143, %129, %144 : vector<8x32xi1>, vector<8x32xf32>
    %cst_48 = arith.constant dense<0.000000e+00> : vector<8x128xf32>
    %146 = tpu.matmul %145, %3, %cst_48 {dimension_numbers = #tpu.dot_dimension_numbers<[1], [0], [0], [1], [0, 0, 1, 1], [], []>} : vector<8x32xf32>, vector<32x128xf32>, vector<8x128xf32> -> vector<8x128xf32>
    %147 = arith.addf %146, %9 : vector<8x128xf32>
    %c8 = arith.constant 8 : index
    %c0_49 = arith.constant 0 : index
    %148 = vector.load %arg12[%c8, %c0_49] : memref<64x128xf32, #tpu.memory_space<vmem>>, vector<8x128xf32>
    tpu.vector_store %arg12[%c8, %c0_49], %147 {strides = array<i32>} : memref<64x128xf32, #tpu.memory_space<vmem>>, vector<8x128xf32>,
    %c2 = arith.constant 2 : index
    %c0_50 = arith.constant 0 : index
    %c0_51 = arith.constant 0 : index
    %149 = vector.load %arg1[%c2, %c0_50, %c0_51] : memref<8x8x1xf32, #tpu.memory_space<vmem>>, vector<1x8x1xf32>
    %150 = vector.shape_cast %149 : vector<1x8x1xf32> to vector<8x1xf32>
    %cst_52 = arith.constant 0.000000e+00 : f32
    %151 = vector.broadcast %cst_52 : f32 to vector<8x1xf32>
    %152 = arith.cmpf ogt, %150, %151 : vector<8x1xf32>
    %153 = vector.extract_strided_slice %15 {offsets = [16, 0], sizes = [8, 128], strides = [1, 1]} : vector<64x128xf32> to vector<8x128xf32>
    %cst_53 = arith.constant dense<0.000000e+00> : vector<8x128xf32>
    %154 = tpu.matmul %132, %0, %cst_53 {dimension_numbers = #tpu.dot_dimension_numbers<[1], [0], [0], [1], [0, 0, 1, 1], [], []>} : vector<8x32xf32>, vector<32x128xf32>, vector<8x128xf32> -> vector<8x128xf32>
    %155 = arith.addf %153, %154 : vector<8x128xf32>
    %156 = arith.negf %155 : vector<8x128xf32>
    %157 = math.exp %156 : vector<8x128xf32>
    %cst_54 = arith.constant 1.000000e+00 : f32
    %158 = vector.broadcast %cst_54 : f32 to vector<8x128xf32>
    %159 = arith.addf %158, %157 : vector<8x128xf32>
    %160 = arith.divf %158, %159 : vector<8x128xf32>
    %161 = vector.extract_strided_slice %160 {offsets = [0, 0], sizes = [8, 32], strides = [1, 1]} : vector<8x128xf32> to vector<8x32xf32>
    %162 = vector.extract_strided_slice %160 {offsets = [0, 32], sizes = [8, 32], strides = [1, 1]} : vector<8x128xf32> to vector<8x32xf32>
    %163 = vector.extract_strided_slice %160 {offsets = [0, 64], sizes = [8, 32], strides = [1, 1]} : vector<8x128xf32> to vector<8x32xf32>
    %cst_55 = arith.constant 2.000000e+00 : f32
    %164 = vector.broadcast %cst_55 : f32 to vector<8x32xf32>
    %165 = arith.mulf %164, %163 : vector<8x32xf32>
    %cst_56 = arith.constant 1.000000e+00 : f32
    %166 = vector.broadcast %cst_56 : f32 to vector<8x32xf32>
    %167 = arith.subf %165, %166 : vector<8x32xf32>
    %168 = vector.extract_strided_slice %160 {offsets = [0, 96], sizes = [8, 32], strides = [1, 1]} : vector<8x128xf32> to vector<8x32xf32>
    %169 = arith.mulf %162, %135 : vector<8x32xf32>
    %170 = arith.mulf %161, %167 : vector<8x32xf32>
    %171 = arith.addf %169, %170 : vector<8x32xf32>
    %172 = math.tanh %171 : vector<8x32xf32>
    %173 = arith.mulf %168, %172 : vector<8x32xf32>
    %cst_57 = arith.constant dense<0.000000e+00> : vector<8x128xf32>
    %174 = tpu.matmul %173, %1, %cst_57 {dimension_numbers = #tpu.dot_dimension_numbers<[1], [0], [0], [1], [0, 0, 1, 1], [], []>} : vector<8x32xf32>, vector<32x128xf32>, vector<8x128xf32> -> vector<8x128xf32>
    %cst_58 = arith.constant dense<0.000000e+00> : vector<8x128xf32>
    %175 = tpu.matmul %138, %2, %cst_58 {dimension_numbers = #tpu.dot_dimension_numbers<[1], [0], [0], [1], [0, 0, 1, 1], [], []>} : vector<8x32xf32>, vector<32x128xf32>, vector<8x128xf32> -> vector<8x128xf32>
    %176 = arith.addf %174, %175 : vector<8x128xf32>
    %177 = arith.addf %176, %6 : vector<8x128xf32>
    %178 = arith.negf %177 : vector<8x128xf32>
    %179 = math.exp %178 : vector<8x128xf32>
    %cst_59 = arith.constant 1.000000e+00 : f32
    %180 = vector.broadcast %cst_59 : f32 to vector<8x128xf32>
    %181 = arith.addf %180, %179 : vector<8x128xf32>
    %182 = arith.divf %180, %181 : vector<8x128xf32>
    %183 = vector.extract_strided_slice %182 {offsets = [0, 0], sizes = [8, 32], strides = [1, 1]} : vector<8x128xf32> to vector<8x32xf32>
    %184 = vector.extract_strided_slice %182 {offsets = [0, 32], sizes = [8, 32], strides = [1, 1]} : vector<8x128xf32> to vector<8x32xf32>
    %185 = vector.extract_strided_slice %182 {offsets = [0, 64], sizes = [8, 32], strides = [1, 1]} : vector<8x128xf32> to vector<8x32xf32>
    %cst_60 = arith.constant 2.000000e+00 : f32
    %186 = vector.broadcast %cst_60 : f32 to vector<8x32xf32>
    %187 = arith.mulf %186, %185 : vector<8x32xf32>
    %cst_61 = arith.constant 1.000000e+00 : f32
    %188 = vector.broadcast %cst_61 : f32 to vector<8x32xf32>
    %189 = arith.subf %187, %188 : vector<8x32xf32>
    %190 = vector.extract_strided_slice %182 {offsets = [0, 96], sizes = [8, 32], strides = [1, 1]} : vector<8x128xf32> to vector<8x32xf32>
    %191 = arith.mulf %184, %141 : vector<8x32xf32>
    %192 = arith.mulf %183, %189 : vector<8x32xf32>
    %193 = arith.addf %191, %192 : vector<8x32xf32>
    %194 = math.tanh %193 : vector<8x32xf32>
    %195 = arith.mulf %190, %194 : vector<8x32xf32>
    %196 = vector.shape_cast %152 : vector<8x1xi1> to vector<8x1xi1>
    %197 = vector.broadcast %196 : vector<8x1xi1> to vector<8x32xi1>
    %198 = arith.select %197, %173, %132 : vector<8x32xi1>, vector<8x32xf32>
    %199 = vector.shape_cast %152 : vector<8x1xi1> to vector<8x1xi1>
    %200 = vector.broadcast %199 : vector<8x1xi1> to vector<8x32xi1>
    %201 = arith.select %200, %171, %135 : vector<8x32xi1>, vector<8x32xf32>
    %202 = vector.shape_cast %152 : vector<8x1xi1> to vector<8x1xi1>
    %203 = vector.broadcast %202 : vector<8x1xi1> to vector<8x32xi1>
    %204 = arith.select %203, %195, %138 : vector<8x32xi1>, vector<8x32xf32>
    %205 = vector.shape_cast %152 : vector<8x1xi1> to vector<8x1xi1>
    %206 = vector.broadcast %205 : vector<8x1xi1> to vector<8x32xi1>
    %207 = arith.select %206, %193, %141 : vector<8x32xi1>, vector<8x32xf32>
    %cst_62 = arith.constant 0.000000e+00 : f32
    %208 = vector.shape_cast %152 : vector<8x1xi1> to vector<8x1xi1>
    %209 = vector.broadcast %208 : vector<8x1xi1> to vector<8x32xi1>
    %210 = vector.broadcast %cst_62 : f32 to vector<8x32xf32>
    %211 = arith.select %209, %195, %210 : vector<8x32xi1>, vector<8x32xf32>
    %cst_63 = arith.constant dense<0.000000e+00> : vector<8x128xf32>
    %212 = tpu.matmul %211, %3, %cst_63 {dimension_numbers = #tpu.dot_dimension_numbers<[1], [0], [0], [1], [0, 0, 1, 1], [], []>} : vector<8x32xf32>, vector<32x128xf32>, vector<8x128xf32> -> vector<8x128xf32>
    %213 = arith.addf %212, %9 : vector<8x128xf32>
    %c16 = arith.constant 16 : index
    %c0_64 = arith.constant 0 : index
    %214 = vector.load %arg12[%c16, %c0_64] : memref<64x128xf32, #tpu.memory_space<vmem>>, vector<8x128xf32>
    tpu.vector_store %arg12[%c16, %c0_64], %213 {strides = array<i32>} : memref<64x128xf32, #tpu.memory_space<vmem>>, vector<8x128xf32>,
    %c3 = arith.constant 3 : index
    %c0_65 = arith.constant 0 : index
    %c0_66 = arith.constant 0 : index
    %215 = vector.load %arg1[%c3, %c0_65, %c0_66] : memref<8x8x1xf32, #tpu.memory_space<vmem>>, vector<1x8x1xf32>
    %216 = vector.shape_cast %215 : vector<1x8x1xf32> to vector<8x1xf32>
    %cst_67 = arith.constant 0.000000e+00 : f32
    %217 = vector.broadcast %cst_67 : f32 to vector<8x1xf32>
    %218 = arith.cmpf ogt, %216, %217 : vector<8x1xf32>
    %219 = vector.extract_strided_slice %15 {offsets = [24, 0], sizes = [8, 128], strides = [1, 1]} : vector<64x128xf32> to vector<8x128xf32>
    %cst_68 = arith.constant dense<0.000000e+00> : vector<8x128xf32>
    %220 = tpu.matmul %198, %0, %cst_68 {dimension_numbers = #tpu.dot_dimension_numbers<[1], [0], [0], [1], [0, 0, 1, 1], [], []>} : vector<8x32xf32>, vector<32x128xf32>, vector<8x128xf32> -> vector<8x128xf32>
    %221 = arith.addf %219, %220 : vector<8x128xf32>
    %222 = arith.negf %221 : vector<8x128xf32>
    %223 = math.exp %222 : vector<8x128xf32>
    %cst_69 = arith.constant 1.000000e+00 : f32
    %224 = vector.broadcast %cst_69 : f32 to vector<8x128xf32>
    %225 = arith.addf %224, %223 : vector<8x128xf32>
    %226 = arith.divf %224, %225 : vector<8x128xf32>
    %227 = vector.extract_strided_slice %226 {offsets = [0, 0], sizes = [8, 32], strides = [1, 1]} : vector<8x128xf32> to vector<8x32xf32>
    %228 = vector.extract_strided_slice %226 {offsets = [0, 32], sizes = [8, 32], strides = [1, 1]} : vector<8x128xf32> to vector<8x32xf32>
    %229 = vector.extract_strided_slice %226 {offsets = [0, 64], sizes = [8, 32], strides = [1, 1]} : vector<8x128xf32> to vector<8x32xf32>
    %cst_70 = arith.constant 2.000000e+00 : f32
    %230 = vector.broadcast %cst_70 : f32 to vector<8x32xf32>
    %231 = arith.mulf %230, %229 : vector<8x32xf32>
    %cst_71 = arith.constant 1.000000e+00 : f32
    %232 = vector.broadcast %cst_71 : f32 to vector<8x32xf32>
    %233 = arith.subf %231, %232 : vector<8x32xf32>
    %234 = vector.extract_strided_slice %226 {offsets = [0, 96], sizes = [8, 32], strides = [1, 1]} : vector<8x128xf32> to vector<8x32xf32>
    %235 = arith.mulf %228, %201 : vector<8x32xf32>
    %236 = arith.mulf %227, %233 : vector<8x32xf32>
    %237 = arith.addf %235, %236 : vector<8x32xf32>
    %238 = math.tanh %237 : vector<8x32xf32>
    %239 = arith.mulf %234, %238 : vector<8x32xf32>
    %cst_72 = arith.constant dense<0.000000e+00> : vector<8x128xf32>
    %240 = tpu.matmul %239, %1, %cst_72 {dimension_numbers = #tpu.dot_dimension_numbers<[1], [0], [0], [1], [0, 0, 1, 1], [], []>} : vector<8x32xf32>, vector<32x128xf32>, vector<8x128xf32> -> vector<8x128xf32>
    %cst_73 = arith.constant dense<0.000000e+00> : vector<8x128xf32>
    %241 = tpu.matmul %204, %2, %cst_73 {dimension_numbers = #tpu.dot_dimension_numbers<[1], [0], [0], [1], [0, 0, 1, 1], [], []>} : vector<8x32xf32>, vector<32x128xf32>, vector<8x128xf32> -> vector<8x128xf32>
    %242 = arith.addf %240, %241 : vector<8x128xf32>
    %243 = arith.addf %242, %6 : vector<8x128xf32>
    %244 = arith.negf %243 : vector<8x128xf32>
    %245 = math.exp %244 : vector<8x128xf32>
    %cst_74 = arith.constant 1.000000e+00 : f32
    %246 = vector.broadcast %cst_74 : f32 to vector<8x128xf32>
    %247 = arith.addf %246, %245 : vector<8x128xf32>
    %248 = arith.divf %246, %247 : vector<8x128xf32>
    %249 = vector.extract_strided_slice %248 {offsets = [0, 0], sizes = [8, 32], strides = [1, 1]} : vector<8x128xf32> to vector<8x32xf32>
    %250 = vector.extract_strided_slice %248 {offsets = [0, 32], sizes = [8, 32], strides = [1, 1]} : vector<8x128xf32> to vector<8x32xf32>
    %251 = vector.extract_strided_slice %248 {offsets = [0, 64], sizes = [8, 32], strides = [1, 1]} : vector<8x128xf32> to vector<8x32xf32>
    %cst_75 = arith.constant 2.000000e+00 : f32
    %252 = vector.broadcast %cst_75 : f32 to vector<8x32xf32>
    %253 = arith.mulf %252, %251 : vector<8x32xf32>
    %cst_76 = arith.constant 1.000000e+00 : f32
    %254 = vector.broadcast %cst_76 : f32 to vector<8x32xf32>
    %255 = arith.subf %253, %254 : vector<8x32xf32>
    %256 = vector.extract_strided_slice %248 {offsets = [0, 96], sizes = [8, 32], strides = [1, 1]} : vector<8x128xf32> to vector<8x32xf32>
    %257 = arith.mulf %250, %207 : vector<8x32xf32>
    %258 = arith.mulf %249, %255 : vector<8x32xf32>
    %259 = arith.addf %257, %258 : vector<8x32xf32>
    %260 = math.tanh %259 : vector<8x32xf32>
    %261 = arith.mulf %256, %260 : vector<8x32xf32>
    %262 = vector.shape_cast %218 : vector<8x1xi1> to vector<8x1xi1>
    %263 = vector.broadcast %262 : vector<8x1xi1> to vector<8x32xi1>
    %264 = arith.select %263, %239, %198 : vector<8x32xi1>, vector<8x32xf32>
    %265 = vector.shape_cast %218 : vector<8x1xi1> to vector<8x1xi1>
    %266 = vector.broadcast %265 : vector<8x1xi1> to vector<8x32xi1>
    %267 = arith.select %266, %237, %201 : vector<8x32xi1>, vector<8x32xf32>
    %268 = vector.shape_cast %218 : vector<8x1xi1> to vector<8x1xi1>
    %269 = vector.broadcast %268 : vector<8x1xi1> to vector<8x32xi1>
    %270 = arith.select %269, %261, %204 : vector<8x32xi1>, vector<8x32xf32>
    %271 = vector.shape_cast %218 : vector<8x1xi1> to vector<8x1xi1>
    %272 = vector.broadcast %271 : vector<8x1xi1> to vector<8x32xi1>
    %273 = arith.select %272, %259, %207 : vector<8x32xi1>, vector<8x32xf32>
    %cst_77 = arith.constant 0.000000e+00 : f32
    %274 = vector.shape_cast %218 : vector<8x1xi1> to vector<8x1xi1>
    %275 = vector.broadcast %274 : vector<8x1xi1> to vector<8x32xi1>
    %276 = vector.broadcast %cst_77 : f32 to vector<8x32xf32>
    %277 = arith.select %275, %261, %276 : vector<8x32xi1>, vector<8x32xf32>
    %cst_78 = arith.constant dense<0.000000e+00> : vector<8x128xf32>
    %278 = tpu.matmul %277, %3, %cst_78 {dimension_numbers = #tpu.dot_dimension_numbers<[1], [0], [0], [1], [0, 0, 1, 1], [], []>} : vector<8x32xf32>, vector<32x128xf32>, vector<8x128xf32> -> vector<8x128xf32>
    %279 = arith.addf %278, %9 : vector<8x128xf32>
    %c24 = arith.constant 24 : index
    %c0_79 = arith.constant 0 : index
    %280 = vector.load %arg12[%c24, %c0_79] : memref<64x128xf32, #tpu.memory_space<vmem>>, vector<8x128xf32>
    tpu.vector_store %arg12[%c24, %c0_79], %279 {strides = array<i32>} : memref<64x128xf32, #tpu.memory_space<vmem>>, vector<8x128xf32>,
    %c4 = arith.constant 4 : index
    %c0_80 = arith.constant 0 : index
    %c0_81 = arith.constant 0 : index
    %281 = vector.load %arg1[%c4, %c0_80, %c0_81] : memref<8x8x1xf32, #tpu.memory_space<vmem>>, vector<1x8x1xf32>
    %282 = vector.shape_cast %281 : vector<1x8x1xf32> to vector<8x1xf32>
    %cst_82 = arith.constant 0.000000e+00 : f32
    %283 = vector.broadcast %cst_82 : f32 to vector<8x1xf32>
    %284 = arith.cmpf ogt, %282, %283 : vector<8x1xf32>
    %285 = vector.extract_strided_slice %15 {offsets = [32, 0], sizes = [8, 128], strides = [1, 1]} : vector<64x128xf32> to vector<8x128xf32>
    %cst_83 = arith.constant dense<0.000000e+00> : vector<8x128xf32>
    %286 = tpu.matmul %264, %0, %cst_83 {dimension_numbers = #tpu.dot_dimension_numbers<[1], [0], [0], [1], [0, 0, 1, 1], [], []>} : vector<8x32xf32>, vector<32x128xf32>, vector<8x128xf32> -> vector<8x128xf32>
    %287 = arith.addf %285, %286 : vector<8x128xf32>
    %288 = arith.negf %287 : vector<8x128xf32>
    %289 = math.exp %288 : vector<8x128xf32>
    %cst_84 = arith.constant 1.000000e+00 : f32
    %290 = vector.broadcast %cst_84 : f32 to vector<8x128xf32>
    %291 = arith.addf %290, %289 : vector<8x128xf32>
    %292 = arith.divf %290, %291 : vector<8x128xf32>
    %293 = vector.extract_strided_slice %292 {offsets = [0, 0], sizes = [8, 32], strides = [1, 1]} : vector<8x128xf32> to vector<8x32xf32>
    %294 = vector.extract_strided_slice %292 {offsets = [0, 32], sizes = [8, 32], strides = [1, 1]} : vector<8x128xf32> to vector<8x32xf32>
    %295 = vector.extract_strided_slice %292 {offsets = [0, 64], sizes = [8, 32], strides = [1, 1]} : vector<8x128xf32> to vector<8x32xf32>
    %cst_85 = arith.constant 2.000000e+00 : f32
    %296 = vector.broadcast %cst_85 : f32 to vector<8x32xf32>
    %297 = arith.mulf %296, %295 : vector<8x32xf32>
    %cst_86 = arith.constant 1.000000e+00 : f32
    %298 = vector.broadcast %cst_86 : f32 to vector<8x32xf32>
    %299 = arith.subf %297, %298 : vector<8x32xf32>
    %300 = vector.extract_strided_slice %292 {offsets = [0, 96], sizes = [8, 32], strides = [1, 1]} : vector<8x128xf32> to vector<8x32xf32>
    %301 = arith.mulf %294, %267 : vector<8x32xf32>
    %302 = arith.mulf %293, %299 : vector<8x32xf32>
    %303 = arith.addf %301, %302 : vector<8x32xf32>
    %304 = math.tanh %303 : vector<8x32xf32>
    %305 = arith.mulf %300, %304 : vector<8x32xf32>
    %cst_87 = arith.constant dense<0.000000e+00> : vector<8x128xf32>
    %306 = tpu.matmul %305, %1, %cst_87 {dimension_numbers = #tpu.dot_dimension_numbers<[1], [0], [0], [1], [0, 0, 1, 1], [], []>} : vector<8x32xf32>, vector<32x128xf32>, vector<8x128xf32> -> vector<8x128xf32>
    %cst_88 = arith.constant dense<0.000000e+00> : vector<8x128xf32>
    %307 = tpu.matmul %270, %2, %cst_88 {dimension_numbers = #tpu.dot_dimension_numbers<[1], [0], [0], [1], [0, 0, 1, 1], [], []>} : vector<8x32xf32>, vector<32x128xf32>, vector<8x128xf32> -> vector<8x128xf32>
    %308 = arith.addf %306, %307 : vector<8x128xf32>
    %309 = arith.addf %308, %6 : vector<8x128xf32>
    %310 = arith.negf %309 : vector<8x128xf32>
    %311 = math.exp %310 : vector<8x128xf32>
    %cst_89 = arith.constant 1.000000e+00 : f32
    %312 = vector.broadcast %cst_89 : f32 to vector<8x128xf32>
    %313 = arith.addf %312, %311 : vector<8x128xf32>
    %314 = arith.divf %312, %313 : vector<8x128xf32>
    %315 = vector.extract_strided_slice %314 {offsets = [0, 0], sizes = [8, 32], strides = [1, 1]} : vector<8x128xf32> to vector<8x32xf32>
    %316 = vector.extract_strided_slice %314 {offsets = [0, 32], sizes = [8, 32], strides = [1, 1]} : vector<8x128xf32> to vector<8x32xf32>
    %317 = vector.extract_strided_slice %314 {offsets = [0, 64], sizes = [8, 32], strides = [1, 1]} : vector<8x128xf32> to vector<8x32xf32>
    %cst_90 = arith.constant 2.000000e+00 : f32
    %318 = vector.broadcast %cst_90 : f32 to vector<8x32xf32>
    %319 = arith.mulf %318, %317 : vector<8x32xf32>
    %cst_91 = arith.constant 1.000000e+00 : f32
    %320 = vector.broadcast %cst_91 : f32 to vector<8x32xf32>
    %321 = arith.subf %319, %320 : vector<8x32xf32>
    %322 = vector.extract_strided_slice %314 {offsets = [0, 96], sizes = [8, 32], strides = [1, 1]} : vector<8x128xf32> to vector<8x32xf32>
    %323 = arith.mulf %316, %273 : vector<8x32xf32>
    %324 = arith.mulf %315, %321 : vector<8x32xf32>
    %325 = arith.addf %323, %324 : vector<8x32xf32>
    %326 = math.tanh %325 : vector<8x32xf32>
    %327 = arith.mulf %322, %326 : vector<8x32xf32>
    %328 = vector.shape_cast %284 : vector<8x1xi1> to vector<8x1xi1>
    %329 = vector.broadcast %328 : vector<8x1xi1> to vector<8x32xi1>
    %330 = arith.select %329, %305, %264 : vector<8x32xi1>, vector<8x32xf32>
    %331 = vector.shape_cast %284 : vector<8x1xi1> to vector<8x1xi1>
    %332 = vector.broadcast %331 : vector<8x1xi1> to vector<8x32xi1>
    %333 = arith.select %332, %303, %267 : vector<8x32xi1>, vector<8x32xf32>
    %334 = vector.shape_cast %284 : vector<8x1xi1> to vector<8x1xi1>
    %335 = vector.broadcast %334 : vector<8x1xi1> to vector<8x32xi1>
    %336 = arith.select %335, %327, %270 : vector<8x32xi1>, vector<8x32xf32>
    %337 = vector.shape_cast %284 : vector<8x1xi1> to vector<8x1xi1>
    %338 = vector.broadcast %337 : vector<8x1xi1> to vector<8x32xi1>
    %339 = arith.select %338, %325, %273 : vector<8x32xi1>, vector<8x32xf32>
    %cst_92 = arith.constant 0.000000e+00 : f32
    %340 = vector.shape_cast %284 : vector<8x1xi1> to vector<8x1xi1>
    %341 = vector.broadcast %340 : vector<8x1xi1> to vector<8x32xi1>
    %342 = vector.broadcast %cst_92 : f32 to vector<8x32xf32>
    %343 = arith.select %341, %327, %342 : vector<8x32xi1>, vector<8x32xf32>
    %cst_93 = arith.constant dense<0.000000e+00> : vector<8x128xf32>
    %344 = tpu.matmul %343, %3, %cst_93 {dimension_numbers = #tpu.dot_dimension_numbers<[1], [0], [0], [1], [0, 0, 1, 1], [], []>} : vector<8x32xf32>, vector<32x128xf32>, vector<8x128xf32> -> vector<8x128xf32>
    %345 = arith.addf %344, %9 : vector<8x128xf32>
    %c32 = arith.constant 32 : index
    %c0_94 = arith.constant 0 : index
    %346 = vector.load %arg12[%c32, %c0_94] : memref<64x128xf32, #tpu.memory_space<vmem>>, vector<8x128xf32>
    tpu.vector_store %arg12[%c32, %c0_94], %345 {strides = array<i32>} : memref<64x128xf32, #tpu.memory_space<vmem>>, vector<8x128xf32>,
    %c5 = arith.constant 5 : index
    %c0_95 = arith.constant 0 : index
    %c0_96 = arith.constant 0 : index
    %347 = vector.load %arg1[%c5, %c0_95, %c0_96] : memref<8x8x1xf32, #tpu.memory_space<vmem>>, vector<1x8x1xf32>
    %348 = vector.shape_cast %347 : vector<1x8x1xf32> to vector<8x1xf32>
    %cst_97 = arith.constant 0.000000e+00 : f32
    %349 = vector.broadcast %cst_97 : f32 to vector<8x1xf32>
    %350 = arith.cmpf ogt, %348, %349 : vector<8x1xf32>
    %351 = vector.extract_strided_slice %15 {offsets = [40, 0], sizes = [8, 128], strides = [1, 1]} : vector<64x128xf32> to vector<8x128xf32>
    %cst_98 = arith.constant dense<0.000000e+00> : vector<8x128xf32>
    %352 = tpu.matmul %330, %0, %cst_98 {dimension_numbers = #tpu.dot_dimension_numbers<[1], [0], [0], [1], [0, 0, 1, 1], [], []>} : vector<8x32xf32>, vector<32x128xf32>, vector<8x128xf32> -> vector<8x128xf32>
    %353 = arith.addf %351, %352 : vector<8x128xf32>
    %354 = arith.negf %353 : vector<8x128xf32>
    %355 = math.exp %354 : vector<8x128xf32>
    %cst_99 = arith.constant 1.000000e+00 : f32
    %356 = vector.broadcast %cst_99 : f32 to vector<8x128xf32>
    %357 = arith.addf %356, %355 : vector<8x128xf32>
    %358 = arith.divf %356, %357 : vector<8x128xf32>
    %359 = vector.extract_strided_slice %358 {offsets = [0, 0], sizes = [8, 32], strides = [1, 1]} : vector<8x128xf32> to vector<8x32xf32>
    %360 = vector.extract_strided_slice %358 {offsets = [0, 32], sizes = [8, 32], strides = [1, 1]} : vector<8x128xf32> to vector<8x32xf32>
    %361 = vector.extract_strided_slice %358 {offsets = [0, 64], sizes = [8, 32], strides = [1, 1]} : vector<8x128xf32> to vector<8x32xf32>
    %cst_100 = arith.constant 2.000000e+00 : f32
    %362 = vector.broadcast %cst_100 : f32 to vector<8x32xf32>
    %363 = arith.mulf %362, %361 : vector<8x32xf32>
    %cst_101 = arith.constant 1.000000e+00 : f32
    %364 = vector.broadcast %cst_101 : f32 to vector<8x32xf32>
    %365 = arith.subf %363, %364 : vector<8x32xf32>
    %366 = vector.extract_strided_slice %358 {offsets = [0, 96], sizes = [8, 32], strides = [1, 1]} : vector<8x128xf32> to vector<8x32xf32>
    %367 = arith.mulf %360, %333 : vector<8x32xf32>
    %368 = arith.mulf %359, %365 : vector<8x32xf32>
    %369 = arith.addf %367, %368 : vector<8x32xf32>
    %370 = math.tanh %369 : vector<8x32xf32>
    %371 = arith.mulf %366, %370 : vector<8x32xf32>
    %cst_102 = arith.constant dense<0.000000e+00> : vector<8x128xf32>
    %372 = tpu.matmul %371, %1, %cst_102 {dimension_numbers = #tpu.dot_dimension_numbers<[1], [0], [0], [1], [0, 0, 1, 1], [], []>} : vector<8x32xf32>, vector<32x128xf32>, vector<8x128xf32> -> vector<8x128xf32>
    %cst_103 = arith.constant dense<0.000000e+00> : vector<8x128xf32>
    %373 = tpu.matmul %336, %2, %cst_103 {dimension_numbers = #tpu.dot_dimension_numbers<[1], [0], [0], [1], [0, 0, 1, 1], [], []>} : vector<8x32xf32>, vector<32x128xf32>, vector<8x128xf32> -> vector<8x128xf32>
    %374 = arith.addf %372, %373 : vector<8x128xf32>
    %375 = arith.addf %374, %6 : vector<8x128xf32>
    %376 = arith.negf %375 : vector<8x128xf32>
    %377 = math.exp %376 : vector<8x128xf32>
    %cst_104 = arith.constant 1.000000e+00 : f32
    %378 = vector.broadcast %cst_104 : f32 to vector<8x128xf32>
    %379 = arith.addf %378, %377 : vector<8x128xf32>
    %380 = arith.divf %378, %379 : vector<8x128xf32>
    %381 = vector.extract_strided_slice %380 {offsets = [0, 0], sizes = [8, 32], strides = [1, 1]} : vector<8x128xf32> to vector<8x32xf32>
    %382 = vector.extract_strided_slice %380 {offsets = [0, 32], sizes = [8, 32], strides = [1, 1]} : vector<8x128xf32> to vector<8x32xf32>
    %383 = vector.extract_strided_slice %380 {offsets = [0, 64], sizes = [8, 32], strides = [1, 1]} : vector<8x128xf32> to vector<8x32xf32>
    %cst_105 = arith.constant 2.000000e+00 : f32
    %384 = vector.broadcast %cst_105 : f32 to vector<8x32xf32>
    %385 = arith.mulf %384, %383 : vector<8x32xf32>
    %cst_106 = arith.constant 1.000000e+00 : f32
    %386 = vector.broadcast %cst_106 : f32 to vector<8x32xf32>
    %387 = arith.subf %385, %386 : vector<8x32xf32>
    %388 = vector.extract_strided_slice %380 {offsets = [0, 96], sizes = [8, 32], strides = [1, 1]} : vector<8x128xf32> to vector<8x32xf32>
    %389 = arith.mulf %382, %339 : vector<8x32xf32>
    %390 = arith.mulf %381, %387 : vector<8x32xf32>
    %391 = arith.addf %389, %390 : vector<8x32xf32>
    %392 = math.tanh %391 : vector<8x32xf32>
    %393 = arith.mulf %388, %392 : vector<8x32xf32>
    %394 = vector.shape_cast %350 : vector<8x1xi1> to vector<8x1xi1>
    %395 = vector.broadcast %394 : vector<8x1xi1> to vector<8x32xi1>
    %396 = arith.select %395, %371, %330 : vector<8x32xi1>, vector<8x32xf32>
    %397 = vector.shape_cast %350 : vector<8x1xi1> to vector<8x1xi1>
    %398 = vector.broadcast %397 : vector<8x1xi1> to vector<8x32xi1>
    %399 = arith.select %398, %369, %333 : vector<8x32xi1>, vector<8x32xf32>
    %400 = vector.shape_cast %350 : vector<8x1xi1> to vector<8x1xi1>
    %401 = vector.broadcast %400 : vector<8x1xi1> to vector<8x32xi1>
    %402 = arith.select %401, %393, %336 : vector<8x32xi1>, vector<8x32xf32>
    %403 = vector.shape_cast %350 : vector<8x1xi1> to vector<8x1xi1>
    %404 = vector.broadcast %403 : vector<8x1xi1> to vector<8x32xi1>
    %405 = arith.select %404, %391, %339 : vector<8x32xi1>, vector<8x32xf32>
    %cst_107 = arith.constant 0.000000e+00 : f32
    %406 = vector.shape_cast %350 : vector<8x1xi1> to vector<8x1xi1>
    %407 = vector.broadcast %406 : vector<8x1xi1> to vector<8x32xi1>
    %408 = vector.broadcast %cst_107 : f32 to vector<8x32xf32>
    %409 = arith.select %407, %393, %408 : vector<8x32xi1>, vector<8x32xf32>
    %cst_108 = arith.constant dense<0.000000e+00> : vector<8x128xf32>
    %410 = tpu.matmul %409, %3, %cst_108 {dimension_numbers = #tpu.dot_dimension_numbers<[1], [0], [0], [1], [0, 0, 1, 1], [], []>} : vector<8x32xf32>, vector<32x128xf32>, vector<8x128xf32> -> vector<8x128xf32>
    %411 = arith.addf %410, %9 : vector<8x128xf32>
    %c40 = arith.constant 40 : index
    %c0_109 = arith.constant 0 : index
    %412 = vector.load %arg12[%c40, %c0_109] : memref<64x128xf32, #tpu.memory_space<vmem>>, vector<8x128xf32>
    tpu.vector_store %arg12[%c40, %c0_109], %411 {strides = array<i32>} : memref<64x128xf32, #tpu.memory_space<vmem>>, vector<8x128xf32>,
    %c6 = arith.constant 6 : index
    %c0_110 = arith.constant 0 : index
    %c0_111 = arith.constant 0 : index
    %413 = vector.load %arg1[%c6, %c0_110, %c0_111] : memref<8x8x1xf32, #tpu.memory_space<vmem>>, vector<1x8x1xf32>
    %414 = vector.shape_cast %413 : vector<1x8x1xf32> to vector<8x1xf32>
    %cst_112 = arith.constant 0.000000e+00 : f32
    %415 = vector.broadcast %cst_112 : f32 to vector<8x1xf32>
    %416 = arith.cmpf ogt, %414, %415 : vector<8x1xf32>
    %417 = vector.extract_strided_slice %15 {offsets = [48, 0], sizes = [8, 128], strides = [1, 1]} : vector<64x128xf32> to vector<8x128xf32>
    %cst_113 = arith.constant dense<0.000000e+00> : vector<8x128xf32>
    %418 = tpu.matmul %396, %0, %cst_113 {dimension_numbers = #tpu.dot_dimension_numbers<[1], [0], [0], [1], [0, 0, 1, 1], [], []>} : vector<8x32xf32>, vector<32x128xf32>, vector<8x128xf32> -> vector<8x128xf32>
    %419 = arith.addf %417, %418 : vector<8x128xf32>
    %420 = arith.negf %419 : vector<8x128xf32>
    %421 = math.exp %420 : vector<8x128xf32>
    %cst_114 = arith.constant 1.000000e+00 : f32
    %422 = vector.broadcast %cst_114 : f32 to vector<8x128xf32>
    %423 = arith.addf %422, %421 : vector<8x128xf32>
    %424 = arith.divf %422, %423 : vector<8x128xf32>
    %425 = vector.extract_strided_slice %424 {offsets = [0, 0], sizes = [8, 32], strides = [1, 1]} : vector<8x128xf32> to vector<8x32xf32>
    %426 = vector.extract_strided_slice %424 {offsets = [0, 32], sizes = [8, 32], strides = [1, 1]} : vector<8x128xf32> to vector<8x32xf32>
    %427 = vector.extract_strided_slice %424 {offsets = [0, 64], sizes = [8, 32], strides = [1, 1]} : vector<8x128xf32> to vector<8x32xf32>
    %cst_115 = arith.constant 2.000000e+00 : f32
    %428 = vector.broadcast %cst_115 : f32 to vector<8x32xf32>
    %429 = arith.mulf %428, %427 : vector<8x32xf32>
    %cst_116 = arith.constant 1.000000e+00 : f32
    %430 = vector.broadcast %cst_116 : f32 to vector<8x32xf32>
    %431 = arith.subf %429, %430 : vector<8x32xf32>
    %432 = vector.extract_strided_slice %424 {offsets = [0, 96], sizes = [8, 32], strides = [1, 1]} : vector<8x128xf32> to vector<8x32xf32>
    %433 = arith.mulf %426, %399 : vector<8x32xf32>
    %434 = arith.mulf %425, %431 : vector<8x32xf32>
    %435 = arith.addf %433, %434 : vector<8x32xf32>
    %436 = math.tanh %435 : vector<8x32xf32>
    %437 = arith.mulf %432, %436 : vector<8x32xf32>
    %cst_117 = arith.constant dense<0.000000e+00> : vector<8x128xf32>
    %438 = tpu.matmul %437, %1, %cst_117 {dimension_numbers = #tpu.dot_dimension_numbers<[1], [0], [0], [1], [0, 0, 1, 1], [], []>} : vector<8x32xf32>, vector<32x128xf32>, vector<8x128xf32> -> vector<8x128xf32>
    %cst_118 = arith.constant dense<0.000000e+00> : vector<8x128xf32>
    %439 = tpu.matmul %402, %2, %cst_118 {dimension_numbers = #tpu.dot_dimension_numbers<[1], [0], [0], [1], [0, 0, 1, 1], [], []>} : vector<8x32xf32>, vector<32x128xf32>, vector<8x128xf32> -> vector<8x128xf32>
    %440 = arith.addf %438, %439 : vector<8x128xf32>
    %441 = arith.addf %440, %6 : vector<8x128xf32>
    %442 = arith.negf %441 : vector<8x128xf32>
    %443 = math.exp %442 : vector<8x128xf32>
    %cst_119 = arith.constant 1.000000e+00 : f32
    %444 = vector.broadcast %cst_119 : f32 to vector<8x128xf32>
    %445 = arith.addf %444, %443 : vector<8x128xf32>
    %446 = arith.divf %444, %445 : vector<8x128xf32>
    %447 = vector.extract_strided_slice %446 {offsets = [0, 0], sizes = [8, 32], strides = [1, 1]} : vector<8x128xf32> to vector<8x32xf32>
    %448 = vector.extract_strided_slice %446 {offsets = [0, 32], sizes = [8, 32], strides = [1, 1]} : vector<8x128xf32> to vector<8x32xf32>
    %449 = vector.extract_strided_slice %446 {offsets = [0, 64], sizes = [8, 32], strides = [1, 1]} : vector<8x128xf32> to vector<8x32xf32>
    %cst_120 = arith.constant 2.000000e+00 : f32
    %450 = vector.broadcast %cst_120 : f32 to vector<8x32xf32>
    %451 = arith.mulf %450, %449 : vector<8x32xf32>
    %cst_121 = arith.constant 1.000000e+00 : f32
    %452 = vector.broadcast %cst_121 : f32 to vector<8x32xf32>
    %453 = arith.subf %451, %452 : vector<8x32xf32>
    %454 = vector.extract_strided_slice %446 {offsets = [0, 96], sizes = [8, 32], strides = [1, 1]} : vector<8x128xf32> to vector<8x32xf32>
    %455 = arith.mulf %448, %405 : vector<8x32xf32>
    %456 = arith.mulf %447, %453 : vector<8x32xf32>
    %457 = arith.addf %455, %456 : vector<8x32xf32>
    %458 = math.tanh %457 : vector<8x32xf32>
    %459 = arith.mulf %454, %458 : vector<8x32xf32>
    %460 = vector.shape_cast %416 : vector<8x1xi1> to vector<8x1xi1>
    %461 = vector.broadcast %460 : vector<8x1xi1> to vector<8x32xi1>
    %462 = arith.select %461, %437, %396 : vector<8x32xi1>, vector<8x32xf32>
    %463 = vector.shape_cast %416 : vector<8x1xi1> to vector<8x1xi1>
    %464 = vector.broadcast %463 : vector<8x1xi1> to vector<8x32xi1>
    %465 = arith.select %464, %435, %399 : vector<8x32xi1>, vector<8x32xf32>
    %466 = vector.shape_cast %416 : vector<8x1xi1> to vector<8x1xi1>
    %467 = vector.broadcast %466 : vector<8x1xi1> to vector<8x32xi1>
    %468 = arith.select %467, %459, %402 : vector<8x32xi1>, vector<8x32xf32>
    %469 = vector.shape_cast %416 : vector<8x1xi1> to vector<8x1xi1>
    %470 = vector.broadcast %469 : vector<8x1xi1> to vector<8x32xi1>
    %471 = arith.select %470, %457, %405 : vector<8x32xi1>, vector<8x32xf32>
    %cst_122 = arith.constant 0.000000e+00 : f32
    %472 = vector.shape_cast %416 : vector<8x1xi1> to vector<8x1xi1>
    %473 = vector.broadcast %472 : vector<8x1xi1> to vector<8x32xi1>
    %474 = vector.broadcast %cst_122 : f32 to vector<8x32xf32>
    %475 = arith.select %473, %459, %474 : vector<8x32xi1>, vector<8x32xf32>
    %cst_123 = arith.constant dense<0.000000e+00> : vector<8x128xf32>
    %476 = tpu.matmul %475, %3, %cst_123 {dimension_numbers = #tpu.dot_dimension_numbers<[1], [0], [0], [1], [0, 0, 1, 1], [], []>} : vector<8x32xf32>, vector<32x128xf32>, vector<8x128xf32> -> vector<8x128xf32>
    %477 = arith.addf %476, %9 : vector<8x128xf32>
    %c48 = arith.constant 48 : index
    %c0_124 = arith.constant 0 : index
    %478 = vector.load %arg12[%c48, %c0_124] : memref<64x128xf32, #tpu.memory_space<vmem>>, vector<8x128xf32>
    tpu.vector_store %arg12[%c48, %c0_124], %477 {strides = array<i32>} : memref<64x128xf32, #tpu.memory_space<vmem>>, vector<8x128xf32>,
    %c7 = arith.constant 7 : index
    %c0_125 = arith.constant 0 : index
    %c0_126 = arith.constant 0 : index
    %479 = vector.load %arg1[%c7, %c0_125, %c0_126] : memref<8x8x1xf32, #tpu.memory_space<vmem>>, vector<1x8x1xf32>
    %480 = vector.shape_cast %479 : vector<1x8x1xf32> to vector<8x1xf32>
    %cst_127 = arith.constant 0.000000e+00 : f32
    %481 = vector.broadcast %cst_127 : f32 to vector<8x1xf32>
    %482 = arith.cmpf ogt, %480, %481 : vector<8x1xf32>
    %483 = vector.extract_strided_slice %15 {offsets = [56, 0], sizes = [8, 128], strides = [1, 1]} : vector<64x128xf32> to vector<8x128xf32>
    %cst_128 = arith.constant dense<0.000000e+00> : vector<8x128xf32>
    %484 = tpu.matmul %462, %0, %cst_128 {dimension_numbers = #tpu.dot_dimension_numbers<[1], [0], [0], [1], [0, 0, 1, 1], [], []>} : vector<8x32xf32>, vector<32x128xf32>, vector<8x128xf32> -> vector<8x128xf32>
    %485 = arith.addf %483, %484 : vector<8x128xf32>
    %486 = arith.negf %485 : vector<8x128xf32>
    %487 = math.exp %486 : vector<8x128xf32>
    %cst_129 = arith.constant 1.000000e+00 : f32
    %488 = vector.broadcast %cst_129 : f32 to vector<8x128xf32>
    %489 = arith.addf %488, %487 : vector<8x128xf32>
    %490 = arith.divf %488, %489 : vector<8x128xf32>
    %491 = vector.extract_strided_slice %490 {offsets = [0, 0], sizes = [8, 32], strides = [1, 1]} : vector<8x128xf32> to vector<8x32xf32>
    %492 = vector.extract_strided_slice %490 {offsets = [0, 32], sizes = [8, 32], strides = [1, 1]} : vector<8x128xf32> to vector<8x32xf32>
    %493 = vector.extract_strided_slice %490 {offsets = [0, 64], sizes = [8, 32], strides = [1, 1]} : vector<8x128xf32> to vector<8x32xf32>
    %cst_130 = arith.constant 2.000000e+00 : f32
    %494 = vector.broadcast %cst_130 : f32 to vector<8x32xf32>
    %495 = arith.mulf %494, %493 : vector<8x32xf32>
    %cst_131 = arith.constant 1.000000e+00 : f32
    %496 = vector.broadcast %cst_131 : f32 to vector<8x32xf32>
    %497 = arith.subf %495, %496 : vector<8x32xf32>
    %498 = vector.extract_strided_slice %490 {offsets = [0, 96], sizes = [8, 32], strides = [1, 1]} : vector<8x128xf32> to vector<8x32xf32>
    %499 = arith.mulf %492, %465 : vector<8x32xf32>
    %500 = arith.mulf %491, %497 : vector<8x32xf32>
    %501 = arith.addf %499, %500 : vector<8x32xf32>
    %502 = math.tanh %501 : vector<8x32xf32>
    %503 = arith.mulf %498, %502 : vector<8x32xf32>
    %cst_132 = arith.constant dense<0.000000e+00> : vector<8x128xf32>
    %504 = tpu.matmul %503, %1, %cst_132 {dimension_numbers = #tpu.dot_dimension_numbers<[1], [0], [0], [1], [0, 0, 1, 1], [], []>} : vector<8x32xf32>, vector<32x128xf32>, vector<8x128xf32> -> vector<8x128xf32>
    %cst_133 = arith.constant dense<0.000000e+00> : vector<8x128xf32>
    %505 = tpu.matmul %468, %2, %cst_133 {dimension_numbers = #tpu.dot_dimension_numbers<[1], [0], [0], [1], [0, 0, 1, 1], [], []>} : vector<8x32xf32>, vector<32x128xf32>, vector<8x128xf32> -> vector<8x128xf32>
    %506 = arith.addf %504, %505 : vector<8x128xf32>
    %507 = arith.addf %506, %6 : vector<8x128xf32>
    %508 = arith.negf %507 : vector<8x128xf32>
    %509 = math.exp %508 : vector<8x128xf32>
    %cst_134 = arith.constant 1.000000e+00 : f32
    %510 = vector.broadcast %cst_134 : f32 to vector<8x128xf32>
    %511 = arith.addf %510, %509 : vector<8x128xf32>
    %512 = arith.divf %510, %511 : vector<8x128xf32>
    %513 = vector.extract_strided_slice %512 {offsets = [0, 0], sizes = [8, 32], strides = [1, 1]} : vector<8x128xf32> to vector<8x32xf32>
    %514 = vector.extract_strided_slice %512 {offsets = [0, 32], sizes = [8, 32], strides = [1, 1]} : vector<8x128xf32> to vector<8x32xf32>
    %515 = vector.extract_strided_slice %512 {offsets = [0, 64], sizes = [8, 32], strides = [1, 1]} : vector<8x128xf32> to vector<8x32xf32>
    %cst_135 = arith.constant 2.000000e+00 : f32
    %516 = vector.broadcast %cst_135 : f32 to vector<8x32xf32>
    %517 = arith.mulf %516, %515 : vector<8x32xf32>
    %cst_136 = arith.constant 1.000000e+00 : f32
    %518 = vector.broadcast %cst_136 : f32 to vector<8x32xf32>
    %519 = arith.subf %517, %518 : vector<8x32xf32>
    %520 = vector.extract_strided_slice %512 {offsets = [0, 96], sizes = [8, 32], strides = [1, 1]} : vector<8x128xf32> to vector<8x32xf32>
    %521 = arith.mulf %514, %471 : vector<8x32xf32>
    %522 = arith.mulf %513, %519 : vector<8x32xf32>
    %523 = arith.addf %521, %522 : vector<8x32xf32>
    %524 = math.tanh %523 : vector<8x32xf32>
    %525 = arith.mulf %520, %524 : vector<8x32xf32>
    %526 = vector.shape_cast %482 : vector<8x1xi1> to vector<8x1xi1>
    %527 = vector.broadcast %526 : vector<8x1xi1> to vector<8x32xi1>
    %528 = arith.select %527, %525, %468 : vector<8x32xi1>, vector<8x32xf32>
    %cst_137 = arith.constant 0.000000e+00 : f32
    %529 = vector.shape_cast %482 : vector<8x1xi1> to vector<8x1xi1>
    %530 = vector.broadcast %529 : vector<8x1xi1> to vector<8x32xi1>
    %531 = vector.broadcast %cst_137 : f32 to vector<8x32xf32>
    %532 = arith.select %530, %525, %531 : vector<8x32xi1>, vector<8x32xf32>
    %cst_138 = arith.constant dense<0.000000e+00> : vector<8x128xf32>
    %533 = tpu.matmul %532, %3, %cst_138 {dimension_numbers = #tpu.dot_dimension_numbers<[1], [0], [0], [1], [0, 0, 1, 1], [], []>} : vector<8x32xf32>, vector<32x128xf32>, vector<8x128xf32> -> vector<8x128xf32>
    %534 = arith.addf %533, %9 : vector<8x128xf32>
    %c56 = arith.constant 56 : index
    %c0_139 = arith.constant 0 : index
    %535 = vector.load %arg12[%c56, %c0_139] : memref<64x128xf32, #tpu.memory_space<vmem>>, vector<8x128xf32>
    tpu.vector_store %arg12[%c56, %c0_139], %534 {strides = array<i32>} : memref<64x128xf32, #tpu.memory_space<vmem>>, vector<8x128xf32>,
    %c0_140 = arith.constant 0 : index
    %c0_141 = arith.constant 0 : index
    %536 = vector.load %arg10[%c0_140, %c0_141] : memref<32x128xf32, #tpu.memory_space<vmem>>, vector<32x128xf32>
    %cst_142 = arith.constant dense<0.000000e+00> : vector<8x128xf32>
    %537 = tpu.matmul %528, %536, %cst_142 {dimension_numbers = #tpu.dot_dimension_numbers<[1], [0], [0], [1], [0, 0, 1, 1], [], []>} : vector<8x32xf32>, vector<32x128xf32>, vector<8x128xf32> -> vector<8x128xf32>
    %c0_143 = arith.constant 0 : index
    %c0_144 = arith.constant 0 : index
    %538 = vector.load %arg11[%c0_143, %c0_144] : memref<1x128xf32, #tpu.memory_space<vmem>>, vector<1x128xf32>
    %539 = vector.broadcast %538 : vector<1x128xf32> to vector<8x128xf32>
    %540 = arith.addf %537, %539 : vector<8x128xf32>
    %c0_145 = arith.constant 0 : index
    %c0_146 = arith.constant 0 : index
    %541 = vector.load %arg13[%c0_145, %c0_146] : memref<8x128xf32, #tpu.memory_space<vmem>>, vector<8x128xf32>
    tpu.vector_store %arg13[%c0_145, %c0_146], %540 {strides = array<i32>} : memref<8x128xf32, #tpu.memory_space<vmem>>, vector<8x128xf32>,
    return
  }
}

</mosaic_0001>

<llo_original>
// kernel: _forward_impl.1
$region0: #{_forward_impl.1}
  #allocation0 [shape = 'u32[]', space=smem, size = 0x4, offset = 0x4, fixed_abs, tag = 'smem constant byte address 0x4 - core index']
  #allocation1 [shape = 'u32[144,128]{1,0:T(1,128)}', space=vmem, size = 0x12000, scoped, tag = 'internal scratch']
  %s0 = inlined_call_operand.vmem [shape: f32[64,16], index: 0, kind: input, shape index: {}]
  %s1 = inlined_call_operand.vmem [shape: f32[8,8,1], index: 1, kind: input, shape index: {}]
  %s2 = inlined_call_operand.vmem [shape: f32[16,128], index: 2, kind: input, shape index: {}]
  %s3 = inlined_call_operand.vmem [shape: f32[32,128], index: 3, kind: input, shape index: {}]
  %s4 = inlined_call_operand.vmem [shape: f32[1,128], index: 4, kind: input, shape index: {}]
  %s5 = inlined_call_operand.vmem [shape: f32[32,128], index: 5, kind: input, shape index: {}]
  %s6 = inlined_call_operand.vmem [shape: f32[32,128], index: 6, kind: input, shape index: {}]
  %s7 = inlined_call_operand.vmem [shape: f32[1,128], index: 7, kind: input, shape index: {}]
  %s8 = inlined_call_operand.vmem [shape: f32[32,128], index: 8, kind: input, shape index: {}]
  %s9 = inlined_call_operand.vmem [shape: f32[1,128], index: 9, kind: input, shape index: {}]
  %s10 = inlined_call_operand.vmem [shape: f32[32,128], index: 10, kind: input, shape index: {}]
  %s11 = inlined_call_operand.vmem [shape: f32[1,128], index: 11, kind: input, shape index: {}]
  %s12 = inlined_call_operand.vmem [shape: f32[64,128], index: 12, kind: output, shape index: {0}]
  %s13 = inlined_call_operand.vmem [shape: f32[8,128], index: 13, kind: output, shape index: {1}]
  %14 = xla_tuple %s12, %s13
  %s15 = sld [smem:[#allocation0]]
  $region66: #{_forward_impl.1} parent=0
    _
  %s17 = ssub.s32 1, %s15
  %s18 = scalar_select 0, %s17, %s15
  // Predicated region
  $region2: #{_forward_impl.1} parent=0 // pred_check
    _
  $region3: #{_forward_impl.1} parent=0 // pred_check_branch
    %20 = sbr.rel (0) target = $region5
  $region4: #{_forward_impl.1} parent=0 // pred_region
    _
  $region5: #{_forward_impl.1} parent=0 // pred_fallthru
    _
  // Predicated region
  $region6: #{_forward_impl.1} parent=0 // pred_check
    _
  $region7: #{_forward_impl.1} parent=0 // pred_check_branch
    %22 = sbr.rel (0) target = $region9
  $region8: #{_forward_impl.1} parent=0 // pred_region
    _
  $region9: #{_forward_impl.1} parent=0 // pred_fallthru
    _
  // Predicated region
  $region10: #{_forward_impl.1} parent=0 // pred_check
    _
  $region11: #{_forward_impl.1} parent=0 // pred_check_branch
    %24 = sbr.rel (0) target = $region13
  $region12: #{_forward_impl.1} parent=0 // pred_region
    _
  $region13: #{_forward_impl.1} parent=0 // pred_fallthru
    _
  // Predicated region
  $region14: #{_forward_impl.1} parent=0 // pred_check
    _
  $region15: #{_forward_impl.1} parent=0 // pred_check_branch
    %26 = sbr.rel (0) target = $region17
  $region16: #{_forward_impl.1} parent=0 // pred_region
    _
  $region17: #{_forward_impl.1} parent=0 // pred_fallthru
    _
  // Predicated region
  $region18: #{_forward_impl.1} parent=0 // pred_check
    _
  $region19: #{_forward_impl.1} parent=0 // pred_check_branch
    %28 = sbr.rel (0) target = $region21
  $region20: #{_forward_impl.1} parent=0 // pred_region
    _
  $region21: #{_forward_impl.1} parent=0 // pred_fallthru
    _
  // Predicated region
  $region22: #{_forward_impl.1} parent=0 // pred_check
    _
  $region23: #{_forward_impl.1} parent=0 // pred_check_branch
    %30 = sbr.rel (0) target = $region25
  $region24: #{_forward_impl.1} parent=0 // pred_region
    _
  $region25: #{_forward_impl.1} parent=0 // pred_fallthru
    _
  // Predicated region
  $region26: #{_forward_impl.1} parent=0 // pred_check
    _
  $region27: #{_forward_impl.1} parent=0 // pred_check_branch
    %32 = sbr.rel (0) target = $region29
  $region28: #{_forward_impl.1} parent=0 // pred_region
    _
  $region29: #{_forward_impl.1} parent=0 // pred_fallthru
    _
  // Predicated region
  $region30: #{_forward_impl.1} parent=0 // pred_check
    _
  $region31: #{_forward_impl.1} parent=0 // pred_check_branch
    %34 = sbr.rel (0) target = $region33
  $region32: #{_forward_impl.1} parent=0 // pred_region
    _
  $region33: #{_forward_impl.1} parent=0 // pred_fallthru
    _
  // Predicated region
  $region34: #{_forward_impl.1} parent=0 // pred_check
    _
  $region35: #{_forward_impl.1} parent=0 // pred_check_branch
    %36 = sbr.rel (0) target = $region37
  $region36: #{_forward_impl.1} parent=0 // pred_region
    _
  $region37: #{_forward_impl.1} parent=0 // pred_fallthru
    _
  // Predicated region
  $region38: #{_forward_impl.1} parent=0 // pred_check
    _
  $region39: #{_forward_impl.1} parent=0 // pred_check_branch
    %38 = sbr.rel (0) target = $region41
  $region40: #{_forward_impl.1} parent=0 // pred_region
    _
  $region41: #{_forward_impl.1} parent=0 // pred_fallthru
    _
  // Predicated region
  $region42: #{_forward_impl.1} parent=0 // pred_check
    _
  $region43: #{_forward_impl.1} parent=0 // pred_check_branch
    %40 = sbr.rel (0) target = $region45
  $region44: #{_forward_impl.1} parent=0 // pred_region
    _
  $region45: #{_forward_impl.1} parent=0 // pred_fallthru
    _
  // Predicated region
  $region46: #{_forward_impl.1} parent=0 // pred_check
    _
  $region47: #{_forward_impl.1} parent=0 // pred_check_branch
    %42 = sbr.rel (0) target = $region49
  $region48: #{_forward_impl.1} parent=0 // pred_region
    _
  $region49: #{_forward_impl.1} parent=0 // pred_fallthru
    _
  %v43 = vld [vmem:[%s3] sm:$0xff]
  %v44 = vld [vmem:[%s3 + $0x8] sm:$0xff]
  %v45 = vld [vmem:[%s3 + $0x10] sm:$0xff]
  %v46 = vld [vmem:[%s3 + $0x18] sm:$0xff]
  %v47 = vld [vmem:[%s5] sm:$0xff]
  %v48 = vld [vmem:[%s5 + $0x8] sm:$0xff]
  %v49 = vld [vmem:[%s5 + $0x10] sm:$0xff]
  %v50 = vld [vmem:[%s5 + $0x18] sm:$0xff]
  %v51 = vld [vmem:[%s6] sm:$0xff]
  %v52 = vld [vmem:[%s6 + $0x8] sm:$0xff]
  %v53 = vld [vmem:[%s6 + $0x10] sm:$0xff]
  %v54 = vld [vmem:[%s6 + $0x18] sm:$0xff]
  %v55 = vld [vmem:[%s8] sm:$0xff]
  %v56 = vld [vmem:[%s8 + $0x8] sm:$0xff]
  %v57 = vld [vmem:[%s8 + $0x10] sm:$0xff]
  %v58 = vld [vmem:[%s8 + $0x18] sm:$0xff]
  %v59 = vld [vmem:[%s7] sm:$0x1]
  %v61 = vlaneseq
  %v62 = vshrl.u32 %v61, 7
  %v63 = vsub.s32 0, %v62
  %v64 = vrot.slane %v59, %v63
  %v66 = vld [vmem:[%s9] sm:$0x1]
  %v68 = vlaneseq
  %v69 = vshrl.u32 %v68, 7
  %v70 = vsub.s32 0, %v69
  %v71 = vrot.slane %v66, %v70
  %v73 = vld [vmem:[%s0] sm:$0xff]
  %v74 = vld [vmem:[%s0 + $0x8] sm:$0xff]
  %v75 = vld [vmem:[%s0 + $0x10] sm:$0xff]
  %v76 = vld [vmem:[%s0 + $0x18] sm:$0xff]
  %v77 = vld [vmem:[%s0 + $0x20] sm:$0xff]
  %v78 = vld [vmem:[%s0 + $0x28] sm:$0xff]
  %v79 = vld [vmem:[%s0 + $0x30] sm:$0xff]
  %v80 = vld [vmem:[%s0 + $0x38] sm:$0xff]
  %v81 = vld [vmem:[%s2] sm:$0xff]
  %v82 = vld [vmem:[%s2 + $0x8] sm:$0xff]
  %v83 = vld [vmem:[%s4] sm:$0x1]
  %v85 = vlaneseq
  %v86 = vshrl.u32 %v85, 7
  %v87 = vsub.s32 0, %v86
  %v88 = vrot.slane %v83, %v87
  %vm90 = vcmask 130048
  %v92 = vsel %vm90, %v73, 0
  %v95 = vsel %vm90, %v74, 0
  %v98 = vsel %vm90, %v75, 0
  %v101 = vsel %vm90, %v76, 0
  %v104 = vsel %vm90, %v77, 0
  %v107 = vsel %vm90, %v78, 0
  %v110 = vsel %vm90, %v79, 0
  %v113 = vsel %vm90, %v80, 0
  %115 = vmatprep.subr.mxu0 0.0
  %116 = vmatpush1.msra.mxu0 %v81
  %117 = vmatprep.subr.mxu0 0.0
  %118 = vmatpush1.msra.mxu0 %v82
  %119 = vmatprep.subr.mxu0 0.0
  %120 = vmatpush1.msra.mxu0 0.0
  %121 = vmatprep.subr.mxu0 0.0
  %122 = vmatpush1.msra.mxu0 0.0
  %123 = vmatprep.subr.mxu0 0.0
  %124 = vmatpush1.msra.mxu0 0.0
  %125 = vmatprep.subr.mxu0 0.0
  %126 = vmatpush1.msra.mxu0 0.0
  %127 = vmatprep.subr.mxu0 0.0
  %128 = vmatpush1.msra.mxu0 0.0
  %129 = vmatprep.subr.mxu0 0.0
  %130 = vmatpush1.msra.mxu0 0.0
  %131 = vmatprep.subr.mxu0 0.0
  %132 = vmatpush1.msra.mxu0 0.0
  %133 = vmatprep.subr.mxu0 0.0
  %134 = vmatpush1.msra.mxu0 0.0
  %135 = vmatprep.subr.mxu0 0.0
  %136 = vmatpush1.msra.mxu0 0.0
  %137 = vmatprep.subr.mxu0 0.0
  %138 = vmatpush1.msra.mxu0 0.0
  %139 = vmatprep.subr.mxu0 0.0
  %140 = vmatpush1.msra.mxu0 0.0
  %141 = vmatprep.subr.mxu0 0.0
  %142 = vmatpush1.msra.mxu0 0.0
  %143 = vmatprep.subr.mxu0 0.0
  %144 = vmatpush1.msra.mxu0 0.0
  %145 = vmatprep.subr.mxu0 0.0
  %146 = vmatpush1.msra.mxu0 0.0
  %147 = vmatprep.subr.mxu0 0.0
  %148 = vmatpush1.msra.mxu0 0.0
  %149 = vmatprep.subr.mxu0 0.0
  %150 = vmatpush1.msra.mxu0 0.0
  %151 = vmatprep.subr.mxu0 0.0
  %152 = vmatpush1.msra.mxu0 0.0
  %153 = vmatprep.subr.mxu0 0.0
  %154 = vmatpush1.msra.mxu0 0.0
  %155 = vmatprep.subr.mxu0 0.0
  %156 = vmatpush1.msra.mxu0 0.0
  %157 = vmatprep.subr.mxu0 0.0
  %158 = vmatpush1.msra.mxu0 0.0
  %159 = vmatprep.subr.mxu0 0.0
  %160 = vmatpush1.msra.mxu0 0.0
  %161 = vmatprep.subr.mxu0 0.0
  %162 = vmatpush1.msra.mxu0 0.0
  %163 = vmatprep.subr.mxu0 0.0
  %164 = vmatpush1.msra.mxu0 0.0
  %165 = vmatprep.subr.mxu0 0.0
  %166 = vmatpush1.msra.mxu0 0.0
  %167 = vmatprep.subr.mxu0 0.0
  %168 = vmatpush1.msra.mxu0 0.0
  %169 = vmatprep.subr.mxu0 0.0
  %170 = vmatpush1.msra.mxu0 0.0
  %171 = vmatprep.subr.mxu0 0.0
  %172 = vmatpush1.msra.mxu0 0.0
  %173 = vmatprep.subr.mxu0 0.0
  %174 = vmatpush1.msra.mxu0 0.0
  %175 = vmatprep.subr.mxu0 0.0
  %176 = vmatpush1.msra.mxu0 0.0
  %177 = vmatprep.subr.mxu0 0.0
  %178 = vmatpush1.msra.mxu0 0.0
  %179 = vmatprep.mubr.f32.mxu0 0.0
  %180 = vmatmul.mubr.f32.gmra.mrb[0].mxu0 %v92
  %v181 = vpop.f32.mrb[0].mxu0
  %v182 = vadd.f32 %v88, %v181
  %v183 = vpop.f32.mrb[0].mxu0
  %184 = vmatprep.mubr.f32.mxu0 0.0
  %185 = vmatmul.mubr.f32.gmra.mrb[0].mxu0 %v95
  %v186 = vpop.f32.mrb[0].mxu0
  %v187 = vadd.f32 %v88, %v186
  %v188 = vpop.f32.mrb[0].mxu0
  %189 = vmatprep.mubr.f32.mxu0 0.0
  %190 = vmatmul.mubr.f32.gmra.mrb[0].mxu0 %v98
  %v191 = vpop.f32.mrb[0].mxu0
  %v192 = vadd.f32 %v88, %v191
  %v193 = vpop.f32.mrb[0].mxu0
  %194 = vmatprep.mubr.f32.mxu0 0.0
  %195 = vmatmul.mubr.f32.gmra.mrb[0].mxu0 %v101
  %v196 = vpop.f32.mrb[0].mxu0
  %v197 = vadd.f32 %v88, %v196
  %v198 = vpop.f32.mrb[0].mxu0
  %199 = vmatprep.mubr.f32.mxu0 0.0
  %200 = vmatmul.mubr.f32.gmra.mrb[0].mxu0 %v104
  %v201 = vpop.f32.mrb[0].mxu0
  %v202 = vadd.f32 %v88, %v201
  %v203 = vpop.f32.mrb[0].mxu0
  %204 = vmatprep.mubr.f32.mxu0 0.0
  %205 = vmatmul.mubr.f32.gmra.mrb[0].mxu0 %v107
  %v206 = vpop.f32.mrb[0].mxu0
  %v207 = vadd.f32 %v88, %v206
  %v208 = vpop.f32.mrb[0].mxu0
  %209 = vmatprep.mubr.f32.mxu0 0.0
  %210 = vmatmul.mubr.f32.gmra.mrb[0].mxu0 %v110
  %v211 = vpop.f32.mrb[0].mxu0
  %v212 = vadd.f32 %v88, %v211
  %v213 = vpop.f32.mrb[0].mxu0
  %214 = vmatprep.mubr.f32.mxu0 0.0
  %215 = vmatmul.mubr.f32.gmra.mrb[0].mxu0 %v113
  %v216 = vpop.f32.mrb[0].mxu0
  %v217 = vadd.f32 %v88, %v216
  %v218 = vpop.f32.mrb[0].mxu0
  %219 = vdwg.mxu0
  %v220 = vld [vmem:[%s1] sm:$0xff]
  %vm221 = vcmp.gt.f32.partialorder %v220, 0.0
  %vm222 = vcmask 261120
  %v224 = vsel %vm222, 0.0, 0
  %226 = vmatprep.subr.mxu0 0.0
  %227 = vmatpush1.msra.mxu0 %v43
  %228 = vmatprep.subr.mxu0 0.0
  %229 = vmatpush1.msra.mxu0 %v44
  %230 = vmatprep.subr.mxu0 0.0
  %231 = vmatpush1.msra.mxu0 %v45
  %232 = vmatprep.subr.mxu0 0.0
  %233 = vmatpush1.msra.mxu0 %v46
  %234 = vmatprep.subr.mxu0 0.0
  %235 = vmatpush1.msra.mxu0 0.0
  %236 = vmatprep.subr.mxu0 0.0
  %237 = vmatpush1.msra.mxu0 0.0
  %238 = vmatprep.subr.mxu0 0.0
  %239 = vmatpush1.msra.mxu0 0.0
  %240 = vmatprep.subr.mxu0 0.0
  %241 = vmatpush1.msra.mxu0 0.0
  %242 = vmatprep.subr.mxu0 0.0
  %243 = vmatpush1.msra.mxu0 0.0
  %244 = vmatprep.subr.mxu0 0.0
  %245 = vmatpush1.msra.mxu0 0.0
  %246 = vmatprep.subr.mxu0 0.0
  %247 = vmatpush1.msra.mxu0 0.0
  %248 = vmatprep.subr.mxu0 0.0
  %249 = vmatpush1.msra.mxu0 0.0
  %250 = vmatprep.subr.mxu0 0.0
  %251 = vmatpush1.msra.mxu0 0.0
  %252 = vmatprep.subr.mxu0 0.0
  %253 = vmatpush1.msra.mxu0 0.0
  %254 = vmatprep.subr.mxu0 0.0
  %255 = vmatpush1.msra.mxu0 0.0
  %256 = vmatprep.subr.mxu0 0.0
  %257 = vmatpush1.msra.mxu0 0.0
  %258 = vmatprep.subr.mxu0 0.0
  %259 = vmatpush1.msra.mxu0 0.0
  %260 = vmatprep.subr.mxu0 0.0
  %261 = vmatpush1.msra.mxu0 0.0
  %262 = vmatprep.subr.mxu0 0.0
  %263 = vmatpush1.msra.mxu0 0.0
  %264 = vmatprep.subr.mxu0 0.0
  %265 = vmatpush1.msra.mxu0 0.0
  %266 = vmatprep.subr.mxu0 0.0
  %267 = vmatpush1.msra.mxu0 0.0
  %268 = vmatprep.subr.mxu0 0.0
  %269 = vmatpush1.msra.mxu0 0.0
  %270 = vmatprep.subr.mxu0 0.0
  %271 = vmatpush1.msra.mxu0 0.0
  %272 = vmatprep.subr.mxu0 0.0
  %273 = vmatpush1.msra.mxu0 0.0
  %274 = vmatprep.subr.mxu0 0.0
  %275 = vmatpush1.msra.mxu0 0.0
  %276 = vmatprep.subr.mxu0 0.0
  %277 = vmatpush1.msra.mxu0 0.0
  %278 = vmatprep.subr.mxu0 0.0
  %279 = vmatpush1.msra.mxu0 0.0
  %280 = vmatprep.subr.mxu0 0.0
  %281 = vmatpush1.msra.mxu0 0.0
  %282 = vmatprep.subr.mxu0 0.0
  %283 = vmatpush1.msra.mxu0 0.0
  %284 = vmatprep.subr.mxu0 0.0
  %285 = vmatpush1.msra.mxu0 0.0
  %286 = vmatprep.subr.mxu0 0.0
  %287 = vmatpush1.msra.mxu0 0.0
  %288 = vmatprep.subr.mxu0 0.0
  %289 = vmatpush1.msra.mxu0 0.0
  %290 = vmatprep.mubr.f32.mxu0 0.0
  %291 = vmatmul.mubr.f32.gmra.mrb[0].mxu0 %v224
  %v292 = vpop.f32.mrb[0].mxu0
  %v293 = vadd.f32 0.0, %v292
  %v294 = vpop.f32.mrb[0].mxu0
  %295 = vdwg.mxu0
  %v296 = vadd.f32 %v182, %v293
  %v297 = vxor.u32 %v296, 2147483648
  %v298 = vmul.f32 %v297, 1.442695
  %v299 = vpow.pop %v298
  %v300 = vadd.f32 %v299, 1.0
  %v301 = vrcp.pop %v300
  %v302 = vmul.f32 1.0, %v301
  %v303 = vmul.f32 %v302, 2.0
  %v304 = vsub.f32 %v303, 1.0
  %v305 = vmul.f32 %v302, 0.0
  %307 = vrot.lane.b32.xlu0 %v304, 64
  %v308 = vpop.permute.xlu0 %307
  %v310 = vmul.f32 %v302, %v308
  %312 = vrot.lane.b32.xlu0 %v310, 32
  %v313 = vpop.permute.xlu0 %312
  %v315 = vadd.f32 %v305, %v313
  %v316 = vtanh.pop %v315
  %318 = vrot.lane.b32.xlu0 %v316, 64
  %v319 = vpop.permute.xlu0 %318
  %v321 = vmul.f32 %v302, %v319
  %322 = vmatprep.subr.mxu0 0.0
  %323 = vmatpush1.msra.mxu0 %v51
  %324 = vmatprep.subr.mxu0 0.0
  %325 = vmatpush1.msra.mxu0 %v52
  %326 = vmatprep.subr.mxu0 0.0
  %327 = vmatpush1.msra.mxu0 %v53
  %328 = vmatprep.subr.mxu0 0.0
  %329 = vmatpush1.msra.mxu0 %v54
  %330 = vmatprep.subr.mxu0 0.0
  %331 = vmatpush1.msra.mxu0 0.0
  %332 = vmatprep.subr.mxu0 0.0
  %333 = vmatpush1.msra.mxu0 0.0
  %334 = vmatprep.subr.mxu0 0.0
  %335 = vmatpush1.msra.mxu0 0.0
  %336 = vmatprep.subr.mxu0 0.0
  %337 = vmatpush1.msra.mxu0 0.0
  %338 = vmatprep.subr.mxu0 0.0
  %339 = vmatpush1.msra.mxu0 0.0
  %340 = vmatprep.subr.mxu0 0.0
  %341 = vmatpush1.msra.mxu0 0.0
  %342 = vmatprep.subr.mxu0 0.0
  %343 = vmatpush1.msra.mxu0 0.0
  %344 = vmatprep.subr.mxu0 0.0
  %345 = vmatpush1.msra.mxu0 0.0
  %346 = vmatprep.subr.mxu0 0.0
  %347 = vmatpush1.msra.mxu0 0.0
  %348 = vmatprep.subr.mxu0 0.0
  %349 = vmatpush1.msra.mxu0 0.0
  %350 = vmatprep.subr.mxu0 0.0
  %351 = vmatpush1.msra.mxu0 0.0
  %352 = vmatprep.subr.mxu0 0.0
  %353 = vmatpush1.msra.mxu0 0.0
  %354 = vmatprep.subr.mxu0 0.0
  %355 = vmatpush1.msra.mxu0 0.0
  %356 = vmatprep.subr.mxu0 0.0
  %357 = vmatpush1.msra.mxu0 0.0
  %358 = vmatprep.subr.mxu0 0.0
  %359 = vmatpush1.msra.mxu0 0.0
  %360 = vmatprep.subr.mxu0 0.0
  %361 = vmatpush1.msra.mxu0 0.0
  %362 = vmatprep.subr.mxu0 0.0
  %363 = vmatpush1.msra.mxu0 0.0
  %364 = vmatprep.subr.mxu0 0.0
  %365 = vmatpush1.msra.mxu0 0.0
  %366 = vmatprep.subr.mxu0 0.0
  %367 = vmatpush1.msra.mxu0 0.0
  %368 = vmatprep.subr.mxu0 0.0
  %369 = vmatpush1.msra.mxu0 0.0
  %370 = vmatprep.subr.mxu0 0.0
  %371 = vmatpush1.msra.mxu0 0.0
  %372 = vmatprep.subr.mxu0 0.0
  %373 = vmatpush1.msra.mxu0 0.0
  %374 = vmatprep.subr.mxu0 0.0
  %375 = vmatpush1.msra.mxu0 0.0
  %376 = vmatprep.subr.mxu0 0.0
  %377 = vmatpush1.msra.mxu0 0.0
  %378 = vmatprep.subr.mxu0 0.0
  %379 = vmatpush1.msra.mxu0 0.0
  %380 = vmatprep.subr.mxu0 0.0
  %381 = vmatpush1.msra.mxu0 0.0
  %382 = vmatprep.subr.mxu0 0.0
  %383 = vmatpush1.msra.mxu0 0.0
  %384 = vmatprep.subr.mxu0 0.0
  %385 = vmatpush1.msra.mxu0 0.0
  %386 = vmatprep.mubr.f32.mxu0 0.0
  %387 = vmatmul.mubr.f32.gmra.mrb[0].mxu0 %v224
  %v388 = vpop.f32.mrb[0].mxu0
  %v389 = vadd.f32 0.0, %v388
  %v390 = vpop.f32.mrb[0].mxu0
  %391 = vdwg.mxu0
  %393 = vrot.lane.b32.xlu0 %v321, 32
  %v394 = vpop.permute.xlu0 %393
  %v395 = vsel %vm222, %v394, 0
  %397 = vmatprep.subr.mxu0 0.0
  %398 = vmatpush1.msra.mxu0 %v47
  %399 = vmatprep.subr.mxu0 0.0
  %400 = vmatpush1.msra.mxu0 %v48
  %401 = vmatprep.subr.mxu0 0.0
  %402 = vmatpush1.msra.mxu0 %v49
  %403 = vmatprep.subr.mxu0 0.0
  %404 = vmatpush1.msra.mxu0 %v50
  %405 = vmatprep.subr.mxu0 0.0
  %406 = vmatpush1.msra.mxu0 0.0
  %407 = vmatprep.subr.mxu0 0.0
  %408 = vmatpush1.msra.mxu0 0.0
  %409 = vmatprep.subr.mxu0 0.0
  %410 = vmatpush1.msra.mxu0 0.0
  %411 = vmatprep.subr.mxu0 0.0
  %412 = vmatpush1.msra.mxu0 0.0
  %413 = vmatprep.subr.mxu0 0.0
  %414 = vmatpush1.msra.mxu0 0.0
  %415 = vmatprep.subr.mxu0 0.0
  %416 = vmatpush1.msra.mxu0 0.0
  %417 = vmatprep.subr.mxu0 0.0
  %418 = vmatpush1.msra.mxu0 0.0
  %419 = vmatprep.subr.mxu0 0.0
  %420 = vmatpush1.msra.mxu0 0.0
  %421 = vmatprep.subr.mxu0 0.0
  %422 = vmatpush1.msra.mxu0 0.0
  %423 = vmatprep.subr.mxu0 0.0
  %424 = vmatpush1.msra.mxu0 0.0
  %425 = vmatprep.subr.mxu0 0.0
  %426 = vmatpush1.msra.mxu0 0.0
  %427 = vmatprep.subr.mxu0 0.0
  %428 = vmatpush1.msra.mxu0 0.0
  %429 = vmatprep.subr.mxu0 0.0
  %430 = vmatpush1.msra.mxu0 0.0
  %431 = vmatprep.subr.mxu0 0.0
  %432 = vmatpush1.msra.mxu0 0.0
  %433 = vmatprep.subr.mxu0 0.0
  %434 = vmatpush1.msra.mxu0 0.0
  %435 = vmatprep.subr.mxu0 0.0
  %436 = vmatpush1.msra.mxu0 0.0
  %437 = vmatprep.subr.mxu0 0.0
  %438 = vmatpush1.msra.mxu0 0.0
  %439 = vmatprep.subr.mxu0 0.0
  %440 = vmatpush1.msra.mxu0 0.0
  %441 = vmatprep.subr.mxu0 0.0
  %442 = vmatpush1.msra.mxu0 0.0
  %443 = vmatprep.subr.mxu0 0.0
  %444 = vmatpush1.msra.mxu0 0.0
  %445 = vmatprep.subr.mxu0 0.0
  %446 = vmatpush1.msra.mxu0 0.0
  %447 = vmatprep.subr.mxu0 0.0
  %448 = vmatpush1.msra.mxu0 0.0
  %449 = vmatprep.subr.mxu0 0.0
  %450 = vmatpush1.msra.mxu0 0.0
  %451 = vmatprep.subr.mxu0 0.0
  %452 = vmatpush1.msra.mxu0 0.0
  %453 = vmatprep.subr.mxu0 0.0
  %454 = vmatpush1.msra.mxu0 0.0
  %455 = vmatprep.subr.mxu0 0.0
  %456 = vmatpush1.msra.mxu0 0.0
  %457 = vmatprep.subr.mxu0 0.0
  %458 = vmatpush1.msra.mxu0 0.0
  %459 = vmatprep.subr.mxu0 0.0
  %460 = vmatpush1.msra.mxu0 0.0
  %461 = vmatprep.mubr.f32.mxu0 0.0
  %462 = vmatmul.mubr.f32.gmra.mrb[0].mxu0 %v395
  %v463 = vpop.f32.mrb[0].mxu0
  %v464 = vadd.f32 %v389, %v463
  %v465 = vpop.f32.mrb[0].mxu0
  %466 = vdwg.mxu0
  %v467 = vadd.f32 %v464, %v64
  %v468 = vxor.u32 %v467, 2147483648
  %v469 = vmul.f32 %v468, 1.442695
  %v470 = vpow.pop %v469
  %v471 = vadd.f32 %v470, 1.0
  %v472 = vrcp.pop %v471
  %v473 = vmul.f32 1.0, %v472
  %v474 = vmul.f32 %v473, 2.0
  %v475 = vsub.f32 %v474, 1.0
  %v476 = vmul.f32 %v473, 0.0
  %478 = vrot.lane.b32.xlu0 %v475, 64
  %v479 = vpop.permute.xlu0 %478
  %v481 = vmul.f32 %v473, %v479
  %483 = vrot.lane.b32.xlu0 %v481, 32
  %v484 = vpop.permute.xlu0 %483
  %v486 = vadd.f32 %v476, %v484
  %v487 = vtanh.pop %v486
  %489 = vrot.lane.b32.xlu0 %v487, 64
  %v490 = vpop.permute.xlu0 %489
  %v492 = vmul.f32 %v473, %v490
  %v493 = vsel %vm221, 1, 0
  %494 = vset.pattern.permute.xlu0 0
  %495 = vperm.xlu0 %494, %v493
  %v496 = vpop.permute.xlu0 %495
  %vm497 = vcmp.eq.s32.totalorder %v496, 1
  %v498 = vsel %vm497, %v321, 0.0
  %v499 = vsel %vm497, %v315, 0.0
  %v500 = vsel %vm497, %v492, 0.0
  %v501 = vsel %vm497, %v486, 0.0
  %503 = vrot.lane.b32.xlu0 %v500, 32
  %v504 = vpop.permute.xlu0 %503
  %v505 = vsel %vm222, %v504, 0
  %507 = vmatprep.subr.mxu0 0.0
  %508 = vmatpush1.msra.mxu0 %v55
  %509 = vmatprep.subr.mxu0 0.0
  %510 = vmatpush1.msra.mxu0 %v56
  %511 = vmatprep.subr.mxu0 0.0
  %512 = vmatpush1.msra.mxu0 %v57
  %513 = vmatprep.subr.mxu0 0.0
  %514 = vmatpush1.msra.mxu0 %v58
  %515 = vmatprep.subr.mxu0 0.0
  %516 = vmatpush1.msra.mxu0 0.0
  %517 = vmatprep.subr.mxu0 0.0
  %518 = vmatpush1.msra.mxu0 0.0
  %519 = vmatprep.subr.mxu0 0.0
  %520 = vmatpush1.msra.mxu0 0.0
  %521 = vmatprep.subr.mxu0 0.0
  %522 = vmatpush1.msra.mxu0 0.0
  %523 = vmatprep.subr.mxu0 0.0
  %524 = vmatpush1.msra.mxu0 0.0
  %525 = vmatprep.subr.mxu0 0.0
  %526 = vmatpush1.msra.mxu0 0.0
  %527 = vmatprep.subr.mxu0 0.0
  %528 = vmatpush1.msra.mxu0 0.0
  %529 = vmatprep.subr.mxu0 0.0
  %530 = vmatpush1.msra.mxu0 0.0
  %531 = vmatprep.subr.mxu0 0.0
  %532 = vmatpush1.msra.mxu0 0.0
  %533 = vmatprep.subr.mxu0 0.0
  %534 = vmatpush1.msra.mxu0 0.0
  %535 = vmatprep.subr.mxu0 0.0
  %536 = vmatpush1.msra.mxu0 0.0
  %537 = vmatprep.subr.mxu0 0.0
  %538 = vmatpush1.msra.mxu0 0.0
  %539 = vmatprep.subr.mxu0 0.0
  %540 = vmatpush1.msra.mxu0 0.0
  %541 = vmatprep.subr.mxu0 0.0
  %542 = vmatpush1.msra.mxu0 0.0
  %543 = vmatprep.subr.mxu0 0.0
  %544 = vmatpush1.msra.mxu0 0.0
  %545 = vmatprep.subr.mxu0 0.0
  %546 = vmatpush1.msra.mxu0 0.0
  %547 = vmatprep.subr.mxu0 0.0
  %548 = vmatpush1.msra.mxu0 0.0
  %549 = vmatprep.subr.mxu0 0.0
  %550 = vmatpush1.msra.mxu0 0.0
  %551 = vmatprep.subr.mxu0 0.0
  %552 = vmatpush1.msra.mxu0 0.0
  %553 = vmatprep.subr.mxu0 0.0
  %554 = vmatpush1.msra.mxu0 0.0
  %555 = vmatprep.subr.mxu0 0.0
  %556 = vmatpush1.msra.mxu0 0.0
  %557 = vmatprep.subr.mxu0 0.0
  %558 = vmatpush1.msra.mxu0 0.0
  %559 = vmatprep.subr.mxu0 0.0
  %560 = vmatpush1.msra.mxu0 0.0
  %561 = vmatprep.subr.mxu0 0.0
  %562 = vmatpush1.msra.mxu0 0.0
  %563 = vmatprep.subr.mxu0 0.0
  %564 = vmatpush1.msra.mxu0 0.0
  %565 = vmatprep.subr.mxu0 0.0
  %566 = vmatpush1.msra.mxu0 0.0
  %567 = vmatprep.subr.mxu0 0.0
  %568 = vmatpush1.msra.mxu0 0.0
  %569 = vmatprep.subr.mxu0 0.0
  %570 = vmatpush1.msra.mxu0 0.0
  %571 = vmatprep.mubr.f32.mxu0 0.0
  %572 = vmatmul.mubr.f32.gmra.mrb[0].mxu0 %v505
  %v573 = vpop.f32.mrb[0].mxu0
  %v574 = vadd.f32 %v71, %v573
  %v575 = vpop.f32.mrb[0].mxu0
  %576 = vdwg.mxu0
  %577 = vst [vmem:[%s12] sm:$0xff] %v574
  %s578 = scalar_lea.vmem %s1, 8
  %v579 = vld [vmem:[%s578] sm:$0xff]
  %vm580 = vcmp.gt.f32.partialorder %v579, 0.0
  %582 = vrot.lane.b32.xlu0 %v498, 32
  %v583 = vpop.permute.xlu0 %582
  %v584 = vsel %vm222, %v583, 0
  %586 = vmatprep.subr.mxu0 0.0
  %587 = vmatpush1.msra.mxu0 %v43
  %588 = vmatprep.subr.mxu0 0.0
  %589 = vmatpush1.msra.mxu0 %v44
  %590 = vmatprep.subr.mxu0 0.0
  %591 = vmatpush1.msra.mxu0 %v45
  %592 = vmatprep.subr.mxu0 0.0
  %593 = vmatpush1.msra.mxu0 %v46
  %594 = vmatprep.subr.mxu0 0.0
  %595 = vmatpush1.msra.mxu0 0.0
  %596 = vmatprep.subr.mxu0 0.0
  %597 = vmatpush1.msra.mxu0 0.0
  %598 = vmatprep.subr.mxu0 0.0
  %599 = vmatpush1.msra.mxu0 0.0
  %600 = vmatprep.subr.mxu0 0.0
  %601 = vmatpush1.msra.mxu0 0.0
  %602 = vmatprep.subr.mxu0 0.0
  %603 = vmatpush1.msra.mxu0 0.0
  %604 = vmatprep.subr.mxu0 0.0
  %605 = vmatpush1.msra.mxu0 0.0
  %606 = vmatprep.subr.mxu0 0.0
  %607 = vmatpush1.msra.mxu0 0.0
  %608 = vmatprep.subr.mxu0 0.0
  %609 = vmatpush1.msra.mxu0 0.0
  %610 = vmatprep.subr.mxu0 0.0
  %611 = vmatpush1.msra.mxu0 0.0
  %612 = vmatprep.subr.mxu0 0.0
  %613 = vmatpush1.msra.mxu0 0.0
  %614 = vmatprep.subr.mxu0 0.0
  %615 = vmatpush1.msra.mxu0 0.0
  %616 = vmatprep.subr.mxu0 0.0
  %617 = vmatpush1.msra.mxu0 0.0
  %618 = vmatprep.subr.mxu0 0.0
  %619 = vmatpush1.msra.mxu0 0.0
  %620 = vmatprep.subr.mxu0 0.0
  %621 = vmatpush1.msra.mxu0 0.0
  %622 = vmatprep.subr.mxu0 0.0
  %623 = vmatpush1.msra.mxu0 0.0
  %624 = vmatprep.subr.mxu0 0.0
  %625 = vmatpush1.msra.mxu0 0.0
  %626 = vmatprep.subr.mxu0 0.0
  %627 = vmatpush1.msra.mxu0 0.0
  %628 = vmatprep.subr.mxu0 0.0
  %629 = vmatpush1.msra.mxu0 0.0
  %630 = vmatprep.subr.mxu0 0.0
  %631 = vmatpush1.msra.mxu0 0.0
  %632 = vmatprep.subr.mxu0 0.0
  %633 = vmatpush1.msra.mxu0 0.0
  %634 = vmatprep.subr.mxu0 0.0
  %635 = vmatpush1.msra.mxu0 0.0
  %636 = vmatprep.subr.mxu0 0.0
  %637 = vmatpush1.msra.mxu0 0.0
  %638 = vmatprep.subr.mxu0 0.0
  %639 = vmatpush1.msra.mxu0 0.0
  %640 = vmatprep.subr.mxu0 0.0
  %641 = vmatpush1.msra.mxu0 0.0
  %642 = vmatprep.subr.mxu0 0.0
  %643 = vmatpush1.msra.mxu0 0.0
  %644 = vmatprep.subr.mxu0 0.0
  %645 = vmatpush1.msra.mxu0 0.0
  %646 = vmatprep.subr.mxu0 0.0
  %647 = vmatpush1.msra.mxu0 0.0
  %648 = vmatprep.subr.mxu0 0.0
  %649 = vmatpush1.msra.mxu0 0.0
  %650 = vmatprep.mubr.f32.mxu0 0.0
  %651 = vmatmul.mubr.f32.gmra.mrb[0].mxu0 %v584
  %v652 = vpop.f32.mrb[0].mxu0
  %v653 = vadd.f32 0.0, %v652
  %v654 = vpop.f32.mrb[0].mxu0
  %655 = vdwg.mxu0
  %v656 = vadd.f32 %v187, %v653
  %v657 = vxor.u32 %v656, 2147483648
  %v658 = vmul.f32 %v657, 1.442695
  %v659 = vpow.pop %v658
  %v660 = vadd.f32 %v659, 1.0
  %v661 = vrcp.pop %v660
  %v662 = vmul.f32 1.0, %v661
  %v663 = vmul.f32 %v662, 2.0
  %v664 = vsub.f32 %v663, 1.0
  %v665 = vmul.f32 %v662, %v499
  %667 = vrot.lane.b32.xlu0 %v664, 64
  %v668 = vpop.permute.xlu0 %667
  %v670 = vmul.f32 %v662, %v668
  %672 = vrot.lane.b32.xlu0 %v670, 32
  %v673 = vpop.permute.xlu0 %672
  %v675 = vadd.f32 %v665, %v673
  %v676 = vtanh.pop %v675
  %678 = vrot.lane.b32.xlu0 %v676, 64
  %v679 = vpop.permute.xlu0 %678
  %v681 = vmul.f32 %v662, %v679
  %682 = vmatprep.subr.mxu0 0.0
  %683 = vmatpush1.msra.mxu0 %v51
  %684 = vmatprep.subr.mxu0 0.0
  %685 = vmatpush1.msra.mxu0 %v52
  %686 = vmatprep.subr.mxu0 0.0
  %687 = vmatpush1.msra.mxu0 %v53
  %688 = vmatprep.subr.mxu0 0.0
  %689 = vmatpush1.msra.mxu0 %v54
  %690 = vmatprep.subr.mxu0 0.0
  %691 = vmatpush1.msra.mxu0 0.0
  %692 = vmatprep.subr.mxu0 0.0
  %693 = vmatpush1.msra.mxu0 0.0
  %694 = vmatprep.subr.mxu0 0.0
  %695 = vmatpush1.msra.mxu0 0.0
  %696 = vmatprep.subr.mxu0 0.0
  %697 = vmatpush1.msra.mxu0 0.0
  %698 = vmatprep.subr.mxu0 0.0
  %699 = vmatpush1.msra.mxu0 0.0
  %700 = vmatprep.subr.mxu0 0.0
  %701 = vmatpush1.msra.mxu0 0.0
  %702 = vmatprep.subr.mxu0 0.0
  %703 = vmatpush1.msra.mxu0 0.0
  %704 = vmatprep.subr.mxu0 0.0
  %705 = vmatpush1.msra.mxu0 0.0
  %706 = vmatprep.subr.mxu0 0.0
  %707 = vmatpush1.msra.mxu0 0.0
  %708 = vmatprep.subr.mxu0 0.0
  %709 = vmatpush1.msra.mxu0 0.0
  %710 = vmatprep.subr.mxu0 0.0
  %711 = vmatpush1.msra.mxu0 0.0
  %712 = vmatprep.subr.mxu0 0.0
  %713 = vmatpush1.msra.mxu0 0.0
  %714 = vmatprep.subr.mxu0 0.0
  %715 = vmatpush1.msra.mxu0 0.0
  %716 = vmatprep.subr.mxu0 0.0
  %717 = vmatpush1.msra.mxu0 0.0
  %718 = vmatprep.subr.mxu0 0.0
  %719 = vmatpush1.msra.mxu0 0.0
  %720 = vmatprep.subr.mxu0 0.0
  %721 = vmatpush1.msra.mxu0 0.0
  %722 = vmatprep.subr.mxu0 0.0
  %723 = vmatpush1.msra.mxu0 0.0
  %724 = vmatprep.subr.mxu0 0.0
  %725 = vmatpush1.msra.mxu0 0.0
  %726 = vmatprep.subr.mxu0 0.0
  %727 = vmatpush1.msra.mxu0 0.0
  %728 = vmatprep.subr.mxu0 0.0
  %729 = vmatpush1.msra.mxu0 0.0
  %730 = vmatprep.subr.mxu0 0.0
  %731 = vmatpush1.msra.mxu0 0.0
  %732 = vmatprep.subr.mxu0 0.0
  %733 = vmatpush1.msra.mxu0 0.0
  %734 = vmatprep.subr.mxu0 0.0
  %735 = vmatpush1.msra.mxu0 0.0
  %736 = vmatprep.subr.mxu0 0.0
  %737 = vmatpush1.msra.mxu0 0.0
  %738 = vmatprep.subr.mxu0 0.0
  %739 = vmatpush1.msra.mxu0 0.0
  %740 = vmatprep.subr.mxu0 0.0
  %741 = vmatpush1.msra.mxu0 0.0
  %742 = vmatprep.subr.mxu0 0.0
  %743 = vmatpush1.msra.mxu0 0.0
  %744 = vmatprep.subr.mxu0 0.0
  %745 = vmatpush1.msra.mxu0 0.0
  %746 = vmatprep.mubr.f32.mxu0 0.0
  %747 = vmatmul.mubr.f32.gmra.mrb[0].mxu0 %v505
  %v748 = vpop.f32.mrb[0].mxu0
  %v749 = vadd.f32 0.0, %v748
  %v750 = vpop.f32.mrb[0].mxu0
  %751 = vdwg.mxu0
  %753 = vrot.lane.b32.xlu0 %v681, 32
  %v754 = vpop.permute.xlu0 %753
  %v755 = vsel %vm222, %v754, 0
  %757 = vmatprep.subr.mxu0 0.0
  %758 = vmatpush1.msra.mxu0 %v47
  %759 = vmatprep.subr.mxu0 0.0
  %760 = vmatpush1.msra.mxu0 %v48
  %761 = vmatprep.subr.mxu0 0.0
  %762 = vmatpush1.msra.mxu0 %v49
  %763 = vmatprep.subr.mxu0 0.0
  %764 = vmatpush1.msra.mxu0 %v50
  %765 = vmatprep.subr.mxu0 0.0
  %766 = vmatpush1.msra.mxu0 0.0
  %767 = vmatprep.subr.mxu0 0.0
  %768 = vmatpush1.msra.mxu0 0.0
  %769 = vmatprep.subr.mxu0 0.0
  %770 = vmatpush1.msra.mxu0 0.0
  %771 = vmatprep.subr.mxu0 0.0
  %772 = vmatpush1.msra.mxu0 0.0
  %773 = vmatprep.subr.mxu0 0.0
  %774 = vmatpush1.msra.mxu0 0.0
  %775 = vmatprep.subr.mxu0 0.0
  %776 = vmatpush1.msra.mxu0 0.0
  %777 = vmatprep.subr.mxu0 0.0
  %778 = vmatpush1.msra.mxu0 0.0
  %779 = vmatprep.subr.mxu0 0.0
  %780 = vmatpush1.msra.mxu0 0.0
  %781 = vmatprep.subr.mxu0 0.0
  %782 = vmatpush1.msra.mxu0 0.0
  %783 = vmatprep.subr.mxu0 0.0
  %784 = vmatpush1.msra.mxu0 0.0
  %785 = vmatprep.subr.mxu0 0.0
  %786 = vmatpush1.msra.mxu0 0.0
  %787 = vmatprep.subr.mxu0 0.0
  %788 = vmatpush1.msra.mxu0 0.0
  %789 = vmatprep.subr.mxu0 0.0
  %790 = vmatpush1.msra.mxu0 0.0
  %791 = vmatprep.subr.mxu0 0.0
  %792 = vmatpush1.msra.mxu0 0.0
  %793 = vmatprep.subr.mxu0 0.0
  %794 = vmatpush1.msra.mxu0 0.0
  %795 = vmatprep.subr.mxu0 0.0
  %796 = vmatpush1.msra.mxu0 0.0
  %797 = vmatprep.subr.mxu0 0.0
  %798 = vmatpush1.msra.mxu0 0.0
  %799 = vmatprep.subr.mxu0 0.0
  %800 = vmatpush1.msra.mxu0 0.0
  %801 = vmatprep.subr.mxu0 0.0
  %802 = vmatpush1.msra.mxu0 0.0
  %803 = vmatprep.subr.mxu0 0.0
  %804 = vmatpush1.msra.mxu0 0.0
  %805 = vmatprep.subr.mxu0 0.0
  %806 = vmatpush1.msra.mxu0 0.0
  %807 = vmatprep.subr.mxu0 0.0
  %808 = vmatpush1.msra.mxu0 0.0
  %809 = vmatprep.subr.mxu0 0.0
  %810 = vmatpush1.msra.mxu0 0.0
  %811 = vmatprep.subr.mxu0 0.0
  %812 = vmatpush1.msra.mxu0 0.0
  %813 = vmatprep.subr.mxu0 0.0
  %814 = vmatpush1.msra.mxu0 0.0
  %815 = vmatprep.subr.mxu0 0.0
  %816 = vmatpush1.msra.mxu0 0.0
  %817 = vmatprep.subr.mxu0 0.0
  %818 = vmatpush1.msra.mxu0 0.0
  %819 = vmatprep.subr.mxu0 0.0
  %820 = vmatpush1.msra.mxu0 0.0
  %821 = vmatprep.mubr.f32.mxu0 0.0
  %822 = vmatmul.mubr.f32.gmra.mrb[0].mxu0 %v755
  %v823 = vpop.f32.mrb[0].mxu0
  %v824 = vadd.f32 %v749, %v823
  %v825 = vpop.f32.mrb[0].mxu0
  %826 = vdwg.mxu0
  %v827 = vadd.f32 %v824, %v64
  %v828 = vxor.u32 %v827, 2147483648
  %v829 = vmul.f32 %v828, 1.442695
  %v830 = vpow.pop %v829
  %v831 = vadd.f32 %v830, 1.0
  %v832 = vrcp.pop %v831
  %v833 = vmul.f32 1.0, %v832
  %v834 = vmul.f32 %v833, 2.0
  %v835 = vsub.f32 %v834, 1.0
  %v836 = vmul.f32 %v833, %v501
  %838 = vrot.lane.b32.xlu0 %v835, 64
  %v839 = vpop.permute.xlu0 %838
  %v841 = vmul.f32 %v833, %v839
  %843 = vrot.lane.b32.xlu0 %v841, 32
  %v844 = vpop.permute.xlu0 %843
  %v846 = vadd.f32 %v836, %v844
  %v847 = vtanh.pop %v846
  %849 = vrot.lane.b32.xlu0 %v847, 64
  %v850 = vpop.permute.xlu0 %849
  %v852 = vmul.f32 %v833, %v850
  %v853 = vsel %vm580, 1, 0
  %854 = vset.pattern.permute.xlu0 0
  %855 = vperm.xlu0 %854, %v853
  %v856 = vpop.permute.xlu0 %855
  %vm857 = vcmp.eq.s32.totalorder %v856, 1
  %v858 = vsel %vm857, %v681, %v498
  %v859 = vsel %vm857, %v675, %v499
  %v860 = vsel %vm857, %v852, %v500
  %v861 = vsel %vm857, %v846, %v501
  %v862 = vsel %vm857, %v852, 0.0
  %864 = vrot.lane.b32.xlu0 %v862, 32
  %v865 = vpop.permute.xlu0 %864
  %v866 = vsel %vm222, %v865, 0
  %868 = vmatprep.subr.mxu0 0.0
  %869 = vmatpush1.msra.mxu0 %v55
  %870 = vmatprep.subr.mxu0 0.0
  %871 = vmatpush1.msra.mxu0 %v56
  %872 = vmatprep.subr.mxu0 0.0
  %873 = vmatpush1.msra.mxu0 %v57
  %874 = vmatprep.subr.mxu0 0.0
  %875 = vmatpush1.msra.mxu0 %v58
  %876 = vmatprep.subr.mxu0 0.0
  %877 = vmatpush1.msra.mxu0 0.0
  %878 = vmatprep.subr.mxu0 0.0
  %879 = vmatpush1.msra.mxu0 0.0
  %880 = vmatprep.subr.mxu0 0.0
  %881 = vmatpush1.msra.mxu0 0.0
  %882 = vmatprep.subr.mxu0 0.0
  %883 = vmatpush1.msra.mxu0 0.0
  %884 = vmatprep.subr.mxu0 0.0
  %885 = vmatpush1.msra.mxu0 0.0
  %886 = vmatprep.subr.mxu0 0.0
  %887 = vmatpush1.msra.mxu0 0.0
  %888 = vmatprep.subr.mxu0 0.0
  %889 = vmatpush1.msra.mxu0 0.0
  %890 = vmatprep.subr.mxu0 0.0
  %891 = vmatpush1.msra.mxu0 0.0
  %892 = vmatprep.subr.mxu0 0.0
  %893 = vmatpush1.msra.mxu0 0.0
  %894 = vmatprep.subr.mxu0 0.0
  %895 = vmatpush1.msra.mxu0 0.0
  %896 = vmatprep.subr.mxu0 0.0
  %897 = vmatpush1.msra.mxu0 0.0
  %898 = vmatprep.subr.mxu0 0.0
  %899 = vmatpush1.msra.mxu0 0.0
  %900 = vmatprep.subr.mxu0 0.0
  %901 = vmatpush1.msra.mxu0 0.0
  %902 = vmatprep.subr.mxu0 0.0
  %903 = vmatpush1.msra.mxu0 0.0
  %904 = vmatprep.subr.mxu0 0.0
  %905 = vmatpush1.msra.mxu0 0.0
  %906 = vmatprep.subr.mxu0 0.0
  %907 = vmatpush1.msra.mxu0 0.0
  %908 = vmatprep.subr.mxu0 0.0
  %909 = vmatpush1.msra.mxu0 0.0
  %910 = vmatprep.subr.mxu0 0.0
  %911 = vmatpush1.msra.mxu0 0.0
  %912 = vmatprep.subr.mxu0 0.0
  %913 = vmatpush1.msra.mxu0 0.0
  %914 = vmatprep.subr.mxu0 0.0
  %915 = vmatpush1.msra.mxu0 0.0
  %916 = vmatprep.subr.mxu0 0.0
  %917 = vmatpush1.msra.mxu0 0.0
  %918 = vmatprep.subr.mxu0 0.0
  %919 = vmatpush1.msra.mxu0 0.0
  %920 = vmatprep.subr.mxu0 0.0
  %921 = vmatpush1.msra.mxu0 0.0
  %922 = vmatprep.subr.mxu0 0.0
  %923 = vmatpush1.msra.mxu0 0.0
  %924 = vmatprep.subr.mxu0 0.0
  %925 = vmatpush1.msra.mxu0 0.0
  %926 = vmatprep.subr.mxu0 0.0
  %927 = vmatpush1.msra.mxu0 0.0
  %928 = vmatprep.subr.mxu0 0.0
  %929 = vmatpush1.msra.mxu0 0.0
  %930 = vmatprep.subr.mxu0 0.0
  %931 = vmatpush1.msra.mxu0 0.0
  %932 = vmatprep.mubr.f32.mxu0 0.0
  %933 = vmatmul.mubr.f32.gmra.mrb[0].mxu0 %v866
  %v934 = vpop.f32.mrb[0].mxu0
  %v935 = vadd.f32 %v71, %v934
  %v936 = vpop.f32.mrb[0].mxu0
  %937 = vdwg.mxu0
  %938 = vst [vmem:[%s12 + $0x8] sm:$0xff] %v935
  %s939 = scalar_lea.vmem %s1, 16
  %v940 = vld [vmem:[%s939] sm:$0xff]
  %vm941 = vcmp.gt.f32.partialorder %v940, 0.0
  %943 = vrot.lane.b32.xlu0 %v858, 32
  %v944 = vpop.permute.xlu0 %943
  %v945 = vsel %vm222, %v944, 0
  %947 = vmatprep.subr.mxu0 0.0
  %948 = vmatpush1.msra.mxu0 %v43
  %949 = vmatprep.subr.mxu0 0.0
  %950 = vmatpush1.msra.mxu0 %v44
  %951 = vmatprep.subr.mxu0 0.0
  %952 = vmatpush1.msra.mxu0 %v45
  %953 = vmatprep.subr.mxu0 0.0
  %954 = vmatpush1.msra.mxu0 %v46
  %955 = vmatprep.subr.mxu0 0.0
  %956 = vmatpush1.msra.mxu0 0.0
  %957 = vmatprep.subr.mxu0 0.0
  %958 = vmatpush1.msra.mxu0 0.0
  %959 = vmatprep.subr.mxu0 0.0
  %960 = vmatpush1.msra.mxu0 0.0
  %961 = vmatprep.subr.mxu0 0.0
  %962 = vmatpush1.msra.mxu0 0.0
  %963 = vmatprep.subr.mxu0 0.0
  %964 = vmatpush1.msra.mxu0 0.0
  %965 = vmatprep.subr.mxu0 0.0
  %966 = vmatpush1.msra.mxu0 0.0
  %967 = vmatprep.subr.mxu0 0.0
  %968 = vmatpush1.msra.mxu0 0.0
  %969 = vmatprep.subr.mxu0 0.0
  %970 = vmatpush1.msra.mxu0 0.0
  %971 = vmatprep.subr.mxu0 0.0
  %972 = vmatpush1.msra.mxu0 0.0
  %973 = vmatprep.subr.mxu0 0.0
  %974 = vmatpush1.msra.mxu0 0.0
  %975 = vmatprep.subr.mxu0 0.0
  %976 = vmatpush1.msra.mxu0 0.0
  %977 = vmatprep.subr.mxu0 0.0
  %978 = vmatpush1.msra.mxu0 0.0
  %979 = vmatprep.subr.mxu0 0.0
  %980 = vmatpush1.msra.mxu0 0.0
  %981 = vmatprep.subr.mxu0 0.0
  %982 = vmatpush1.msra.mxu0 0.0
  %983 = vmatprep.subr.mxu0 0.0
  %984 = vmatpush1.msra.mxu0 0.0
  %985 = vmatprep.subr.mxu0 0.0
  %986 = vmatpush1.msra.mxu0 0.0
  %987 = vmatprep.subr.mxu0 0.0
  %988 = vmatpush1.msra.mxu0 0.0
  %989 = vmatprep.subr.mxu0 0.0
  %990 = vmatpush1.msra.mxu0 0.0
  %991 = vmatprep.subr.mxu0 0.0
  %992 = vmatpush1.msra.mxu0 0.0
  %993 = vmatprep.subr.mxu0 0.0
  %994 = vmatpush1.msra.mxu0 0.0
  %995 = vmatprep.subr.mxu0 0.0
  %996 = vmatpush1.msra.mxu0 0.0
  %997 = vmatprep.subr.mxu0 0.0
  %998 = vmatpush1.msra.mxu0 0.0
  %999 = vmatprep.subr.mxu0 0.0
  %1000 = vmatpush1.msra.mxu0 0.0
  %1001 = vmatprep.subr.mxu0 0.0
  %1002 = vmatpush1.msra.mxu0 0.0
  %1003 = vmatprep.subr.mxu0 0.0
  %1004 = vmatpush1.msra.mxu0 0.0
  %1005 = vmatprep.subr.mxu0 0.0
  %1006 = vmatpush1.msra.mxu0 0.0
  %1007 = vmatprep.subr.mxu0 0.0
  %1008 = vmatpush1.msra.mxu0 0.0
  %1009 = vmatprep.subr.mxu0 0.0
  %1010 = vmatpush1.msra.mxu0 0.0
  %1011 = vmatprep.mubr.f32.mxu0 0.0
  %1012 = vmatmul.mubr.f32.gmra.mrb[0].mxu0 %v945
  %v1013 = vpop.f32.mrb[0].mxu0
  %v1014 = vadd.f32 0.0, %v1013
  %v1015 = vpop.f32.mrb[0].mxu0
  %1016 = vdwg.mxu0
  %v1017 = vadd.f32 %v192, %v1014
  %v1018 = vxor.u32 %v1017, 2147483648
  %v1019 = vmul.f32 %v1018, 1.442695
  %v1020 = vpow.pop %v1019
  %v1021 = vadd.f32 %v1020, 1.0
  %v1022 = vrcp.pop %v1021
  %v1023 = vmul.f32 1.0, %v1022
  %v1024 = vmul.f32 %v1023, 2.0
  %v1025 = vsub.f32 %v1024, 1.0
  %v1026 = vmul.f32 %v1023, %v859
  %1028 = vrot.lane.b32.xlu0 %v1025, 64
  %v1029 = vpop.permute.xlu0 %1028
  %v1031 = vmul.f32 %v1023, %v1029
  %1033 = vrot.lane.b32.xlu0 %v1031, 32
  %v1034 = vpop.permute.xlu0 %1033
  %v1036 = vadd.f32 %v1026, %v1034
  %v1037 = vtanh.pop %v1036
  %1039 = vrot.lane.b32.xlu0 %v1037, 64
  %v1040 = vpop.permute.xlu0 %1039
  %v1042 = vmul.f32 %v1023, %v1040
  %1044 = vrot.lane.b32.xlu0 %v860, 32
  %v1045 = vpop.permute.xlu0 %1044
  %v1046 = vsel %vm222, %v1045, 0
  %1048 = vmatprep.subr.mxu0 0.0
  %1049 = vmatpush1.msra.mxu0 %v51
  %1050 = vmatprep.subr.mxu0 0.0
  %1051 = vmatpush1.msra.mxu0 %v52
  %1052 = vmatprep.subr.mxu0 0.0
  %1053 = vmatpush1.msra.mxu0 %v53
  %1054 = vmatprep.subr.mxu0 0.0
  %1055 = vmatpush1.msra.mxu0 %v54
  %1056 = vmatprep.subr.mxu0 0.0
  %1057 = vmatpush1.msra.mxu0 0.0
  %1058 = vmatprep.subr.mxu0 0.0
  %1059 = vmatpush1.msra.mxu0 0.0
  %1060 = vmatprep.subr.mxu0 0.0
  %1061 = vmatpush1.msra.mxu0 0.0
  %1062 = vmatprep.subr.mxu0 0.0
  %1063 = vmatpush1.msra.mxu0 0.0
  %1064 = vmatprep.subr.mxu0 0.0
  %1065 = vmatpush1.msra.mxu0 0.0
  %1066 = vmatprep.subr.mxu0 0.0
  %1067 = vmatpush1.msra.mxu0 0.0
  %1068 = vmatprep.subr.mxu0 0.0
  %1069 = vmatpush1.msra.mxu0 0.0
  %1070 = vmatprep.subr.mxu0 0.0
  %1071 = vmatpush1.msra.mxu0 0.0
  %1072 = vmatprep.subr.mxu0 0.0
  %1073 = vmatpush1.msra.mxu0 0.0
  %1074 = vmatprep.subr.mxu0 0.0
  %1075 = vmatpush1.msra.mxu0 0.0
  %1076 = vmatprep.subr.mxu0 0.0
  %1077 = vmatpush1.msra.mxu0 0.0
  %1078 = vmatprep.subr.mxu0 0.0
  %1079 = vmatpush1.msra.mxu0 0.0
  %1080 = vmatprep.subr.mxu0 0.0
  %1081 = vmatpush1.msra.mxu0 0.0
  %1082 = vmatprep.subr.mxu0 0.0
  %1083 = vmatpush1.msra.mxu0 0.0
  %1084 = vmatprep.subr.mxu0 0.0
  %1085 = vmatpush1.msra.mxu0 0.0
  %1086 = vmatprep.subr.mxu0 0.0
  %1087 = vmatpush1.msra.mxu0 0.0
  %1088 = vmatprep.subr.mxu0 0.0
  %1089 = vmatpush1.msra.mxu0 0.0
  %1090 = vmatprep.subr.mxu0 0.0
  %1091 = vmatpush1.msra.mxu0 0.0
  %1092 = vmatprep.subr.mxu0 0.0
  %1093 = vmatpush1.msra.mxu0 0.0
  %1094 = vmatprep.subr.mxu0 0.0
  %1095 = vmatpush1.msra.mxu0 0.0
  %1096 = vmatprep.subr.mxu0 0.0
  %1097 = vmatpush1.msra.mxu0 0.0
  %1098 = vmatprep.subr.mxu0 0.0
  %1099 = vmatpush1.msra.mxu0 0.0
  %1100 = vmatprep.subr.mxu0 0.0
  %1101 = vmatpush1.msra.mxu0 0.0
  %1102 = vmatprep.subr.mxu0 0.0
  %1103 = vmatpush1.msra.mxu0 0.0
  %1104 = vmatprep.subr.mxu0 0.0
  %1105 = vmatpush1.msra.mxu0 0.0
  %1106 = vmatprep.subr.mxu0 0.0
  %1107 = vmatpush1.msra.mxu0 0.0
  %1108 = vmatprep.subr.mxu0 0.0
  %1109 = vmatpush1.msra.mxu0 0.0
  %1110 = vmatprep.subr.mxu0 0.0
  %1111 = vmatpush1.msra.mxu0 0.0
  %1112 = vmatprep.mubr.f32.mxu0 0.0
  %1113 = vmatmul.mubr.f32.gmra.mrb[0].mxu0 %v1046
  %v1114 = vpop.f32.mrb[0].mxu0
  %v1115 = vadd.f32 0.0, %v1114
  %v1116 = vpop.f32.mrb[0].mxu0
  %1117 = vdwg.mxu0
  %1119 = vrot.lane.b32.xlu0 %v1042, 32
  %v1120 = vpop.permute.xlu0 %1119
  %v1121 = vsel %vm222, %v1120, 0
  %1123 = vmatprep.subr.mxu0 0.0
  %1124 = vmatpush1.msra.mxu0 %v47
  %1125 = vmatprep.subr.mxu0 0.0
  %1126 = vmatpush1.msra.mxu0 %v48
  %1127 = vmatprep.subr.mxu0 0.0
  %1128 = vmatpush1.msra.mxu0 %v49
  %1129 = vmatprep.subr.mxu0 0.0
  %1130 = vmatpush1.msra.mxu0 %v50
  %1131 = vmatprep.subr.mxu0 0.0
  %1132 = vmatpush1.msra.mxu0 0.0
  %1133 = vmatprep.subr.mxu0 0.0
  %1134 = vmatpush1.msra.mxu0 0.0
  %1135 = vmatprep.subr.mxu0 0.0
  %1136 = vmatpush1.msra.mxu0 0.0
  %1137 = vmatprep.subr.mxu0 0.0
  %1138 = vmatpush1.msra.mxu0 0.0
  %1139 = vmatprep.subr.mxu0 0.0
  %1140 = vmatpush1.msra.mxu0 0.0
  %1141 = vmatprep.subr.mxu0 0.0
  %1142 = vmatpush1.msra.mxu0 0.0
  %1143 = vmatprep.subr.mxu0 0.0
  %1144 = vmatpush1.msra.mxu0 0.0
  %1145 = vmatprep.subr.mxu0 0.0
  %1146 = vmatpush1.msra.mxu0 0.0
  %1147 = vmatprep.subr.mxu0 0.0
  %1148 = vmatpush1.msra.mxu0 0.0
  %1149 = vmatprep.subr.mxu0 0.0
  %1150 = vmatpush1.msra.mxu0 0.0
  %1151 = vmatprep.subr.mxu0 0.0
  %1152 = vmatpush1.msra.mxu0 0.0
  %1153 = vmatprep.subr.mxu0 0.0
  %1154 = vmatpush1.msra.mxu0 0.0
  %1155 = vmatprep.subr.mxu0 0.0
  %1156 = vmatpush1.msra.mxu0 0.0
  %1157 = vmatprep.subr.mxu0 0.0
  %1158 = vmatpush1.msra.mxu0 0.0
  %1159 = vmatprep.subr.mxu0 0.0
  %1160 = vmatpush1.msra.mxu0 0.0
  %1161 = vmatprep.subr.mxu0 0.0
  %1162 = vmatpush1.msra.mxu0 0.0
  %1163 = vmatprep.subr.mxu0 0.0
  %1164 = vmatpush1.msra.mxu0 0.0
  %1165 = vmatprep.subr.mxu0 0.0
  %1166 = vmatpush1.msra.mxu0 0.0
  %1167 = vmatprep.subr.mxu0 0.0
  %1168 = vmatpush1.msra.mxu0 0.0
  %1169 = vmatprep.subr.mxu0 0.0
  %1170 = vmatpush1.msra.mxu0 0.0
  %1171 = vmatprep.subr.mxu0 0.0
  %1172 = vmatpush1.msra.mxu0 0.0
  %1173 = vmatprep.subr.mxu0 0.0
  %1174 = vmatpush1.msra.mxu0 0.0
  %1175 = vmatprep.subr.mxu0 0.0
  %1176 = vmatpush1.msra.mxu0 0.0
  %1177 = vmatprep.subr.mxu0 0.0
  %1178 = vmatpush1.msra.mxu0 0.0
  %1179 = vmatprep.subr.mxu0 0.0
  %1180 = vmatpush1.msra.mxu0 0.0
  %1181 = vmatprep.subr.mxu0 0.0
  %1182 = vmatpush1.msra.mxu0 0.0
  %1183 = vmatprep.subr.mxu0 0.0
  %1184 = vmatpush1.msra.mxu0 0.0
  %1185 = vmatprep.subr.mxu0 0.0
  %1186 = vmatpush1.msra.mxu0 0.0
  %1187 = vmatprep.mubr.f32.mxu0 0.0
  %1188 = vmatmul.mubr.f32.gmra.mrb[0].mxu0 %v1121
  %v1189 = vpop.f32.mrb[0].mxu0
  %v1190 = vadd.f32 %v1115, %v1189
  %v1191 = vpop.f32.mrb[0].mxu0
  %1192 = vdwg.mxu0
  %v1193 = vadd.f32 %v1190, %v64
  %v1194 = vxor.u32 %v1193, 2147483648
  %v1195 = vmul.f32 %v1194, 1.442695
  %v1196 = vpow.pop %v1195
  %v1197 = vadd.f32 %v1196, 1.0
  %v1198 = vrcp.pop %v1197
  %v1199 = vmul.f32 1.0, %v1198
  %v1200 = vmul.f32 %v1199, 2.0
  %v1201 = vsub.f32 %v1200, 1.0
  %v1202 = vmul.f32 %v1199, %v861
  %1204 = vrot.lane.b32.xlu0 %v1201, 64
  %v1205 = vpop.permute.xlu0 %1204
  %v1207 = vmul.f32 %v1199, %v1205
  %1209 = vrot.lane.b32.xlu0 %v1207, 32
  %v1210 = vpop.permute.xlu0 %1209
  %v1212 = vadd.f32 %v1202, %v1210
  %v1213 = vtanh.pop %v1212
  %1215 = vrot.lane.b32.xlu0 %v1213, 64
  %v1216 = vpop.permute.xlu0 %1215
  %v1218 = vmul.f32 %v1199, %v1216
  %v1219 = vsel %vm941, 1, 0
  %1220 = vset.pattern.permute.xlu0 0
  %1221 = vperm.xlu0 %1220, %v1219
  %v1222 = vpop.permute.xlu0 %1221
  %vm1223 = vcmp.eq.s32.totalorder %v1222, 1
  %v1224 = vsel %vm1223, %v1042, %v858
  %v1225 = vsel %vm1223, %v1036, %v859
  %v1226 = vsel %vm1223, %v1218, %v860
  %v1227 = vsel %vm1223, %v1212, %v861
  %v1228 = vsel %vm1223, %v1218, 0.0
  %1230 = vrot.lane.b32.xlu0 %v1228, 32
  %v1231 = vpop.permute.xlu0 %1230
  %v1232 = vsel %vm222, %v1231, 0
  %1234 = vmatprep.subr.mxu0 0.0
  %1235 = vmatpush1.msra.mxu0 %v55
  %1236 = vmatprep.subr.mxu0 0.0
  %1237 = vmatpush1.msra.mxu0 %v56
  %1238 = vmatprep.subr.mxu0 0.0
  %1239 = vmatpush1.msra.mxu0 %v57
  %1240 = vmatprep.subr.mxu0 0.0
  %1241 = vmatpush1.msra.mxu0 %v58
  %1242 = vmatprep.subr.mxu0 0.0
  %1243 = vmatpush1.msra.mxu0 0.0
  %1244 = vmatprep.subr.mxu0 0.0
  %1245 = vmatpush1.msra.mxu0 0.0
  %1246 = vmatprep.subr.mxu0 0.0
  %1247 = vmatpush1.msra.mxu0 0.0
  %1248 = vmatprep.subr.mxu0 0.0
  %1249 = vmatpush1.msra.mxu0 0.0
  %1250 = vmatprep.subr.mxu0 0.0
  %1251 = vmatpush1.msra.mxu0 0.0
  %1252 = vmatprep.subr.mxu0 0.0
  %1253 = vmatpush1.msra.mxu0 0.0
  %1254 = vmatprep.subr.mxu0 0.0
  %1255 = vmatpush1.msra.mxu0 0.0
  %1256 = vmatprep.subr.mxu0 0.0
  %1257 = vmatpush1.msra.mxu0 0.0
  %1258 = vmatprep.subr.mxu0 0.0
  %1259 = vmatpush1.msra.mxu0 0.0
  %1260 = vmatprep.subr.mxu0 0.0
  %1261 = vmatpush1.msra.mxu0 0.0
  %1262 = vmatprep.subr.mxu0 0.0
  %1263 = vmatpush1.msra.mxu0 0.0
  %1264 = vmatprep.subr.mxu0 0.0
  %1265 = vmatpush1.msra.mxu0 0.0
  %1266 = vmatprep.subr.mxu0 0.0
  %1267 = vmatpush1.msra.mxu0 0.0
  %1268 = vmatprep.subr.mxu0 0.0
  %1269 = vmatpush1.msra.mxu0 0.0
  %1270 = vmatprep.subr.mxu0 0.0
  %1271 = vmatpush1.msra.mxu0 0.0
  %1272 = vmatprep.subr.mxu0 0.0
  %1273 = vmatpush1.msra.mxu0 0.0
  %1274 = vmatprep.subr.mxu0 0.0
  %1275 = vmatpush1.msra.mxu0 0.0
  %1276 = vmatprep.subr.mxu0 0.0
  %1277 = vmatpush1.msra.mxu0 0.0
  %1278 = vmatprep.subr.mxu0 0.0
  %1279 = vmatpush1.msra.mxu0 0.0
  %1280 = vmatprep.subr.mxu0 0.0
  %1281 = vmatpush1.msra.mxu0 0.0
  %1282 = vmatprep.subr.mxu0 0.0
  %1283 = vmatpush1.msra.mxu0 0.0
  %1284 = vmatprep.subr.mxu0 0.0
  %1285 = vmatpush1.msra.mxu0 0.0
  %1286 = vmatprep.subr.mxu0 0.0
  %1287 = vmatpush1.msra.mxu0 0.0
  %1288 = vmatprep.subr.mxu0 0.0
  %1289 = vmatpush1.msra.mxu0 0.0
  %1290 = vmatprep.subr.mxu0 0.0
  %1291 = vmatpush1.msra.mxu0 0.0
  %1292 = vmatprep.subr.mxu0 0.0
  %1293 = vmatpush1.msra.mxu0 0.0
  %1294 = vmatprep.subr.mxu0 0.0
  %1295 = vmatpush1.msra.mxu0 0.0
  %1296 = vmatprep.subr.mxu0 0.0
  %1297 = vmatpush1.msra.mxu0 0.0
  %1298 = vmatprep.mubr.f32.mxu0 0.0
  %1299 = vmatmul.mubr.f32.gmra.mrb[0].mxu0 %v1232
  %v1300 = vpop.f32.mrb[0].mxu0
  %v1301 = vadd.f32 %v71, %v1300
  %v1302 = vpop.f32.mrb[0].mxu0
  %1303 = vdwg.mxu0
  %1304 = vst [vmem:[%s12 + $0x10] sm:$0xff] %v1301
  %s1305 = scalar_lea.vmem %s1, 24
  %v1306 = vld [vmem:[%s1305] sm:$0xff]
  %vm1307 = vcmp.gt.f32.partialorder %v1306, 0.0
  %1309 = vrot.lane.b32.xlu0 %v1224, 32
  %v1310 = vpop.permute.xlu0 %1309
  %v1311 = vsel %vm222, %v1310, 0
  %1313 = vmatprep.subr.mxu0 0.0
  %1314 = vmatpush1.msra.mxu0 %v43
  %1315 = vmatprep.subr.mxu0 0.0
  %1316 = vmatpush1.msra.mxu0 %v44
  %1317 = vmatprep.subr.mxu0 0.0
  %1318 = vmatpush1.msra.mxu0 %v45
  %1319 = vmatprep.subr.mxu0 0.0
  %1320 = vmatpush1.msra.mxu0 %v46
  %1321 = vmatprep.subr.mxu0 0.0
  %1322 = vmatpush1.msra.mxu0 0.0
  %1323 = vmatprep.subr.mxu0 0.0
  %1324 = vmatpush1.msra.mxu0 0.0
  %1325 = vmatprep.subr.mxu0 0.0
  %1326 = vmatpush1.msra.mxu0 0.0
  %1327 = vmatprep.subr.mxu0 0.0
  %1328 = vmatpush1.msra.mxu0 0.0
  %1329 = vmatprep.subr.mxu0 0.0
  %1330 = vmatpush1.msra.mxu0 0.0
  %1331 = vmatprep.subr.mxu0 0.0
  %1332 = vmatpush1.msra.mxu0 0.0
  %1333 = vmatprep.subr.mxu0 0.0
  %1334 = vmatpush1.msra.mxu0 0.0
  %1335 = vmatprep.subr.mxu0 0.0
  %1336 = vmatpush1.msra.mxu0 0.0
  %1337 = vmatprep.subr.mxu0 0.0
  %1338 = vmatpush1.msra.mxu0 0.0
  %1339 = vmatprep.subr.mxu0 0.0
  %1340 = vmatpush1.msra.mxu0 0.0
  %1341 = vmatprep.subr.mxu0 0.0
  %1342 = vmatpush1.msra.mxu0 0.0
  %1343 = vmatprep.subr.mxu0 0.0
  %1344 = vmatpush1.msra.mxu0 0.0
  %1345 = vmatprep.subr.mxu0 0.0
  %1346 = vmatpush1.msra.mxu0 0.0
  %1347 = vmatprep.subr.mxu0 0.0
  %1348 = vmatpush1.msra.mxu0 0.0
  %1349 = vmatprep.subr.mxu0 0.0
  %1350 = vmatpush1.msra.mxu0 0.0
  %1351 = vmatprep.subr.mxu0 0.0
  %1352 = vmatpush1.msra.mxu0 0.0
  %1353 = vmatprep.subr.mxu0 0.0
  %1354 = vmatpush1.msra.mxu0 0.0
  %1355 = vmatprep.subr.mxu0 0.0
  %1356 = vmatpush1.msra.mxu0 0.0
  %1357 = vmatprep.subr.mxu0 0.0
  %1358 = vmatpush1.msra.mxu0 0.0
  %1359 = vmatprep.subr.mxu0 0.0
  %1360 = vmatpush1.msra.mxu0 0.0
  %1361 = vmatprep.subr.mxu0 0.0
  %1362 = vmatpush1.msra.mxu0 0.0
  %1363 = vmatprep.subr.mxu0 0.0
  %1364 = vmatpush1.msra.mxu0 0.0
  %1365 = vmatprep.subr.mxu0 0.0
  %1366 = vmatpush1.msra.mxu0 0.0
  %1367 = vmatprep.subr.mxu0 0.0
  %1368 = vmatpush1.msra.mxu0 0.0
  %1369 = vmatprep.subr.mxu0 0.0
  %1370 = vmatpush1.msra.mxu0 0.0
  %1371 = vmatprep.subr.mxu0 0.0
  %1372 = vmatpush1.msra.mxu0 0.0
  %1373 = vmatprep.subr.mxu0 0.0
  %1374 = vmatpush1.msra.mxu0 0.0
  %1375 = vmatprep.subr.mxu0 0.0
  %1376 = vmatpush1.msra.mxu0 0.0
  %1377 = vmatprep.mubr.f32.mxu0 0.0
  %1378 = vmatmul.mubr.f32.gmra.mrb[0].mxu0 %v1311
  %v1379 = vpop.f32.mrb[0].mxu0
  %v1380 = vadd.f32 0.0, %v1379
  %v1381 = vpop.f32.mrb[0].mxu0
  %1382 = vdwg.mxu0
  %v1383 = vadd.f32 %v197, %v1380
  %v1384 = vxor.u32 %v1383, 2147483648
  %v1385 = vmul.f32 %v1384, 1.442695
  %v1386 = vpow.pop %v1385
  %v1387 = vadd.f32 %v1386, 1.0
  %v1388 = vrcp.pop %v1387
  %v1389 = vmul.f32 1.0, %v1388
  %v1390 = vmul.f32 %v1389, 2.0
  %v1391 = vsub.f32 %v1390, 1.0
  %v1392 = vmul.f32 %v1389, %v1225
  %1394 = vrot.lane.b32.xlu0 %v1391, 64
  %v1395 = vpop.permute.xlu0 %1394
  %v1397 = vmul.f32 %v1389, %v1395
  %1399 = vrot.lane.b32.xlu0 %v1397, 32
  %v1400 = vpop.permute.xlu0 %1399
  %v1402 = vadd.f32 %v1392, %v1400
  %v1403 = vtanh.pop %v1402
  %1405 = vrot.lane.b32.xlu0 %v1403, 64
  %v1406 = vpop.permute.xlu0 %1405
  %v1408 = vmul.f32 %v1389, %v1406
  %1410 = vrot.lane.b32.xlu0 %v1226, 32
  %v1411 = vpop.permute.xlu0 %1410
  %v1412 = vsel %vm222, %v1411, 0
  %1414 = vmatprep.subr.mxu0 0.0
  %1415 = vmatpush1.msra.mxu0 %v51
  %1416 = vmatprep.subr.mxu0 0.0
  %1417 = vmatpush1.msra.mxu0 %v52
  %1418 = vmatprep.subr.mxu0 0.0
  %1419 = vmatpush1.msra.mxu0 %v53
  %1420 = vmatprep.subr.mxu0 0.0
  %1421 = vmatpush1.msra.mxu0 %v54
  %1422 = vmatprep.subr.mxu0 0.0
  %1423 = vmatpush1.msra.mxu0 0.0
  %1424 = vmatprep.subr.mxu0 0.0
  %1425 = vmatpush1.msra.mxu0 0.0
  %1426 = vmatprep.subr.mxu0 0.0
  %1427 = vmatpush1.msra.mxu0 0.0
  %1428 = vmatprep.subr.mxu0 0.0
  %1429 = vmatpush1.msra.mxu0 0.0
  %1430 = vmatprep.subr.mxu0 0.0
  %1431 = vmatpush1.msra.mxu0 0.0
  %1432 = vmatprep.subr.mxu0 0.0
  %1433 = vmatpush1.msra.mxu0 0.0
  %1434 = vmatprep.subr.mxu0 0.0
  %1435 = vmatpush1.msra.mxu0 0.0
  %1436 = vmatprep.subr.mxu0 0.0
  %1437 = vmatpush1.msra.mxu0 0.0
  %1438 = vmatprep.subr.mxu0 0.0
  %1439 = vmatpush1.msra.mxu0 0.0
  %1440 = vmatprep.subr.mxu0 0.0
  %1441 = vmatpush1.msra.mxu0 0.0
  %1442 = vmatprep.subr.mxu0 0.0
  %1443 = vmatpush1.msra.mxu0 0.0
  %1444 = vmatprep.subr.mxu0 0.0
  %1445 = vmatpush1.msra.mxu0 0.0
  %1446 = vmatprep.subr.mxu0 0.0
  %1447 = vmatpush1.msra.mxu0 0.0
  %1448 = vmatprep.subr.mxu0 0.0
  %1449 = vmatpush1.msra.mxu0 0.0
  %1450 = vmatprep.subr.mxu0 0.0
  %1451 = vmatpush1.msra.mxu0 0.0
  %1452 = vmatprep.subr.mxu0 0.0
  %1453 = vmatpush1.msra.mxu0 0.0
  %1454 = vmatprep.subr.mxu0 0.0
  %1455 = vmatpush1.msra.mxu0 0.0
  %1456 = vmatprep.subr.mxu0 0.0
  %1457 = vmatpush1.msra.mxu0 0.0
  %1458 = vmatprep.subr.mxu0 0.0
  %1459 = vmatpush1.msra.mxu0 0.0
  %1460 = vmatprep.subr.mxu0 0.0
  %1461 = vmatpush1.msra.mxu0 0.0
  %1462 = vmatprep.subr.mxu0 0.0
  %1463 = vmatpush1.msra.mxu0 0.0
  %1464 = vmatprep.subr.mxu0 0.0
  %1465 = vmatpush1.msra.mxu0 0.0
  %1466 = vmatprep.subr.mxu0 0.0
  %1467 = vmatpush1.msra.mxu0 0.0
  %1468 = vmatprep.subr.mxu0 0.0
  %1469 = vmatpush1.msra.mxu0 0.0
  %1470 = vmatprep.subr.mxu0 0.0
  %1471 = vmatpush1.msra.mxu0 0.0
  %1472 = vmatprep.subr.mxu0 0.0
  %1473 = vmatpush1.msra.mxu0 0.0
  %1474 = vmatprep.subr.mxu0 0.0
  %1475 = vmatpush1.msra.mxu0 0.0
  %1476 = vmatprep.subr.mxu0 0.0
  %1477 = vmatpush1.msra.mxu0 0.0
  %1478 = vmatprep.mubr.f32.mxu0 0.0
  %1479 = vmatmul.mubr.f32.gmra.mrb[0].mxu0 %v1412
  %v1480 = vpop.f32.mrb[0].mxu0
  %v1481 = vadd.f32 0.0, %v1480
  %v1482 = vpop.f32.mrb[0].mxu0
  %1483 = vdwg.mxu0
  %1485 = vrot.lane.b32.xlu0 %v1408, 32
  %v1486 = vpop.permute.xlu0 %1485
  %v1487 = vsel %vm222, %v1486, 0
  %1489 = vmatprep.subr.mxu0 0.0
  %1490 = vmatpush1.msra.mxu0 %v47
  %1491 = vmatprep.subr.mxu0 0.0
  %1492 = vmatpush1.msra.mxu0 %v48
  %1493 = vmatprep.subr.mxu0 0.0
  %1494 = vmatpush1.msra.mxu0 %v49
  %1495 = vmatprep.subr.mxu0 0.0
  %1496 = vmatpush1.msra.mxu0 %v50
  %1497 = vmatprep.subr.mxu0 0.0
  %1498 = vmatpush1.msra.mxu0 0.0
  %1499 = vmatprep.subr.mxu0 0.0
  %1500 = vmatpush1.msra.mxu0 0.0
  %1501 = vmatprep.subr.mxu0 0.0
  %1502 = vmatpush1.msra.mxu0 0.0
  %1503 = vmatprep.subr.mxu0 0.0
  %1504 = vmatpush1.msra.mxu0 0.0
  %1505 = vmatprep.subr.mxu0 0.0
  %1506 = vmatpush1.msra.mxu0 0.0
  %1507 = vmatprep.subr.mxu0 0.0
  %1508 = vmatpush1.msra.mxu0 0.0
  %1509 = vmatprep.subr.mxu0 0.0
  %1510 = vmatpush1.msra.mxu0 0.0
  %1511 = vmatprep.subr.mxu0 0.0
  %1512 = vmatpush1.msra.mxu0 0.0
  %1513 = vmatprep.subr.mxu0 0.0
  %1514 = vmatpush1.msra.mxu0 0.0
  %1515 = vmatprep.subr.mxu0 0.0
  %1516 = vmatpush1.msra.mxu0 0.0
  %1517 = vmatprep.subr.mxu0 0.0
  %1518 = vmatpush1.msra.mxu0 0.0
  %1519 = vmatprep.subr.mxu0 0.0
  %1520 = vmatpush1.msra.mxu0 0.0
  %1521 = vmatprep.subr.mxu0 0.0
  %1522 = vmatpush1.msra.mxu0 0.0
  %1523 = vmatprep.subr.mxu0 0.0
  %1524 = vmatpush1.msra.mxu0 0.0
  %1525 = vmatprep.subr.mxu0 0.0
  %1526 = vmatpush1.msra.mxu0 0.0
  %1527 = vmatprep.subr.mxu0 0.0
  %1528 = vmatpush1.msra.mxu0 0.0
  %1529 = vmatprep.subr.mxu0 0.0
  %1530 = vmatpush1.msra.mxu0 0.0
  %1531 = vmatprep.subr.mxu0 0.0
  %1532 = vmatpush1.msra.mxu0 0.0
  %1533 = vmatprep.subr.mxu0 0.0
  %1534 = vmatpush1.msra.mxu0 0.0
  %1535 = vmatprep.subr.mxu0 0.0
  %1536 = vmatpush1.msra.mxu0 0.0
  %1537 = vmatprep.subr.mxu0 0.0
  %1538 = vmatpush1.msra.mxu0 0.0
  %1539 = vmatprep.subr.mxu0 0.0
  %1540 = vmatpush1.msra.mxu0 0.0
  %1541 = vmatprep.subr.mxu0 0.0
  %1542 = vmatpush1.msra.mxu0 0.0
  %1543 = vmatprep.subr.mxu0 0.0
  %1544 = vmatpush1.msra.mxu0 0.0
  %1545 = vmatprep.subr.mxu0 0.0
  %1546 = vmatpush1.msra.mxu0 0.0
  %1547 = vmatprep.subr.mxu0 0.0
  %1548 = vmatpush1.msra.mxu0 0.0
  %1549 = vmatprep.subr.mxu0 0.0
  %1550 = vmatpush1.msra.mxu0 0.0
  %1551 = vmatprep.subr.mxu0 0.0
  %1552 = vmatpush1.msra.mxu0 0.0
  %1553 = vmatprep.mubr.f32.mxu0 0.0
  %1554 = vmatmul.mubr.f32.gmra.mrb[0].mxu0 %v1487
  %v1555 = vpop.f32.mrb[0].mxu0
  %v1556 = vadd.f32 %v1481, %v1555
  %v1557 = vpop.f32.mrb[0].mxu0
  %1558 = vdwg.mxu0
  %v1559 = vadd.f32 %v1556, %v64
  %v1560 = vxor.u32 %v1559, 2147483648
  %v1561 = vmul.f32 %v1560, 1.442695
  %v1562 = vpow.pop %v1561
  %v1563 = vadd.f32 %v1562, 1.0
  %v1564 = vrcp.pop %v1563
  %v1565 = vmul.f32 1.0, %v1564
  %v1566 = vmul.f32 %v1565, 2.0
  %v1567 = vsub.f32 %v1566, 1.0
  %v1568 = vmul.f32 %v1565, %v1227
  %1570 = vrot.lane.b32.xlu0 %v1567, 64
  %v1571 = vpop.permute.xlu0 %1570
  %v1573 = vmul.f32 %v1565, %v1571
  %1575 = vrot.lane.b32.xlu0 %v1573, 32
  %v1576 = vpop.permute.xlu0 %1575
  %v1578 = vadd.f32 %v1568, %v1576
  %v1579 = vtanh.pop %v1578
  %1581 = vrot.lane.b32.xlu0 %v1579, 64
  %v1582 = vpop.permute.xlu0 %1581
  %v1584 = vmul.f32 %v1565, %v1582
  %v1585 = vsel %vm1307, 1, 0
  %1586 = vset.pattern.permute.xlu0 0
  %1587 = vperm.xlu0 %1586, %v1585
  %v1588 = vpop.permute.xlu0 %1587
  %vm1589 = vcmp.eq.s32.totalorder %v1588, 1
  %v1590 = vsel %vm1589, %v1408, %v1224
  %v1591 = vsel %vm1589, %v1402, %v1225
  %v1592 = vsel %vm1589, %v1584, %v1226
  %v1593 = vsel %vm1589, %v1578, %v1227
  %v1594 = vsel %vm1589, %v1584, 0.0
  %1596 = vrot.lane.b32.xlu0 %v1594, 32
  %v1597 = vpop.permute.xlu0 %1596
  %v1598 = vsel %vm222, %v1597, 0
  %1600 = vmatprep.subr.mxu0 0.0
  %1601 = vmatpush1.msra.mxu0 %v55
  %1602 = vmatprep.subr.mxu0 0.0
  %1603 = vmatpush1.msra.mxu0 %v56
  %1604 = vmatprep.subr.mxu0 0.0
  %1605 = vmatpush1.msra.mxu0 %v57
  %1606 = vmatprep.subr.mxu0 0.0
  %1607 = vmatpush1.msra.mxu0 %v58
  %1608 = vmatprep.subr.mxu0 0.0
  %1609 = vmatpush1.msra.mxu0 0.0
  %1610 = vmatprep.subr.mxu0 0.0
  %1611 = vmatpush1.msra.mxu0 0.0
  %1612 = vmatprep.subr.mxu0 0.0
  %1613 = vmatpush1.msra.mxu0 0.0
  %1614 = vmatprep.subr.mxu0 0.0
  %1615 = vmatpush1.msra.mxu0 0.0
  %1616 = vmatprep.subr.mxu0 0.0
  %1617 = vmatpush1.msra.mxu0 0.0
  %1618 = vmatprep.subr.mxu0 0.0
  %1619 = vmatpush1.msra.mxu0 0.0
  %1620 = vmatprep.subr.mxu0 0.0
  %1621 = vmatpush1.msra.mxu0 0.0
  %1622 = vmatprep.subr.mxu0 0.0
  %1623 = vmatpush1.msra.mxu0 0.0
  %1624 = vmatprep.subr.mxu0 0.0
  %1625 = vmatpush1.msra.mxu0 0.0
  %1626 = vmatprep.subr.mxu0 0.0
  %1627 = vmatpush1.msra.mxu0 0.0
  %1628 = vmatprep.subr.mxu0 0.0
  %1629 = vmatpush1.msra.mxu0 0.0
  %1630 = vmatprep.subr.mxu0 0.0
  %1631 = vmatpush1.msra.mxu0 0.0
  %1632 = vmatprep.subr.mxu0 0.0
  %1633 = vmatpush1.msra.mxu0 0.0
  %1634 = vmatprep.subr.mxu0 0.0
  %1635 = vmatpush1.msra.mxu0 0.0
  %1636 = vmatprep.subr.mxu0 0.0
  %1637 = vmatpush1.msra.mxu0 0.0
  %1638 = vmatprep.subr.mxu0 0.0
  %1639 = vmatpush1.msra.mxu0 0.0
  %1640 = vmatprep.subr.mxu0 0.0
  %1641 = vmatpush1.msra.mxu0 0.0
  %1642 = vmatprep.subr.mxu0 0.0
  %1643 = vmatpush1.msra.mxu0 0.0
  %1644 = vmatprep.subr.mxu0 0.0
  %1645 = vmatpush1.msra.mxu0 0.0
  %1646 = vmatprep.subr.mxu0 0.0
  %1647 = vmatpush1.msra.mxu0 0.0
  %1648 = vmatprep.subr.mxu0 0.0
  %1649 = vmatpush1.msra.mxu0 0.0
  %1650 = vmatprep.subr.mxu0 0.0
  %1651 = vmatpush1.msra.mxu0 0.0
  %1652 = vmatprep.subr.mxu0 0.0
  %1653 = vmatpush1.msra.mxu0 0.0
  %1654 = vmatprep.subr.mxu0 0.0
  %1655 = vmatpush1.msra.mxu0 0.0
  %1656 = vmatprep.subr.mxu0 0.0
  %1657 = vmatpush1.msra.mxu0 0.0
  %1658 = vmatprep.subr.mxu0 0.0
  %1659 = vmatpush1.msra.mxu0 0.0
  %1660 = vmatprep.subr.mxu0 0.0
  %1661 = vmatpush1.msra.mxu0 0.0
  %1662 = vmatprep.subr.mxu0 0.0
  %1663 = vmatpush1.msra.mxu0 0.0
  %1664 = vmatprep.mubr.f32.mxu0 0.0
  %1665 = vmatmul.mubr.f32.gmra.mrb[0].mxu0 %v1598
  %v1666 = vpop.f32.mrb[0].mxu0
  %v1667 = vadd.f32 %v71, %v1666
  %v1668 = vpop.f32.mrb[0].mxu0
  %1669 = vdwg.mxu0
  %1670 = vst [vmem:[%s12 + $0x18] sm:$0xff] %v1667
  %s1671 = scalar_lea.vmem %s1, 32
  %v1672 = vld [vmem:[%s1671] sm:$0xff]
  %vm1673 = vcmp.gt.f32.partialorder %v1672, 0.0
  %1675 = vrot.lane.b32.xlu0 %v1590, 32
  %v1676 = vpop.permute.xlu0 %1675
  %v1677 = vsel %vm222, %v1676, 0
  %1679 = vmatprep.subr.mxu0 0.0
  %1680 = vmatpush1.msra.mxu0 %v43
  %1681 = vmatprep.subr.mxu0 0.0
  %1682 = vmatpush1.msra.mxu0 %v44
  %1683 = vmatprep.subr.mxu0 0.0
  %1684 = vmatpush1.msra.mxu0 %v45
  %1685 = vmatprep.subr.mxu0 0.0
  %1686 = vmatpush1.msra.mxu0 %v46
  %1687 = vmatprep.subr.mxu0 0.0
  %1688 = vmatpush1.msra.mxu0 0.0
  %1689 = vmatprep.subr.mxu0 0.0
  %1690 = vmatpush1.msra.mxu0 0.0
  %1691 = vmatprep.subr.mxu0 0.0
  %1692 = vmatpush1.msra.mxu0 0.0
  %1693 = vmatprep.subr.mxu0 0.0
  %1694 = vmatpush1.msra.mxu0 0.0
  %1695 = vmatprep.subr.mxu0 0.0
  %1696 = vmatpush1.msra.mxu0 0.0
  %1697 = vmatprep.subr.mxu0 0.0
  %1698 = vmatpush1.msra.mxu0 0.0
  %1699 = vmatprep.subr.mxu0 0.0
  %1700 = vmatpush1.msra.mxu0 0.0
  %1701 = vmatprep.subr.mxu0 0.0
  %1702 = vmatpush1.msra.mxu0 0.0
  %1703 = vmatprep.subr.mxu0 0.0
  %1704 = vmatpush1.msra.mxu0 0.0
  %1705 = vmatprep.subr.mxu0 0.0
  %1706 = vmatpush1.msra.mxu0 0.0
  %1707 = vmatprep.subr.mxu0 0.0
  %1708 = vmatpush1.msra.mxu0 0.0
  %1709 = vmatprep.subr.mxu0 0.0
  %1710 = vmatpush1.msra.mxu0 0.0
  %1711 = vmatprep.subr.mxu0 0.0
  %1712 = vmatpush1.msra.mxu0 0.0
  %1713 = vmatprep.subr.mxu0 0.0
  %1714 = vmatpush1.msra.mxu0 0.0
  %1715 = vmatprep.subr.mxu0 0.0
  %1716 = vmatpush1.msra.mxu0 0.0
  %1717 = vmatprep.subr.mxu0 0.0
  %1718 = vmatpush1.msra.mxu0 0.0
  %1719 = vmatprep.subr.mxu0 0.0
  %1720 = vmatpush1.msra.mxu0 0.0
  %1721 = vmatprep.subr.mxu0 0.0
  %1722 = vmatpush1.msra.mxu0 0.0
  %1723 = vmatprep.subr.mxu0 0.0
  %1724 = vmatpush1.msra.mxu0 0.0
  %1725 = vmatprep.subr.mxu0 0.0
  %1726 = vmatpush1.msra.mxu0 0.0
  %1727 = vmatprep.subr.mxu0 0.0
  %1728 = vmatpush1.msra.mxu0 0.0
  %1729 = vmatprep.subr.mxu0 0.0
  %1730 = vmatpush1.msra.mxu0 0.0
  %1731 = vmatprep.subr.mxu0 0.0
  %1732 = vmatpush1.msra.mxu0 0.0
  %1733 = vmatprep.subr.mxu0 0.0
  %1734 = vmatpush1.msra.mxu0 0.0
  %1735 = vmatprep.subr.mxu0 0.0
  %1736 = vmatpush1.msra.mxu0 0.0
  %1737 = vmatprep.subr.mxu0 0.0
  %1738 = vmatpush1.msra.mxu0 0.0
  %1739 = vmatprep.subr.mxu0 0.0
  %1740 = vmatpush1.msra.mxu0 0.0
  %1741 = vmatprep.subr.mxu0 0.0
  %1742 = vmatpush1.msra.mxu0 0.0
  %1743 = vmatprep.mubr.f32.mxu0 0.0
  %1744 = vmatmul.mubr.f32.gmra.mrb[0].mxu0 %v1677
  %v1745 = vpop.f32.mrb[0].mxu0
  %v1746 = vadd.f32 0.0, %v1745
  %v1747 = vpop.f32.mrb[0].mxu0
  %1748 = vdwg.mxu0
  %v1749 = vadd.f32 %v202, %v1746
  %v1750 = vxor.u32 %v1749, 2147483648
  %v1751 = vmul.f32 %v1750, 1.442695
  %v1752 = vpow.pop %v1751
  %v1753 = vadd.f32 %v1752, 1.0
  %v1754 = vrcp.pop %v1753
  %v1755 = vmul.f32 1.0, %v1754
  %v1756 = vmul.f32 %v1755, 2.0
  %v1757 = vsub.f32 %v1756, 1.0
  %v1758 = vmul.f32 %v1755, %v1591
  %1760 = vrot.lane.b32.xlu0 %v1757, 64
  %v1761 = vpop.permute.xlu0 %1760
  %v1763 = vmul.f32 %v1755, %v1761
  %1765 = vrot.lane.b32.xlu0 %v1763, 32
  %v1766 = vpop.permute.xlu0 %1765
  %v1768 = vadd.f32 %v1758, %v1766
  %v1769 = vtanh.pop %v1768
  %1771 = vrot.lane.b32.xlu0 %v1769, 64
  %v1772 = vpop.permute.xlu0 %1771
  %v1774 = vmul.f32 %v1755, %v1772
  %1776 = vrot.lane.b32.xlu0 %v1592, 32
  %v1777 = vpop.permute.xlu0 %1776
  %v1778 = vsel %vm222, %v1777, 0
  %1780 = vmatprep.subr.mxu0 0.0
  %1781 = vmatpush1.msra.mxu0 %v51
  %1782 = vmatprep.subr.mxu0 0.0
  %1783 = vmatpush1.msra.mxu0 %v52
  %1784 = vmatprep.subr.mxu0 0.0
  %1785 = vmatpush1.msra.mxu0 %v53
  %1786 = vmatprep.subr.mxu0 0.0
  %1787 = vmatpush1.msra.mxu0 %v54
  %1788 = vmatprep.subr.mxu0 0.0
  %1789 = vmatpush1.msra.mxu0 0.0
  %1790 = vmatprep.subr.mxu0 0.0
  %1791 = vmatpush1.msra.mxu0 0.0
  %1792 = vmatprep.subr.mxu0 0.0
  %1793 = vmatpush1.msra.mxu0 0.0
  %1794 = vmatprep.subr.mxu0 0.0
  %1795 = vmatpush1.msra.mxu0 0.0
  %1796 = vmatprep.subr.mxu0 0.0
  %1797 = vmatpush1.msra.mxu0 0.0
  %1798 = vmatprep.subr.mxu0 0.0
  %1799 = vmatpush1.msra.mxu0 0.0
  %1800 = vmatprep.subr.mxu0 0.0
  %1801 = vmatpush1.msra.mxu0 0.0
  %1802 = vmatprep.subr.mxu0 0.0
  %1803 = vmatpush1.msra.mxu0 0.0
  %1804 = vmatprep.subr.mxu0 0.0
  %1805 = vmatpush1.msra.mxu0 0.0
  %1806 = vmatprep.subr.mxu0 0.0
  %1807 = vmatpush1.msra.mxu0 0.0
  %1808 = vmatprep.subr.mxu0 0.0
  %1809 = vmatpush1.msra.mxu0 0.0
  %1810 = vmatprep.subr.mxu0 0.0
  %1811 = vmatpush1.msra.mxu0 0.0
  %1812 = vmatprep.subr.mxu0 0.0
  %1813 = vmatpush1.msra.mxu0 0.0
  %1814 = vmatprep.subr.mxu0 0.0
  %1815 = vmatpush1.msra.mxu0 0.0
  %1816 = vmatprep.subr.mxu0 0.0
  %1817 = vmatpush1.msra.mxu0 0.0
  %1818 = vmatprep.subr.mxu0 0.0
  %1819 = vmatpush1.msra.mxu0 0.0
  %1820 = vmatprep.subr.mxu0 0.0
  %1821 = vmatpush1.msra.mxu0 0.0
  %1822 = vmatprep.subr.mxu0 0.0
  %1823 = vmatpush1.msra.mxu0 0.0
  %1824 = vmatprep.subr.mxu0 0.0
  %1825 = vmatpush1.msra.mxu0 0.0
  %1826 = vmatprep.subr.mxu0 0.0
  %1827 = vmatpush1.msra.mxu0 0.0
  %1828 = vmatprep.subr.mxu0 0.0
  %1829 = vmatpush1.msra.mxu0 0.0
  %1830 = vmatprep.subr.mxu0 0.0
  %1831 = vmatpush1.msra.mxu0 0.0
  %1832 = vmatprep.subr.mxu0 0.0
  %1833 = vmatpush1.msra.mxu0 0.0
  %1834 = vmatprep.subr.mxu0 0.0
  %1835 = vmatpush1.msra.mxu0 0.0
  %1836 = vmatprep.subr.mxu0 0.0
  %1837 = vmatpush1.msra.mxu0 0.0
  %1838 = vmatprep.subr.mxu0 0.0
  %1839 = vmatpush1.msra.mxu0 0.0
  %1840 = vmatprep.subr.mxu0 0.0
  %1841 = vmatpush1.msra.mxu0 0.0
  %1842 = vmatprep.subr.mxu0 0.0
  %1843 = vmatpush1.msra.mxu0 0.0
  %1844 = vmatprep.mubr.f32.mxu0 0.0
  %1845 = vmatmul.mubr.f32.gmra.mrb[0].mxu0 %v1778
  %v1846 = vpop.f32.mrb[0].mxu0
  %v1847 = vadd.f32 0.0, %v1846
  %v1848 = vpop.f32.mrb[0].mxu0
  %1849 = vdwg.mxu0
  %1851 = vrot.lane.b32.xlu0 %v1774, 32
  %v1852 = vpop.permute.xlu0 %1851
  %v1853 = vsel %vm222, %v1852, 0
  %1855 = vmatprep.subr.mxu0 0.0
  %1856 = vmatpush1.msra.mxu0 %v47
  %1857 = vmatprep.subr.mxu0 0.0
  %1858 = vmatpush1.msra.mxu0 %v48
  %1859 = vmatprep.subr.mxu0 0.0
  %1860 = vmatpush1.msra.mxu0 %v49
  %1861 = vmatprep.subr.mxu0 0.0
  %1862 = vmatpush1.msra.mxu0 %v50
  %1863 = vmatprep.subr.mxu0 0.0
  %1864 = vmatpush1.msra.mxu0 0.0
  %1865 = vmatprep.subr.mxu0 0.0
  %1866 = vmatpush1.msra.mxu0 0.0
  %1867 = vmatprep.subr.mxu0 0.0
  %1868 = vmatpush1.msra.mxu0 0.0
  %1869 = vmatprep.subr.mxu0 0.0
  %1870 = vmatpush1.msra.mxu0 0.0
  %1871 = vmatprep.subr.mxu0 0.0
  %1872 = vmatpush1.msra.mxu0 0.0
  %1873 = vmatprep.subr.mxu0 0.0
  %1874 = vmatpush1.msra.mxu0 0.0
  %1875 = vmatprep.subr.mxu0 0.0
  %1876 = vmatpush1.msra.mxu0 0.0
  %1877 = vmatprep.subr.mxu0 0.0
  %1878 = vmatpush1.msra.mxu0 0.0
  %1879 = vmatprep.subr.mxu0 0.0
  %1880 = vmatpush1.msra.mxu0 0.0
  %1881 = vmatprep.subr.mxu0 0.0
  %1882 = vmatpush1.msra.mxu0 0.0
  %1883 = vmatprep.subr.mxu0 0.0
  %1884 = vmatpush1.msra.mxu0 0.0
  %1885 = vmatprep.subr.mxu0 0.0
  %1886 = vmatpush1.msra.mxu0 0.0
  %1887 = vmatprep.subr.mxu0 0.0
  %1888 = vmatpush1.msra.mxu0 0.0
  %1889 = vmatprep.subr.mxu0 0.0
  %1890 = vmatpush1.msra.mxu0 0.0
  %1891 = vmatprep.subr.mxu0 0.0
  %1892 = vmatpush1.msra.mxu0 0.0
  %1893 = vmatprep.subr.mxu0 0.0
  %1894 = vmatpush1.msra.mxu0 0.0
  %1895 = vmatprep.subr.mxu0 0.0
  %1896 = vmatpush1.msra.mxu0 0.0
  %1897 = vmatprep.subr.mxu0 0.0
  %1898 = vmatpush1.msra.mxu0 0.0
  %1899 = vmatprep.subr.mxu0 0.0
  %1900 = vmatpush1.msra.mxu0 0.0
  %1901 = vmatprep.subr.mxu0 0.0
  %1902 = vmatpush1.msra.mxu0 0.0
  %1903 = vmatprep.subr.mxu0 0.0
  %1904 = vmatpush1.msra.mxu0 0.0
  %1905 = vmatprep.subr.mxu0 0.0
  %1906 = vmatpush1.msra.mxu0 0.0
  %1907 = vmatprep.subr.mxu0 0.0
  %1908 = vmatpush1.msra.mxu0 0.0
  %1909 = vmatprep.subr.mxu0 0.0
  %1910 = vmatpush1.msra.mxu0 0.0
  %1911 = vmatprep.subr.mxu0 0.0
  %1912 = vmatpush1.msra.mxu0 0.0
  %1913 = vmatprep.subr.mxu0 0.0
  %1914 = vmatpush1.msra.mxu0 0.0
  %1915 = vmatprep.subr.mxu0 0.0
  %1916 = vmatpush1.msra.mxu0 0.0
  %1917 = vmatprep.subr.mxu0 0.0
  %1918 = vmatpush1.msra.mxu0 0.0
  %1919 = vmatprep.mubr.f32.mxu0 0.0
  %1920 = vmatmul.mubr.f32.gmra.mrb[0].mxu0 %v1853
  %v1921 = vpop.f32.mrb[0].mxu0
  %v1922 = vadd.f32 %v1847, %v1921
  %v1923 = vpop.f32.mrb[0].mxu0
  %1924 = vdwg.mxu0
  %v1925 = vadd.f32 %v1922, %v64
  %v1926 = vxor.u32 %v1925, 2147483648
  %v1927 = vmul.f32 %v1926, 1.442695
  %v1928 = vpow.pop %v1927
  %v1929 = vadd.f32 %v1928, 1.0
  %v1930 = vrcp.pop %v1929
  %v1931 = vmul.f32 1.0, %v1930
  %v1932 = vmul.f32 %v1931, 2.0
  %v1933 = vsub.f32 %v1932, 1.0
  %v1934 = vmul.f32 %v1931, %v1593
  %1936 = vrot.lane.b32.xlu0 %v1933, 64
  %v1937 = vpop.permute.xlu0 %1936
  %v1939 = vmul.f32 %v1931, %v1937
  %1941 = vrot.lane.b32.xlu0 %v1939, 32
  %v1942 = vpop.permute.xlu0 %1941
  %v1944 = vadd.f32 %v1934, %v1942
  %v1945 = vtanh.pop %v1944
  %1947 = vrot.lane.b32.xlu0 %v1945, 64
  %v1948 = vpop.permute.xlu0 %1947
  %v1950 = vmul.f32 %v1931, %v1948
  %v1951 = vsel %vm1673, 1, 0
  %1952 = vset.pattern.permute.xlu0 0
  %1953 = vperm.xlu0 %1952, %v1951
  %v1954 = vpop.permute.xlu0 %1953
  %vm1955 = vcmp.eq.s32.totalorder %v1954, 1
  %v1956 = vsel %vm1955, %v1774, %v1590
  %v1957 = vsel %vm1955, %v1768, %v1591
  %v1958 = vsel %vm1955, %v1950, %v1592
  %v1959 = vsel %vm1955, %v1944, %v1593
  %v1960 = vsel %vm1955, %v1950, 0.0
  %1962 = vrot.lane.b32.xlu0 %v1960, 32
  %v1963 = vpop.permute.xlu0 %1962
  %v1964 = vsel %vm222, %v1963, 0
  %1966 = vmatprep.subr.mxu0 0.0
  %1967 = vmatpush1.msra.mxu0 %v55
  %1968 = vmatprep.subr.mxu0 0.0
  %1969 = vmatpush1.msra.mxu0 %v56
  %1970 = vmatprep.subr.mxu0 0.0
  %1971 = vmatpush1.msra.mxu0 %v57
  %1972 = vmatprep.subr.mxu0 0.0
  %1973 = vmatpush1.msra.mxu0 %v58
  %1974 = vmatprep.subr.mxu0 0.0
  %1975 = vmatpush1.msra.mxu0 0.0
  %1976 = vmatprep.subr.mxu0 0.0
  %1977 = vmatpush1.msra.mxu0 0.0
  %1978 = vmatprep.subr.mxu0 0.0
  %1979 = vmatpush1.msra.mxu0 0.0
  %1980 = vmatprep.subr.mxu0 0.0
  %1981 = vmatpush1.msra.mxu0 0.0
  %1982 = vmatprep.subr.mxu0 0.0
  %1983 = vmatpush1.msra.mxu0 0.0
  %1984 = vmatprep.subr.mxu0 0.0
  %1985 = vmatpush1.msra.mxu0 0.0
  %1986 = vmatprep.subr.mxu0 0.0
  %1987 = vmatpush1.msra.mxu0 0.0
  %1988 = vmatprep.subr.mxu0 0.0
  %1989 = vmatpush1.msra.mxu0 0.0
  %1990 = vmatprep.subr.mxu0 0.0
  %1991 = vmatpush1.msra.mxu0 0.0
  %1992 = vmatprep.subr.mxu0 0.0
  %1993 = vmatpush1.msra.mxu0 0.0
  %1994 = vmatprep.subr.mxu0 0.0
  %1995 = vmatpush1.msra.mxu0 0.0
  %1996 = vmatprep.subr.mxu0 0.0
  %1997 = vmatpush1.msra.mxu0 0.0
  %1998 = vmatprep.subr.mxu0 0.0
  %1999 = vmatpush1.msra.mxu0 0.0
  %2000 = vmatprep.subr.mxu0 0.0
  %2001 = vmatpush1.msra.mxu0 0.0
  %2002 = vmatprep.subr.mxu0 0.0
  %2003 = vmatpush1.msra.mxu0 0.0
  %2004 = vmatprep.subr.mxu0 0.0
  %2005 = vmatpush1.msra.mxu0 0.0
  %2006 = vmatprep.subr.mxu0 0.0
  %2007 = vmatpush1.msra.mxu0 0.0
  %2008 = vmatprep.subr.mxu0 0.0
  %2009 = vmatpush1.msra.mxu0 0.0
  %2010 = vmatprep.subr.mxu0 0.0
  %2011 = vmatpush1.msra.mxu0 0.0
  %2012 = vmatprep.subr.mxu0 0.0
  %2013 = vmatpush1.msra.mxu0 0.0
  %2014 = vmatprep.subr.mxu0 0.0
  %2015 = vmatpush1.msra.mxu0 0.0
  %2016 = vmatprep.subr.mxu0 0.0
  %2017 = vmatpush1.msra.mxu0 0.0
  %2018 = vmatprep.subr.mxu0 0.0
  %2019 = vmatpush1.msra.mxu0 0.0
  %2020 = vmatprep.subr.mxu0 0.0
  %2021 = vmatpush1.msra.mxu0 0.0
  %2022 = vmatprep.subr.mxu0 0.0
  %2023 = vmatpush1.msra.mxu0 0.0
  %2024 = vmatprep.subr.mxu0 0.0
  %2025 = vmatpush1.msra.mxu0 0.0
  %2026 = vmatprep.subr.mxu0 0.0
  %2027 = vmatpush1.msra.mxu0 0.0
  %2028 = vmatprep.subr.mxu0 0.0
  %2029 = vmatpush1.msra.mxu0 0.0
  %2030 = vmatprep.mubr.f32.mxu0 0.0
  %2031 = vmatmul.mubr.f32.gmra.mrb[0].mxu0 %v1964
  %v2032 = vpop.f32.mrb[0].mxu0
  %v2033 = vadd.f32 %v71, %v2032
  %v2034 = vpop.f32.mrb[0].mxu0
  %2035 = vdwg.mxu0
  %2036 = vst [vmem:[%s12 + $0x20] sm:$0xff] %v2033
  %s2037 = scalar_lea.vmem %s1, 40
  %v2038 = vld [vmem:[%s2037] sm:$0xff]
  %vm2039 = vcmp.gt.f32.partialorder %v2038, 0.0
  %2041 = vrot.lane.b32.xlu0 %v1956, 32
  %v2042 = vpop.permute.xlu0 %2041
  %v2043 = vsel %vm222, %v2042, 0
  %2045 = vmatprep.subr.mxu0 0.0
  %2046 = vmatpush1.msra.mxu0 %v43
  %2047 = vmatprep.subr.mxu0 0.0
  %2048 = vmatpush1.msra.mxu0 %v44
  %2049 = vmatprep.subr.mxu0 0.0
  %2050 = vmatpush1.msra.mxu0 %v45
  %2051 = vmatprep.subr.mxu0 0.0
  %2052 = vmatpush1.msra.mxu0 %v46
  %2053 = vmatprep.subr.mxu0 0.0
  %2054 = vmatpush1.msra.mxu0 0.0
  %2055 = vmatprep.subr.mxu0 0.0
  %2056 = vmatpush1.msra.mxu0 0.0
  %2057 = vmatprep.subr.mxu0 0.0
  %2058 = vmatpush1.msra.mxu0 0.0
  %2059 = vmatprep.subr.mxu0 0.0
  %2060 = vmatpush1.msra.mxu0 0.0
  %2061 = vmatprep.subr.mxu0 0.0
  %2062 = vmatpush1.msra.mxu0 0.0
  %2063 = vmatprep.subr.mxu0 0.0
  %2064 = vmatpush1.msra.mxu0 0.0
  %2065 = vmatprep.subr.mxu0 0.0
  %2066 = vmatpush1.msra.mxu0 0.0
  %2067 = vmatprep.subr.mxu0 0.0
  %2068 = vmatpush1.msra.mxu0 0.0
  %2069 = vmatprep.subr.mxu0 0.0
  %2070 = vmatpush1.msra.mxu0 0.0
  %2071 = vmatprep.subr.mxu0 0.0
  %2072 = vmatpush1.msra.mxu0 0.0
  %2073 = vmatprep.subr.mxu0 0.0
  %2074 = vmatpush1.msra.mxu0 0.0
  %2075 = vmatprep.subr.mxu0 0.0
  %2076 = vmatpush1.msra.mxu0 0.0
  %2077 = vmatprep.subr.mxu0 0.0
  %2078 = vmatpush1.msra.mxu0 0.0
  %2079 = vmatprep.subr.mxu0 0.0
  %2080 = vmatpush1.msra.mxu0 0.0
  %2081 = vmatprep.subr.mxu0 0.0
  %2082 = vmatpush1.msra.mxu0 0.0
  %2083 = vmatprep.subr.mxu0 0.0
  %2084 = vmatpush1.msra.mxu0 0.0
  %2085 = vmatprep.subr.mxu0 0.0
  %2086 = vmatpush1.msra.mxu0 0.0
  %2087 = vmatprep.subr.mxu0 0.0
  %2088 = vmatpush1.msra.mxu0 0.0
  %2089 = vmatprep.subr.mxu0 0.0
  %2090 = vmatpush1.msra.mxu0 0.0
  %2091 = vmatprep.subr.mxu0 0.0
  %2092 = vmatpush1.msra.mxu0 0.0
  %2093 = vmatprep.subr.mxu0 0.0
  %2094 = vmatpush1.msra.mxu0 0.0
  %2095 = vmatprep.subr.mxu0 0.0
  %2096 = vmatpush1.msra.mxu0 0.0
  %2097 = vmatprep.subr.mxu0 0.0
  %2098 = vmatpush1.msra.mxu0 0.0
  %2099 = vmatprep.subr.mxu0 0.0
  %2100 = vmatpush1.msra.mxu0 0.0
  %2101 = vmatprep.subr.mxu0 0.0
  %2102 = vmatpush1.msra.mxu0 0.0
  %2103 = vmatprep.subr.mxu0 0.0
  %2104 = vmatpush1.msra.mxu0 0.0
  %2105 = vmatprep.subr.mxu0 0.0
  %2106 = vmatpush1.msra.mxu0 0.0
  %2107 = vmatprep.subr.mxu0 0.0
  %2108 = vmatpush1.msra.mxu0 0.0
  %2109 = vmatprep.mubr.f32.mxu0 0.0
  %2110 = vmatmul.mubr.f32.gmra.mrb[0].mxu0 %v2043
  %v2111 = vpop.f32.mrb[0].mxu0
  %v2112 = vadd.f32 0.0, %v2111
  %v2113 = vpop.f32.mrb[0].mxu0
  %2114 = vdwg.mxu0
  %v2115 = vadd.f32 %v207, %v2112
  %v2116 = vxor.u32 %v2115, 2147483648
  %v2117 = vmul.f32 %v2116, 1.442695
  %v2118 = vpow.pop %v2117
  %v2119 = vadd.f32 %v2118, 1.0
  %v2120 = vrcp.pop %v2119
  %v2121 = vmul.f32 1.0, %v2120
  %v2122 = vmul.f32 %v2121, 2.0
  %v2123 = vsub.f32 %v2122, 1.0
  %v2124 = vmul.f32 %v2121, %v1957
  %2126 = vrot.lane.b32.xlu0 %v2123, 64
  %v2127 = vpop.permute.xlu0 %2126
  %v2129 = vmul.f32 %v2121, %v2127
  %2131 = vrot.lane.b32.xlu0 %v2129, 32
  %v2132 = vpop.permute.xlu0 %2131
  %v2134 = vadd.f32 %v2124, %v2132
  %v2135 = vtanh.pop %v2134
  %2137 = vrot.lane.b32.xlu0 %v2135, 64
  %v2138 = vpop.permute.xlu0 %2137
  %v2140 = vmul.f32 %v2121, %v2138
  %2142 = vrot.lane.b32.xlu0 %v1958, 32
  %v2143 = vpop.permute.xlu0 %2142
  %v2144 = vsel %vm222, %v2143, 0
  %2146 = vmatprep.subr.mxu0 0.0
  %2147 = vmatpush1.msra.mxu0 %v51
  %2148 = vmatprep.subr.mxu0 0.0
  %2149 = vmatpush1.msra.mxu0 %v52
  %2150 = vmatprep.subr.mxu0 0.0
  %2151 = vmatpush1.msra.mxu0 %v53
  %2152 = vmatprep.subr.mxu0 0.0
  %2153 = vmatpush1.msra.mxu0 %v54
  %2154 = vmatprep.subr.mxu0 0.0
  %2155 = vmatpush1.msra.mxu0 0.0
  %2156 = vmatprep.subr.mxu0 0.0
  %2157 = vmatpush1.msra.mxu0 0.0
  %2158 = vmatprep.subr.mxu0 0.0
  %2159 = vmatpush1.msra.mxu0 0.0
  %2160 = vmatprep.subr.mxu0 0.0
  %2161 = vmatpush1.msra.mxu0 0.0
  %2162 = vmatprep.subr.mxu0 0.0
  %2163 = vmatpush1.msra.mxu0 0.0
  %2164 = vmatprep.subr.mxu0 0.0
  %2165 = vmatpush1.msra.mxu0 0.0
  %2166 = vmatprep.subr.mxu0 0.0
  %2167 = vmatpush1.msra.mxu0 0.0
  %2168 = vmatprep.subr.mxu0 0.0
  %2169 = vmatpush1.msra.mxu0 0.0
  %2170 = vmatprep.subr.mxu0 0.0
  %2171 = vmatpush1.msra.mxu0 0.0
  %2172 = vmatprep.subr.mxu0 0.0
  %2173 = vmatpush1.msra.mxu0 0.0
  %2174 = vmatprep.subr.mxu0 0.0
  %2175 = vmatpush1.msra.mxu0 0.0
  %2176 = vmatprep.subr.mxu0 0.0
  %2177 = vmatpush1.msra.mxu0 0.0
  %2178 = vmatprep.subr.mxu0 0.0
  %2179 = vmatpush1.msra.mxu0 0.0
  %2180 = vmatprep.subr.mxu0 0.0
  %2181 = vmatpush1.msra.mxu0 0.0
  %2182 = vmatprep.subr.mxu0 0.0
  %2183 = vmatpush1.msra.mxu0 0.0
  %2184 = vmatprep.subr.mxu0 0.0
  %2185 = vmatpush1.msra.mxu0 0.0
  %2186 = vmatprep.subr.mxu0 0.0
  %2187 = vmatpush1.msra.mxu0 0.0
  %2188 = vmatprep.subr.mxu0 0.0
  %2189 = vmatpush1.msra.mxu0 0.0
  %2190 = vmatprep.subr.mxu0 0.0
  %2191 = vmatpush1.msra.mxu0 0.0
  %2192 = vmatprep.subr.mxu0 0.0
  %2193 = vmatpush1.msra.mxu0 0.0
  %2194 = vmatprep.subr.mxu0 0.0
  %2195 = vmatpush1.msra.mxu0 0.0
  %2196 = vmatprep.subr.mxu0 0.0
  %2197 = vmatpush1.msra.mxu0 0.0
  %2198 = vmatprep.subr.mxu0 0.0
  %2199 = vmatpush1.msra.mxu0 0.0
  %2200 = vmatprep.subr.mxu0 0.0
  %2201 = vmatpush1.msra.mxu0 0.0
  %2202 = vmatprep.subr.mxu0 0.0
  %2203 = vmatpush1.msra.mxu0 0.0
  %2204 = vmatprep.subr.mxu0 0.0
  %2205 = vmatpush1.msra.mxu0 0.0
  %2206 = vmatprep.subr.mxu0 0.0
  %2207 = vmatpush1.msra.mxu0 0.0
  %2208 = vmatprep.subr.mxu0 0.0
  %2209 = vmatpush1.msra.mxu0 0.0
  %2210 = vmatprep.mubr.f32.mxu0 0.0
  %2211 = vmatmul.mubr.f32.gmra.mrb[0].mxu0 %v2144
  %v2212 = vpop.f32.mrb[0].mxu0
  %v2213 = vadd.f32 0.0, %v2212
  %v2214 = vpop.f32.mrb[0].mxu0
  %2215 = vdwg.mxu0
  %2217 = vrot.lane.b32.xlu0 %v2140, 32
  %v2218 = vpop.permute.xlu0 %2217
  %v2219 = vsel %vm222, %v2218, 0
  %2221 = vmatprep.subr.mxu0 0.0
  %2222 = vmatpush1.msra.mxu0 %v47
  %2223 = vmatprep.subr.mxu0 0.0
  %2224 = vmatpush1.msra.mxu0 %v48
  %2225 = vmatprep.subr.mxu0 0.0
  %2226 = vmatpush1.msra.mxu0 %v49
  %2227 = vmatprep.subr.mxu0 0.0
  %2228 = vmatpush1.msra.mxu0 %v50
  %2229 = vmatprep.subr.mxu0 0.0
  %2230 = vmatpush1.msra.mxu0 0.0
  %2231 = vmatprep.subr.mxu0 0.0
  %2232 = vmatpush1.msra.mxu0 0.0
  %2233 = vmatprep.subr.mxu0 0.0
  %2234 = vmatpush1.msra.mxu0 0.0
  %2235 = vmatprep.subr.mxu0 0.0
  %2236 = vmatpush1.msra.mxu0 0.0
  %2237 = vmatprep.subr.mxu0 0.0
  %2238 = vmatpush1.msra.mxu0 0.0
  %2239 = vmatprep.subr.mxu0 0.0
  %2240 = vmatpush1.msra.mxu0 0.0
  %2241 = vmatprep.subr.mxu0 0.0
  %2242 = vmatpush1.msra.mxu0 0.0
  %2243 = vmatprep.subr.mxu0 0.0
  %2244 = vmatpush1.msra.mxu0 0.0
  %2245 = vmatprep.subr.mxu0 0.0
  %2246 = vmatpush1.msra.mxu0 0.0
  %2247 = vmatprep.subr.mxu0 0.0
  %2248 = vmatpush1.msra.mxu0 0.0
  %2249 = vmatprep.subr.mxu0 0.0
  %2250 = vmatpush1.msra.mxu0 0.0
  %2251 = vmatprep.subr.mxu0 0.0
  %2252 = vmatpush1.msra.mxu0 0.0
  %2253 = vmatprep.subr.mxu0 0.0
  %2254 = vmatpush1.msra.mxu0 0.0
  %2255 = vmatprep.subr.mxu0 0.0
  %2256 = vmatpush1.msra.mxu0 0.0
  %2257 = vmatprep.subr.mxu0 0.0
  %2258 = vmatpush1.msra.mxu0 0.0
  %2259 = vmatprep.subr.mxu0 0.0
  %2260 = vmatpush1.msra.mxu0 0.0
  %2261 = vmatprep.subr.mxu0 0.0
  %2262 = vmatpush1.msra.mxu0 0.0
  %2263 = vmatprep.subr.mxu0 0.0
  %2264 = vmatpush1.msra.mxu0 0.0
  %2265 = vmatprep.subr.mxu0 0.0
  %2266 = vmatpush1.msra.mxu0 0.0
  %2267 = vmatprep.subr.mxu0 0.0
  %2268 = vmatpush1.msra.mxu0 0.0
  %2269 = vmatprep.subr.mxu0 0.0
  %2270 = vmatpush1.msra.mxu0 0.0
  %2271 = vmatprep.subr.mxu0 0.0
  %2272 = vmatpush1.msra.mxu0 0.0
  %2273 = vmatprep.subr.mxu0 0.0
  %2274 = vmatpush1.msra.mxu0 0.0
  %2275 = vmatprep.subr.mxu0 0.0
  %2276 = vmatpush1.msra.mxu0 0.0
  %2277 = vmatprep.subr.mxu0 0.0
  %2278 = vmatpush1.msra.mxu0 0.0
  %2279 = vmatprep.subr.mxu0 0.0
  %2280 = vmatpush1.msra.mxu0 0.0
  %2281 = vmatprep.subr.mxu0 0.0
  %2282 = vmatpush1.msra.mxu0 0.0
  %2283 = vmatprep.subr.mxu0 0.0
  %2284 = vmatpush1.msra.mxu0 0.0
  %2285 = vmatprep.mubr.f32.mxu0 0.0
  %2286 = vmatmul.mubr.f32.gmra.mrb[0].mxu0 %v2219
  %v2287 = vpop.f32.mrb[0].mxu0
  %v2288 = vadd.f32 %v2213, %v2287
  %v2289 = vpop.f32.mrb[0].mxu0
  %2290 = vdwg.mxu0
  %v2291 = vadd.f32 %v2288, %v64
  %v2292 = vxor.u32 %v2291, 2147483648
  %v2293 = vmul.f32 %v2292, 1.442695
  %v2294 = vpow.pop %v2293
  %v2295 = vadd.f32 %v2294, 1.0
  %v2296 = vrcp.pop %v2295
  %v2297 = vmul.f32 1.0, %v2296
  %v2298 = vmul.f32 %v2297, 2.0
  %v2299 = vsub.f32 %v2298, 1.0
  %v2300 = vmul.f32 %v2297, %v1959
  %2302 = vrot.lane.b32.xlu0 %v2299, 64
  %v2303 = vpop.permute.xlu0 %2302
  %v2305 = vmul.f32 %v2297, %v2303
  %2307 = vrot.lane.b32.xlu0 %v2305, 32
  %v2308 = vpop.permute.xlu0 %2307
  %v2310 = vadd.f32 %v2300, %v2308
  %v2311 = vtanh.pop %v2310
  %2313 = vrot.lane.b32.xlu0 %v2311, 64
  %v2314 = vpop.permute.xlu0 %2313
  %v2316 = vmul.f32 %v2297, %v2314
  %v2317 = vsel %vm2039, 1, 0
  %2318 = vset.pattern.permute.xlu0 0
  %2319 = vperm.xlu0 %2318, %v2317
  %v2320 = vpop.permute.xlu0 %2319
  %vm2321 = vcmp.eq.s32.totalorder %v2320, 1
  %v2322 = vsel %vm2321, %v2140, %v1956
  %v2323 = vsel %vm2321, %v2134, %v1957
  %v2324 = vsel %vm2321, %v2316, %v1958
  %v2325 = vsel %vm2321, %v2310, %v1959
  %v2326 = vsel %vm2321, %v2316, 0.0
  %2328 = vrot.lane.b32.xlu0 %v2326, 32
  %v2329 = vpop.permute.xlu0 %2328
  %v2330 = vsel %vm222, %v2329, 0
  %2332 = vmatprep.subr.mxu0 0.0
  %2333 = vmatpush1.msra.mxu0 %v55
  %2334 = vmatprep.subr.mxu0 0.0
  %2335 = vmatpush1.msra.mxu0 %v56
  %2336 = vmatprep.subr.mxu0 0.0
  %2337 = vmatpush1.msra.mxu0 %v57
  %2338 = vmatprep.subr.mxu0 0.0
  %2339 = vmatpush1.msra.mxu0 %v58
  %2340 = vmatprep.subr.mxu0 0.0
  %2341 = vmatpush1.msra.mxu0 0.0
  %2342 = vmatprep.subr.mxu0 0.0
  %2343 = vmatpush1.msra.mxu0 0.0
  %2344 = vmatprep.subr.mxu0 0.0
  %2345 = vmatpush1.msra.mxu0 0.0
  %2346 = vmatprep.subr.mxu0 0.0
  %2347 = vmatpush1.msra.mxu0 0.0
  %2348 = vmatprep.subr.mxu0 0.0
  %2349 = vmatpush1.msra.mxu0 0.0
  %2350 = vmatprep.subr.mxu0 0.0
  %2351 = vmatpush1.msra.mxu0 0.0
  %2352 = vmatprep.subr.mxu0 0.0
  %2353 = vmatpush1.msra.mxu0 0.0
  %2354 = vmatprep.subr.mxu0 0.0
  %2355 = vmatpush1.msra.mxu0 0.0
  %2356 = vmatprep.subr.mxu0 0.0
  %2357 = vmatpush1.msra.mxu0 0.0
  %2358 = vmatprep.subr.mxu0 0.0
  %2359 = vmatpush1.msra.mxu0 0.0
  %2360 = vmatprep.subr.mxu0 0.0
  %2361 = vmatpush1.msra.mxu0 0.0
  %2362 = vmatprep.subr.mxu0 0.0
  %2363 = vmatpush1.msra.mxu0 0.0
  %2364 = vmatprep.subr.mxu0 0.0
  %2365 = vmatpush1.msra.mxu0 0.0
  %2366 = vmatprep.subr.mxu0 0.0
  %2367 = vmatpush1.msra.mxu0 0.0
  %2368 = vmatprep.subr.mxu0 0.0
  %2369 = vmatpush1.msra.mxu0 0.0
  %2370 = vmatprep.subr.mxu0 0.0
  %2371 = vmatpush1.msra.mxu0 0.0
  %2372 = vmatprep.subr.mxu0 0.0
  %2373 = vmatpush1.msra.mxu0 0.0
  %2374 = vmatprep.subr.mxu0 0.0
  %2375 = vmatpush1.msra.mxu0 0.0
  %2376 = vmatprep.subr.mxu0 0.0
  %2377 = vmatpush1.msra.mxu0 0.0
  %2378 = vmatprep.subr.mxu0 0.0
  %2379 = vmatpush1.msra.mxu0 0.0
  %2380 = vmatprep.subr.mxu0 0.0
  %2381 = vmatpush1.msra.mxu0 0.0
  %2382 = vmatprep.subr.mxu0 0.0
  %2383 = vmatpush1.msra.mxu0 0.0
  %2384 = vmatprep.subr.mxu0 0.0
  %2385 = vmatpush1.msra.mxu0 0.0
  %2386 = vmatprep.subr.mxu0 0.0
  %2387 = vmatpush1.msra.mxu0 0.0
  %2388 = vmatprep.subr.mxu0 0.0
  %2389 = vmatpush1.msra.mxu0 0.0
  %2390 = vmatprep.subr.mxu0 0.0
  %2391 = vmatpush1.msra.mxu0 0.0
  %2392 = vmatprep.subr.mxu0 0.0
  %2393 = vmatpush1.msra.mxu0 0.0
  %2394 = vmatprep.subr.mxu0 0.0
  %2395 = vmatpush1.msra.mxu0 0.0
  %2396 = vmatprep.mubr.f32.mxu0 0.0
  %2397 = vmatmul.mubr.f32.gmra.mrb[0].mxu0 %v2330
  %v2398 = vpop.f32.mrb[0].mxu0
  %v2399 = vadd.f32 %v71, %v2398
  %v2400 = vpop.f32.mrb[0].mxu0
  %2401 = vdwg.mxu0
  %2402 = vst [vmem:[%s12 + $0x28] sm:$0xff] %v2399
  %s2403 = scalar_lea.vmem %s1, 48
  %v2404 = vld [vmem:[%s2403] sm:$0xff]
  %vm2405 = vcmp.gt.f32.partialorder %v2404, 0.0
  %2407 = vrot.lane.b32.xlu0 %v2322, 32
  %v2408 = vpop.permute.xlu0 %2407
  %v2409 = vsel %vm222, %v2408, 0
  %2411 = vmatprep.subr.mxu0 0.0
  %2412 = vmatpush1.msra.mxu0 %v43
  %2413 = vmatprep.subr.mxu0 0.0
  %2414 = vmatpush1.msra.mxu0 %v44
  %2415 = vmatprep.subr.mxu0 0.0
  %2416 = vmatpush1.msra.mxu0 %v45
  %2417 = vmatprep.subr.mxu0 0.0
  %2418 = vmatpush1.msra.mxu0 %v46
  %2419 = vmatprep.subr.mxu0 0.0
  %2420 = vmatpush1.msra.mxu0 0.0
  %2421 = vmatprep.subr.mxu0 0.0
  %2422 = vmatpush1.msra.mxu0 0.0
  %2423 = vmatprep.subr.mxu0 0.0
  %2424 = vmatpush1.msra.mxu0 0.0
  %2425 = vmatprep.subr.mxu0 0.0
  %2426 = vmatpush1.msra.mxu0 0.0
  %2427 = vmatprep.subr.mxu0 0.0
  %2428 = vmatpush1.msra.mxu0 0.0
  %2429 = vmatprep.subr.mxu0 0.0
  %2430 = vmatpush1.msra.mxu0 0.0
  %2431 = vmatprep.subr.mxu0 0.0
  %2432 = vmatpush1.msra.mxu0 0.0
  %2433 = vmatprep.subr.mxu0 0.0
  %2434 = vmatpush1.msra.mxu0 0.0
  %2435 = vmatprep.subr.mxu0 0.0
  %2436 = vmatpush1.msra.mxu0 0.0
  %2437 = vmatprep.subr.mxu0 0.0
  %2438 = vmatpush1.msra.mxu0 0.0
  %2439 = vmatprep.subr.mxu0 0.0
  %2440 = vmatpush1.msra.mxu0 0.0
  %2441 = vmatprep.subr.mxu0 0.0
  %2442 = vmatpush1.msra.mxu0 0.0
  %2443 = vmatprep.subr.mxu0 0.0
  %2444 = vmatpush1.msra.mxu0 0.0
  %2445 = vmatprep.subr.mxu0 0.0
  %2446 = vmatpush1.msra.mxu0 0.0
  %2447 = vmatprep.subr.mxu0 0.0
  %2448 = vmatpush1.msra.mxu0 0.0
  %2449 = vmatprep.subr.mxu0 0.0
  %2450 = vmatpush1.msra.mxu0 0.0
  %2451 = vmatprep.subr.mxu0 0.0
  %2452 = vmatpush1.msra.mxu0 0.0
  %2453 = vmatprep.subr.mxu0 0.0
  %2454 = vmatpush1.msra.mxu0 0.0
  %2455 = vmatprep.subr.mxu0 0.0
  %2456 = vmatpush1.msra.mxu0 0.0
  %2457 = vmatprep.subr.mxu0 0.0
  %2458 = vmatpush1.msra.mxu0 0.0
  %2459 = vmatprep.subr.mxu0 0.0
  %2460 = vmatpush1.msra.mxu0 0.0
  %2461 = vmatprep.subr.mxu0 0.0
  %2462 = vmatpush1.msra.mxu0 0.0
  %2463 = vmatprep.subr.mxu0 0.0
  %2464 = vmatpush1.msra.mxu0 0.0
  %2465 = vmatprep.subr.mxu0 0.0
  %2466 = vmatpush1.msra.mxu0 0.0
  %2467 = vmatprep.subr.mxu0 0.0
  %2468 = vmatpush1.msra.mxu0 0.0
  %2469 = vmatprep.subr.mxu0 0.0
  %2470 = vmatpush1.msra.mxu0 0.0
  %2471 = vmatprep.subr.mxu0 0.0
  %2472 = vmatpush1.msra.mxu0 0.0
  %2473 = vmatprep.subr.mxu0 0.0
  %2474 = vmatpush1.msra.mxu0 0.0
  %2475 = vmatprep.mubr.f32.mxu0 0.0
  %2476 = vmatmul.mubr.f32.gmra.mrb[0].mxu0 %v2409
  %v2477 = vpop.f32.mrb[0].mxu0
  %v2478 = vadd.f32 0.0, %v2477
  %v2479 = vpop.f32.mrb[0].mxu0
  %2480 = vdwg.mxu0
  %v2481 = vadd.f32 %v212, %v2478
  %v2482 = vxor.u32 %v2481, 2147483648
  %v2483 = vmul.f32 %v2482, 1.442695
  %v2484 = vpow.pop %v2483
  %v2485 = vadd.f32 %v2484, 1.0
  %v2486 = vrcp.pop %v2485
  %v2487 = vmul.f32 1.0, %v2486
  %v2488 = vmul.f32 %v2487, 2.0
  %v2489 = vsub.f32 %v2488, 1.0
  %v2490 = vmul.f32 %v2487, %v2323
  %2492 = vrot.lane.b32.xlu0 %v2489, 64
  %v2493 = vpop.permute.xlu0 %2492
  %v2495 = vmul.f32 %v2487, %v2493
  %2497 = vrot.lane.b32.xlu0 %v2495, 32
  %v2498 = vpop.permute.xlu0 %2497
  %v2500 = vadd.f32 %v2490, %v2498
  %v2501 = vtanh.pop %v2500
  %2503 = vrot.lane.b32.xlu0 %v2501, 64
  %v2504 = vpop.permute.xlu0 %2503
  %v2506 = vmul.f32 %v2487, %v2504
  %2508 = vrot.lane.b32.xlu0 %v2324, 32
  %v2509 = vpop.permute.xlu0 %2508
  %v2510 = vsel %vm222, %v2509, 0
  %2512 = vmatprep.subr.mxu0 0.0
  %2513 = vmatpush1.msra.mxu0 %v51
  %2514 = vmatprep.subr.mxu0 0.0
  %2515 = vmatpush1.msra.mxu0 %v52
  %2516 = vmatprep.subr.mxu0 0.0
  %2517 = vmatpush1.msra.mxu0 %v53
  %2518 = vmatprep.subr.mxu0 0.0
  %2519 = vmatpush1.msra.mxu0 %v54
  %2520 = vmatprep.subr.mxu0 0.0
  %2521 = vmatpush1.msra.mxu0 0.0
  %2522 = vmatprep.subr.mxu0 0.0
  %2523 = vmatpush1.msra.mxu0 0.0
  %2524 = vmatprep.subr.mxu0 0.0
  %2525 = vmatpush1.msra.mxu0 0.0
  %2526 = vmatprep.subr.mxu0 0.0
  %2527 = vmatpush1.msra.mxu0 0.0
  %2528 = vmatprep.subr.mxu0 0.0
  %2529 = vmatpush1.msra.mxu0 0.0
  %2530 = vmatprep.subr.mxu0 0.0
  %2531 = vmatpush1.msra.mxu0 0.0
  %2532 = vmatprep.subr.mxu0 0.0
  %2533 = vmatpush1.msra.mxu0 0.0
  %2534 = vmatprep.subr.mxu0 0.0
  %2535 = vmatpush1.msra.mxu0 0.0
  %2536 = vmatprep.subr.mxu0 0.0
  %2537 = vmatpush1.msra.mxu0 0.0
  %2538 = vmatprep.subr.mxu0 0.0
  %2539 = vmatpush1.msra.mxu0 0.0
  %2540 = vmatprep.subr.mxu0 0.0
  %2541 = vmatpush1.msra.mxu0 0.0
  %2542 = vmatprep.subr.mxu0 0.0
  %2543 = vmatpush1.msra.mxu0 0.0
  %2544 = vmatprep.subr.mxu0 0.0
  %2545 = vmatpush1.msra.mxu0 0.0
  %2546 = vmatprep.subr.mxu0 0.0
  %2547 = vmatpush1.msra.mxu0 0.0
  %2548 = vmatprep.subr.mxu0 0.0
  %2549 = vmatpush1.msra.mxu0 0.0
  %2550 = vmatprep.subr.mxu0 0.0
  %2551 = vmatpush1.msra.mxu0 0.0
  %2552 = vmatprep.subr.mxu0 0.0
  %2553 = vmatpush1.msra.mxu0 0.0
  %2554 = vmatprep.subr.mxu0 0.0
  %2555 = vmatpush1.msra.mxu0 0.0
  %2556 = vmatprep.subr.mxu0 0.0
  %2557 = vmatpush1.msra.mxu0 0.0
  %2558 = vmatprep.subr.mxu0 0.0
  %2559 = vmatpush1.msra.mxu0 0.0
  %2560 = vmatprep.subr.mxu0 0.0
  %2561 = vmatpush1.msra.mxu0 0.0
  %2562 = vmatprep.subr.mxu0 0.0
  %2563 = vmatpush1.msra.mxu0 0.0
  %2564 = vmatprep.subr.mxu0 0.0
  %2565 = vmatpush1.msra.mxu0 0.0
  %2566 = vmatprep.subr.mxu0 0.0
  %2567 = vmatpush1.msra.mxu0 0.0
  %2568 = vmatprep.subr.mxu0 0.0
  %2569 = vmatpush1.msra.mxu0 0.0
  %2570 = vmatprep.subr.mxu0 0.0
  %2571 = vmatpush1.msra.mxu0 0.0
  %2572 = vmatprep.subr.mxu0 0.0
  %2573 = vmatpush1.msra.mxu0 0.0
  %2574 = vmatprep.subr.mxu0 0.0
  %2575 = vmatpush1.msra.mxu0 0.0
  %2576 = vmatprep.mubr.f32.mxu0 0.0
  %2577 = vmatmul.mubr.f32.gmra.mrb[0].mxu0 %v2510
  %v2578 = vpop.f32.mrb[0].mxu0
  %v2579 = vadd.f32 0.0, %v2578
  %v2580 = vpop.f32.mrb[0].mxu0
  %2581 = vdwg.mxu0
  %2583 = vrot.lane.b32.xlu0 %v2506, 32
  %v2584 = vpop.permute.xlu0 %2583
  %v2585 = vsel %vm222, %v2584, 0
  %2587 = vmatprep.subr.mxu0 0.0
  %2588 = vmatpush1.msra.mxu0 %v47
  %2589 = vmatprep.subr.mxu0 0.0
  %2590 = vmatpush1.msra.mxu0 %v48
  %2591 = vmatprep.subr.mxu0 0.0
  %2592 = vmatpush1.msra.mxu0 %v49
  %2593 = vmatprep.subr.mxu0 0.0
  %2594 = vmatpush1.msra.mxu0 %v50
  %2595 = vmatprep.subr.mxu0 0.0
  %2596 = vmatpush1.msra.mxu0 0.0
  %2597 = vmatprep.subr.mxu0 0.0
  %2598 = vmatpush1.msra.mxu0 0.0
  %2599 = vmatprep.subr.mxu0 0.0
  %2600 = vmatpush1.msra.mxu0 0.0
  %2601 = vmatprep.subr.mxu0 0.0
  %2602 = vmatpush1.msra.mxu0 0.0
  %2603 = vmatprep.subr.mxu0 0.0
  %2604 = vmatpush1.msra.mxu0 0.0
  %2605 = vmatprep.subr.mxu0 0.0
  %2606 = vmatpush1.msra.mxu0 0.0
  %2607 = vmatprep.subr.mxu0 0.0
  %2608 = vmatpush1.msra.mxu0 0.0
  %2609 = vmatprep.subr.mxu0 0.0
  %2610 = vmatpush1.msra.mxu0 0.0
  %2611 = vmatprep.subr.mxu0 0.0
  %2612 = vmatpush1.msra.mxu0 0.0
  %2613 = vmatprep.subr.mxu0 0.0
  %2614 = vmatpush1.msra.mxu0 0.0
  %2615 = vmatprep.subr.mxu0 0.0
  %2616 = vmatpush1.msra.mxu0 0.0
  %2617 = vmatprep.subr.mxu0 0.0
  %2618 = vmatpush1.msra.mxu0 0.0
  %2619 = vmatprep.subr.mxu0 0.0
  %2620 = vmatpush1.msra.mxu0 0.0
  %2621 = vmatprep.subr.mxu0 0.0
  %2622 = vmatpush1.msra.mxu0 0.0
  %2623 = vmatprep.subr.mxu0 0.0
  %2624 = vmatpush1.msra.mxu0 0.0
  %2625 = vmatprep.subr.mxu0 0.0
  %2626 = vmatpush1.msra.mxu0 0.0
  %2627 = vmatprep.subr.mxu0 0.0
  %2628 = vmatpush1.msra.mxu0 0.0
  %2629 = vmatprep.subr.mxu0 0.0
  %2630 = vmatpush1.msra.mxu0 0.0
  %2631 = vmatprep.subr.mxu0 0.0
  %2632 = vmatpush1.msra.mxu0 0.0
  %2633 = vmatprep.subr.mxu0 0.0
  %2634 = vmatpush1.msra.mxu0 0.0
  %2635 = vmatprep.subr.mxu0 0.0
  %2636 = vmatpush1.msra.mxu0 0.0
  %2637 = vmatprep.subr.mxu0 0.0
  %2638 = vmatpush1.msra.mxu0 0.0
  %2639 = vmatprep.subr.mxu0 0.0
  %2640 = vmatpush1.msra.mxu0 0.0
  %2641 = vmatprep.subr.mxu0 0.0
  %2642 = vmatpush1.msra.mxu0 0.0
  %2643 = vmatprep.subr.mxu0 0.0
  %2644 = vmatpush1.msra.mxu0 0.0
  %2645 = vmatprep.subr.mxu0 0.0
  %2646 = vmatpush1.msra.mxu0 0.0
  %2647 = vmatprep.subr.mxu0 0.0
  %2648 = vmatpush1.msra.mxu0 0.0
  %2649 = vmatprep.subr.mxu0 0.0
  %2650 = vmatpush1.msra.mxu0 0.0
  %2651 = vmatprep.mubr.f32.mxu0 0.0
  %2652 = vmatmul.mubr.f32.gmra.mrb[0].mxu0 %v2585
  %v2653 = vpop.f32.mrb[0].mxu0
  %v2654 = vadd.f32 %v2579, %v2653
  %v2655 = vpop.f32.mrb[0].mxu0
  %2656 = vdwg.mxu0
  %v2657 = vadd.f32 %v2654, %v64
  %v2658 = vxor.u32 %v2657, 2147483648
  %v2659 = vmul.f32 %v2658, 1.442695
  %v2660 = vpow.pop %v2659
  %v2661 = vadd.f32 %v2660, 1.0
  %v2662 = vrcp.pop %v2661
  %v2663 = vmul.f32 1.0, %v2662
  %v2664 = vmul.f32 %v2663, 2.0
  %v2665 = vsub.f32 %v2664, 1.0
  %v2666 = vmul.f32 %v2663, %v2325
  %2668 = vrot.lane.b32.xlu0 %v2665, 64
  %v2669 = vpop.permute.xlu0 %2668
  %v2671 = vmul.f32 %v2663, %v2669
  %2673 = vrot.lane.b32.xlu0 %v2671, 32
  %v2674 = vpop.permute.xlu0 %2673
  %v2676 = vadd.f32 %v2666, %v2674
  %v2677 = vtanh.pop %v2676
  %2679 = vrot.lane.b32.xlu0 %v2677, 64
  %v2680 = vpop.permute.xlu0 %2679
  %v2682 = vmul.f32 %v2663, %v2680
  %v2683 = vsel %vm2405, 1, 0
  %2684 = vset.pattern.permute.xlu0 0
  %2685 = vperm.xlu0 %2684, %v2683
  %v2686 = vpop.permute.xlu0 %2685
  %vm2687 = vcmp.eq.s32.totalorder %v2686, 1
  %v2688 = vsel %vm2687, %v2506, %v2322
  %v2689 = vsel %vm2687, %v2500, %v2323
  %v2690 = vsel %vm2687, %v2682, %v2324
  %v2691 = vsel %vm2687, %v2676, %v2325
  %v2692 = vsel %vm2687, %v2682, 0.0
  %2694 = vrot.lane.b32.xlu0 %v2692, 32
  %v2695 = vpop.permute.xlu0 %2694
  %v2696 = vsel %vm222, %v2695, 0
  %2698 = vmatprep.subr.mxu0 0.0
  %2699 = vmatpush1.msra.mxu0 %v55
  %2700 = vmatprep.subr.mxu0 0.0
  %2701 = vmatpush1.msra.mxu0 %v56
  %2702 = vmatprep.subr.mxu0 0.0
  %2703 = vmatpush1.msra.mxu0 %v57
  %2704 = vmatprep.subr.mxu0 0.0
  %2705 = vmatpush1.msra.mxu0 %v58
  %2706 = vmatprep.subr.mxu0 0.0
  %2707 = vmatpush1.msra.mxu0 0.0
  %2708 = vmatprep.subr.mxu0 0.0
  %2709 = vmatpush1.msra.mxu0 0.0
  %2710 = vmatprep.subr.mxu0 0.0
  %2711 = vmatpush1.msra.mxu0 0.0
  %2712 = vmatprep.subr.mxu0 0.0
  %2713 = vmatpush1.msra.mxu0 0.0
  %2714 = vmatprep.subr.mxu0 0.0
  %2715 = vmatpush1.msra.mxu0 0.0
  %2716 = vmatprep.subr.mxu0 0.0
  %2717 = vmatpush1.msra.mxu0 0.0
  %2718 = vmatprep.subr.mxu0 0.0
  %2719 = vmatpush1.msra.mxu0 0.0
  %2720 = vmatprep.subr.mxu0 0.0
  %2721 = vmatpush1.msra.mxu0 0.0
  %2722 = vmatprep.subr.mxu0 0.0
  %2723 = vmatpush1.msra.mxu0 0.0
  %2724 = vmatprep.subr.mxu0 0.0
  %2725 = vmatpush1.msra.mxu0 0.0
  %2726 = vmatprep.subr.mxu0 0.0
  %2727 = vmatpush1.msra.mxu0 0.0
  %2728 = vmatprep.subr.mxu0 0.0
  %2729 = vmatpush1.msra.mxu0 0.0
  %2730 = vmatprep.subr.mxu0 0.0
  %2731 = vmatpush1.msra.mxu0 0.0
  %2732 = vmatprep.subr.mxu0 0.0
  %2733 = vmatpush1.msra.mxu0 0.0
  %2734 = vmatprep.subr.mxu0 0.0
  %2735 = vmatpush1.msra.mxu0 0.0
  %2736 = vmatprep.subr.mxu0 0.0
  %2737 = vmatpush1.msra.mxu0 0.0
  %2738 = vmatprep.subr.mxu0 0.0
  %2739 = vmatpush1.msra.mxu0 0.0
  %2740 = vmatprep.subr.mxu0 0.0
  %2741 = vmatpush1.msra.mxu0 0.0
  %2742 = vmatprep.subr.mxu0 0.0
  %2743 = vmatpush1.msra.mxu0 0.0
  %2744 = vmatprep.subr.mxu0 0.0
  %2745 = vmatpush1.msra.mxu0 0.0
  %2746 = vmatprep.subr.mxu0 0.0
  %2747 = vmatpush1.msra.mxu0 0.0
  %2748 = vmatprep.subr.mxu0 0.0
  %2749 = vmatpush1.msra.mxu0 0.0
  %2750 = vmatprep.subr.mxu0 0.0
  %2751 = vmatpush1.msra.mxu0 0.0
  %2752 = vmatprep.subr.mxu0 0.0
  %2753 = vmatpush1.msra.mxu0 0.0
  %2754 = vmatprep.subr.mxu0 0.0
  %2755 = vmatpush1.msra.mxu0 0.0
  %2756 = vmatprep.subr.mxu0 0.0
  %2757 = vmatpush1.msra.mxu0 0.0
  %2758 = vmatprep.subr.mxu0 0.0
  %2759 = vmatpush1.msra.mxu0 0.0
  %2760 = vmatprep.subr.mxu0 0.0
  %2761 = vmatpush1.msra.mxu0 0.0
  %2762 = vmatprep.mubr.f32.mxu0 0.0
  %2763 = vmatmul.mubr.f32.gmra.mrb[0].mxu0 %v2696
  %v2764 = vpop.f32.mrb[0].mxu0
  %v2765 = vadd.f32 %v71, %v2764
  %v2766 = vpop.f32.mrb[0].mxu0
  %2767 = vdwg.mxu0
  %2768 = vst [vmem:[%s12 + $0x30] sm:$0xff] %v2765
  %s2769 = scalar_lea.vmem %s1, 56
  %v2770 = vld [vmem:[%s2769] sm:$0xff]
  %vm2771 = vcmp.gt.f32.partialorder %v2770, 0.0
  %2773 = vrot.lane.b32.xlu0 %v2688, 32
  %v2774 = vpop.permute.xlu0 %2773
  %v2775 = vsel %vm222, %v2774, 0
  %2777 = vmatprep.subr.mxu0 0.0
  %2778 = vmatpush1.msra.mxu0 %v43
  %2779 = vmatprep.subr.mxu0 0.0
  %2780 = vmatpush1.msra.mxu0 %v44
  %2781 = vmatprep.subr.mxu0 0.0
  %2782 = vmatpush1.msra.mxu0 %v45
  %2783 = vmatprep.subr.mxu0 0.0
  %2784 = vmatpush1.msra.mxu0 %v46
  %2785 = vmatprep.subr.mxu0 0.0
  %2786 = vmatpush1.msra.mxu0 0.0
  %2787 = vmatprep.subr.mxu0 0.0
  %2788 = vmatpush1.msra.mxu0 0.0
  %2789 = vmatprep.subr.mxu0 0.0
  %2790 = vmatpush1.msra.mxu0 0.0
  %2791 = vmatprep.subr.mxu0 0.0
  %2792 = vmatpush1.msra.mxu0 0.0
  %2793 = vmatprep.subr.mxu0 0.0
  %2794 = vmatpush1.msra.mxu0 0.0
  %2795 = vmatprep.subr.mxu0 0.0
  %2796 = vmatpush1.msra.mxu0 0.0
  %2797 = vmatprep.subr.mxu0 0.0
  %2798 = vmatpush1.msra.mxu0 0.0
  %2799 = vmatprep.subr.mxu0 0.0
  %2800 = vmatpush1.msra.mxu0 0.0
  %2801 = vmatprep.subr.mxu0 0.0
  %2802 = vmatpush1.msra.mxu0 0.0
  %2803 = vmatprep.subr.mxu0 0.0
  %2804 = vmatpush1.msra.mxu0 0.0
  %2805 = vmatprep.subr.mxu0 0.0
  %2806 = vmatpush1.msra.mxu0 0.0
  %2807 = vmatprep.subr.mxu0 0.0
  %2808 = vmatpush1.msra.mxu0 0.0
  %2809 = vmatprep.subr.mxu0 0.0
  %2810 = vmatpush1.msra.mxu0 0.0
  %2811 = vmatprep.subr.mxu0 0.0
  %2812 = vmatpush1.msra.mxu0 0.0
  %2813 = vmatprep.subr.mxu0 0.0
  %2814 = vmatpush1.msra.mxu0 0.0
  %2815 = vmatprep.subr.mxu0 0.0
  %2816 = vmatpush1.msra.mxu0 0.0
  %2817 = vmatprep.subr.mxu0 0.0
  %2818 = vmatpush1.msra.mxu0 0.0
  %2819 = vmatprep.subr.mxu0 0.0
  %2820 = vmatpush1.msra.mxu0 0.0
  %2821 = vmatprep.subr.mxu0 0.0
  %2822 = vmatpush1.msra.mxu0 0.0
  %2823 = vmatprep.subr.mxu0 0.0
  %2824 = vmatpush1.msra.mxu0 0.0
  %2825 = vmatprep.subr.mxu0 0.0
  %2826 = vmatpush1.msra.mxu0 0.0
  %2827 = vmatprep.subr.mxu0 0.0
  %2828 = vmatpush1.msra.mxu0 0.0
  %2829 = vmatprep.subr.mxu0 0.0
  %2830 = vmatpush1.msra.mxu0 0.0
  %2831 = vmatprep.subr.mxu0 0.0
  %2832 = vmatpush1.msra.mxu0 0.0
  %2833 = vmatprep.subr.mxu0 0.0
  %2834 = vmatpush1.msra.mxu0 0.0
  %2835 = vmatprep.subr.mxu0 0.0
  %2836 = vmatpush1.msra.mxu0 0.0
  %2837 = vmatprep.subr.mxu0 0.0
  %2838 = vmatpush1.msra.mxu0 0.0
  %2839 = vmatprep.subr.mxu0 0.0
  %2840 = vmatpush1.msra.mxu0 0.0
  %2841 = vmatprep.mubr.f32.mxu0 0.0
  %2842 = vmatmul.mubr.f32.gmra.mrb[0].mxu0 %v2775
  %v2843 = vpop.f32.mrb[0].mxu0
  %v2844 = vadd.f32 0.0, %v2843
  %v2845 = vpop.f32.mrb[0].mxu0
  %2846 = vdwg.mxu0
  %v2847 = vadd.f32 %v217, %v2844
  %v2848 = vxor.u32 %v2847, 2147483648
  %v2849 = vmul.f32 %v2848, 1.442695
  %v2850 = vpow.pop %v2849
  %v2851 = vadd.f32 %v2850, 1.0
  %v2852 = vrcp.pop %v2851
  %v2853 = vmul.f32 1.0, %v2852
  %v2854 = vmul.f32 %v2853, 2.0
  %v2855 = vsub.f32 %v2854, 1.0
  %v2856 = vmul.f32 %v2853, %v2689
  %2858 = vrot.lane.b32.xlu0 %v2855, 64
  %v2859 = vpop.permute.xlu0 %2858
  %v2861 = vmul.f32 %v2853, %v2859
  %2863 = vrot.lane.b32.xlu0 %v2861, 32
  %v2864 = vpop.permute.xlu0 %2863
  %v2866 = vadd.f32 %v2856, %v2864
  %v2867 = vtanh.pop %v2866
  %2869 = vrot.lane.b32.xlu0 %v2867, 64
  %v2870 = vpop.permute.xlu0 %2869
  %v2872 = vmul.f32 %v2853, %v2870
  %2874 = vrot.lane.b32.xlu0 %v2690, 32
  %v2875 = vpop.permute.xlu0 %2874
  %v2876 = vsel %vm222, %v2875, 0
  %2878 = vmatprep.subr.mxu0 0.0
  %2879 = vmatpush1.msra.mxu0 %v51
  %2880 = vmatprep.subr.mxu0 0.0
  %2881 = vmatpush1.msra.mxu0 %v52
  %2882 = vmatprep.subr.mxu0 0.0
  %2883 = vmatpush1.msra.mxu0 %v53
  %2884 = vmatprep.subr.mxu0 0.0
  %2885 = vmatpush1.msra.mxu0 %v54
  %2886 = vmatprep.subr.mxu0 0.0
  %2887 = vmatpush1.msra.mxu0 0.0
  %2888 = vmatprep.subr.mxu0 0.0
  %2889 = vmatpush1.msra.mxu0 0.0
  %2890 = vmatprep.subr.mxu0 0.0
  %2891 = vmatpush1.msra.mxu0 0.0
  %2892 = vmatprep.subr.mxu0 0.0
  %2893 = vmatpush1.msra.mxu0 0.0
  %2894 = vmatprep.subr.mxu0 0.0
  %2895 = vmatpush1.msra.mxu0 0.0
  %2896 = vmatprep.subr.mxu0 0.0
  %2897 = vmatpush1.msra.mxu0 0.0
  %2898 = vmatprep.subr.mxu0 0.0
  %2899 = vmatpush1.msra.mxu0 0.0
  %2900 = vmatprep.subr.mxu0 0.0
  %2901 = vmatpush1.msra.mxu0 0.0
  %2902 = vmatprep.subr.mxu0 0.0
  %2903 = vmatpush1.msra.mxu0 0.0
  %2904 = vmatprep.subr.mxu0 0.0
  %2905 = vmatpush1.msra.mxu0 0.0
  %2906 = vmatprep.subr.mxu0 0.0
  %2907 = vmatpush1.msra.mxu0 0.0
  %2908 = vmatprep.subr.mxu0 0.0
  %2909 = vmatpush1.msra.mxu0 0.0
  %2910 = vmatprep.subr.mxu0 0.0
  %2911 = vmatpush1.msra.mxu0 0.0
  %2912 = vmatprep.subr.mxu0 0.0
  %2913 = vmatpush1.msra.mxu0 0.0
  %2914 = vmatprep.subr.mxu0 0.0
  %2915 = vmatpush1.msra.mxu0 0.0
  %2916 = vmatprep.subr.mxu0 0.0
  %2917 = vmatpush1.msra.mxu0 0.0
  %2918 = vmatprep.subr.mxu0 0.0
  %2919 = vmatpush1.msra.mxu0 0.0
  %2920 = vmatprep.subr.mxu0 0.0
  %2921 = vmatpush1.msra.mxu0 0.0
  %2922 = vmatprep.subr.mxu0 0.0
  %2923 = vmatpush1.msra.mxu0 0.0
  %2924 = vmatprep.subr.mxu0 0.0
  %2925 = vmatpush1.msra.mxu0 0.0
  %2926 = vmatprep.subr.mxu0 0.0
  %2927 = vmatpush1.msra.mxu0 0.0
  %2928 = vmatprep.subr.mxu0 0.0
  %2929 = vmatpush1.msra.mxu0 0.0
  %2930 = vmatprep.subr.mxu0 0.0
  %2931 = vmatpush1.msra.mxu0 0.0
  %2932 = vmatprep.subr.mxu0 0.0
  %2933 = vmatpush1.msra.mxu0 0.0
  %2934 = vmatprep.subr.mxu0 0.0
  %2935 = vmatpush1.msra.mxu0 0.0
  %2936 = vmatprep.subr.mxu0 0.0
  %2937 = vmatpush1.msra.mxu0 0.0
  %2938 = vmatprep.subr.mxu0 0.0
  %2939 = vmatpush1.msra.mxu0 0.0
  %2940 = vmatprep.subr.mxu0 0.0
  %2941 = vmatpush1.msra.mxu0 0.0
  %2942 = vmatprep.mubr.f32.mxu0 0.0
  %2943 = vmatmul.mubr.f32.gmra.mrb[0].mxu0 %v2876
  %v2944 = vpop.f32.mrb[0].mxu0
  %v2945 = vadd.f32 0.0, %v2944
  %v2946 = vpop.f32.mrb[0].mxu0
  %2947 = vdwg.mxu0
  %2949 = vrot.lane.b32.xlu0 %v2872, 32
  %v2950 = vpop.permute.xlu0 %2949
  %v2951 = vsel %vm222, %v2950, 0
  %2953 = vmatprep.subr.mxu0 0.0
  %2954 = vmatpush1.msra.mxu0 %v47
  %2955 = vmatprep.subr.mxu0 0.0
  %2956 = vmatpush1.msra.mxu0 %v48
  %2957 = vmatprep.subr.mxu0 0.0
  %2958 = vmatpush1.msra.mxu0 %v49
  %2959 = vmatprep.subr.mxu0 0.0
  %2960 = vmatpush1.msra.mxu0 %v50
  %2961 = vmatprep.subr.mxu0 0.0
  %2962 = vmatpush1.msra.mxu0 0.0
  %2963 = vmatprep.subr.mxu0 0.0
  %2964 = vmatpush1.msra.mxu0 0.0
  %2965 = vmatprep.subr.mxu0 0.0
  %2966 = vmatpush1.msra.mxu0 0.0
  %2967 = vmatprep.subr.mxu0 0.0
  %2968 = vmatpush1.msra.mxu0 0.0
  %2969 = vmatprep.subr.mxu0 0.0
  %2970 = vmatpush1.msra.mxu0 0.0
  %2971 = vmatprep.subr.mxu0 0.0
  %2972 = vmatpush1.msra.mxu0 0.0
  %2973 = vmatprep.subr.mxu0 0.0
  %2974 = vmatpush1.msra.mxu0 0.0
  %2975 = vmatprep.subr.mxu0 0.0
  %2976 = vmatpush1.msra.mxu0 0.0
  %2977 = vmatprep.subr.mxu0 0.0
  %2978 = vmatpush1.msra.mxu0 0.0
  %2979 = vmatprep.subr.mxu0 0.0
  %2980 = vmatpush1.msra.mxu0 0.0
  %2981 = vmatprep.subr.mxu0 0.0
  %2982 = vmatpush1.msra.mxu0 0.0
  %2983 = vmatprep.subr.mxu0 0.0
  %2984 = vmatpush1.msra.mxu0 0.0
  %2985 = vmatprep.subr.mxu0 0.0
  %2986 = vmatpush1.msra.mxu0 0.0
  %2987 = vmatprep.subr.mxu0 0.0
  %2988 = vmatpush1.msra.mxu0 0.0
  %2989 = vmatprep.subr.mxu0 0.0
  %2990 = vmatpush1.msra.mxu0 0.0
  %2991 = vmatprep.subr.mxu0 0.0
  %2992 = vmatpush1.msra.mxu0 0.0
  %2993 = vmatprep.subr.mxu0 0.0
  %2994 = vmatpush1.msra.mxu0 0.0
  %2995 = vmatprep.subr.mxu0 0.0
  %2996 = vmatpush1.msra.mxu0 0.0
  %2997 = vmatprep.subr.mxu0 0.0
  %2998 = vmatpush1.msra.mxu0 0.0
  %2999 = vmatprep.subr.mxu0 0.0
  %3000 = vmatpush1.msra.mxu0 0.0
  %3001 = vmatprep.subr.mxu0 0.0
  %3002 = vmatpush1.msra.mxu0 0.0
  %3003 = vmatprep.subr.mxu0 0.0
  %3004 = vmatpush1.msra.mxu0 0.0
  %3005 = vmatprep.subr.mxu0 0.0
  %3006 = vmatpush1.msra.mxu0 0.0
  %3007 = vmatprep.subr.mxu0 0.0
  %3008 = vmatpush1.msra.mxu0 0.0
  %3009 = vmatprep.subr.mxu0 0.0
  %3010 = vmatpush1.msra.mxu0 0.0
  %3011 = vmatprep.subr.mxu0 0.0
  %3012 = vmatpush1.msra.mxu0 0.0
  %3013 = vmatprep.subr.mxu0 0.0
  %3014 = vmatpush1.msra.mxu0 0.0
  %3015 = vmatprep.subr.mxu0 0.0
  %3016 = vmatpush1.msra.mxu0 0.0
  %3017 = vmatprep.mubr.f32.mxu0 0.0
  %3018 = vmatmul.mubr.f32.gmra.mrb[0].mxu0 %v2951
  %v3019 = vpop.f32.mrb[0].mxu0
  %v3020 = vadd.f32 %v2945, %v3019
  %v3021 = vpop.f32.mrb[0].mxu0
  %3022 = vdwg.mxu0
  %v3023 = vadd.f32 %v3020, %v64
  %v3024 = vxor.u32 %v3023, 2147483648
  %v3025 = vmul.f32 %v3024, 1.442695
  %v3026 = vpow.pop %v3025
  %v3027 = vadd.f32 %v3026, 1.0
  %v3028 = vrcp.pop %v3027
  %v3029 = vmul.f32 1.0, %v3028
  %v3030 = vmul.f32 %v3029, 2.0
  %v3031 = vsub.f32 %v3030, 1.0
  %v3032 = vmul.f32 %v3029, %v2691
  %3034 = vrot.lane.b32.xlu0 %v3031, 64
  %v3035 = vpop.permute.xlu0 %3034
  %v3037 = vmul.f32 %v3029, %v3035
  %3039 = vrot.lane.b32.xlu0 %v3037, 32
  %v3040 = vpop.permute.xlu0 %3039
  %v3042 = vadd.f32 %v3032, %v3040
  %v3043 = vtanh.pop %v3042
  %3045 = vrot.lane.b32.xlu0 %v3043, 64
  %v3046 = vpop.permute.xlu0 %3045
  %v3048 = vmul.f32 %v3029, %v3046
  %v3049 = vsel %vm2771, 1, 0
  %3050 = vset.pattern.permute.xlu0 0
  %3051 = vperm.xlu0 %3050, %v3049
  %v3052 = vpop.permute.xlu0 %3051
  %vm3053 = vcmp.eq.s32.totalorder %v3052, 1
  %v3054 = vsel %vm3053, %v3048, %v2690
  %v3055 = vsel %vm3053, %v3048, 0.0
  %3057 = vrot.lane.b32.xlu0 %v3055, 32
  %v3058 = vpop.permute.xlu0 %3057
  %v3059 = vsel %vm222, %v3058, 0
  %3061 = vmatprep.subr.mxu0 0.0
  %3062 = vmatpush1.msra.mxu0 %v55
  %3063 = vmatprep.subr.mxu0 0.0
  %3064 = vmatpush1.msra.mxu0 %v56
  %3065 = vmatprep.subr.mxu0 0.0
  %3066 = vmatpush1.msra.mxu0 %v57
  %3067 = vmatprep.subr.mxu0 0.0
  %3068 = vmatpush1.msra.mxu0 %v58
  %3069 = vmatprep.subr.mxu0 0.0
  %3070 = vmatpush1.msra.mxu0 0.0
  %3071 = vmatprep.subr.mxu0 0.0
  %3072 = vmatpush1.msra.mxu0 0.0
  %3073 = vmatprep.subr.mxu0 0.0
  %3074 = vmatpush1.msra.mxu0 0.0
  %3075 = vmatprep.subr.mxu0 0.0
  %3076 = vmatpush1.msra.mxu0 0.0
  %3077 = vmatprep.subr.mxu0 0.0
  %3078 = vmatpush1.msra.mxu0 0.0
  %3079 = vmatprep.subr.mxu0 0.0
  %3080 = vmatpush1.msra.mxu0 0.0
  %3081 = vmatprep.subr.mxu0 0.0
  %3082 = vmatpush1.msra.mxu0 0.0
  %3083 = vmatprep.subr.mxu0 0.0
  %3084 = vmatpush1.msra.mxu0 0.0
  %3085 = vmatprep.subr.mxu0 0.0
  %3086 = vmatpush1.msra.mxu0 0.0
  %3087 = vmatprep.subr.mxu0 0.0
  %3088 = vmatpush1.msra.mxu0 0.0
  %3089 = vmatprep.subr.mxu0 0.0
  %3090 = vmatpush1.msra.mxu0 0.0
  %3091 = vmatprep.subr.mxu0 0.0
  %3092 = vmatpush1.msra.mxu0 0.0
  %3093 = vmatprep.subr.mxu0 0.0
  %3094 = vmatpush1.msra.mxu0 0.0
  %3095 = vmatprep.subr.mxu0 0.0
  %3096 = vmatpush1.msra.mxu0 0.0
  %3097 = vmatprep.subr.mxu0 0.0
  %3098 = vmatpush1.msra.mxu0 0.0
  %3099 = vmatprep.subr.mxu0 0.0
  %3100 = vmatpush1.msra.mxu0 0.0
  %3101 = vmatprep.subr.mxu0 0.0
  %3102 = vmatpush1.msra.mxu0 0.0
  %3103 = vmatprep.subr.mxu0 0.0
  %3104 = vmatpush1.msra.mxu0 0.0
  %3105 = vmatprep.subr.mxu0 0.0
  %3106 = vmatpush1.msra.mxu0 0.0
  %3107 = vmatprep.subr.mxu0 0.0
  %3108 = vmatpush1.msra.mxu0 0.0
  %3109 = vmatprep.subr.mxu0 0.0
  %3110 = vmatpush1.msra.mxu0 0.0
  %3111 = vmatprep.subr.mxu0 0.0
  %3112 = vmatpush1.msra.mxu0 0.0
  %3113 = vmatprep.subr.mxu0 0.0
  %3114 = vmatpush1.msra.mxu0 0.0
  %3115 = vmatprep.subr.mxu0 0.0
  %3116 = vmatpush1.msra.mxu0 0.0
  %3117 = vmatprep.subr.mxu0 0.0
  %3118 = vmatpush1.msra.mxu0 0.0
  %3119 = vmatprep.subr.mxu0 0.0
  %3120 = vmatpush1.msra.mxu0 0.0
  %3121 = vmatprep.subr.mxu0 0.0
  %3122 = vmatpush1.msra.mxu0 0.0
  %3123 = vmatprep.subr.mxu0 0.0
  %3124 = vmatpush1.msra.mxu0 0.0
  %3125 = vmatprep.mubr.f32.mxu0 0.0
  %3126 = vmatmul.mubr.f32.gmra.mrb[0].mxu0 %v3059
  %v3127 = vpop.f32.mrb[0].mxu0
  %v3128 = vadd.f32 %v71, %v3127
  %v3129 = vpop.f32.mrb[0].mxu0
  %3130 = vdwg.mxu0
  %3131 = vst [vmem:[%s12 + $0x38] sm:$0xff] %v3128
  %v3132 = vld [vmem:[%s10] sm:$0xff]
  %v3133 = vld [vmem:[%s10 + $0x8] sm:$0xff]
  %v3134 = vld [vmem:[%s10 + $0x10] sm:$0xff]
  %v3135 = vld [vmem:[%s10 + $0x18] sm:$0xff]
  %v3136 = vld [vmem:[%s11] sm:$0x1]
  %v3138 = vlaneseq
  %v3139 = vshrl.u32 %v3138, 7
  %v3140 = vsub.s32 0, %v3139
  %v3141 = vrot.slane %v3136, %v3140
  %3144 = vrot.lane.b32.xlu0 %v3054, 32
  %v3145 = vpop.permute.xlu0 %3144
  %v3146 = vsel %vm222, %v3145, 0
  %3148 = vmatprep.subr.mxu0 0.0
  %3149 = vmatpush1.msra.mxu0 %v3132
  %3150 = vmatprep.subr.mxu0 0.0
  %3151 = vmatpush1.msra.mxu0 %v3133
  %3152 = vmatprep.subr.mxu0 0.0
  %3153 = vmatpush1.msra.mxu0 %v3134
  %3154 = vmatprep.subr.mxu0 0.0
  %3155 = vmatpush1.msra.mxu0 %v3135
  %3156 = vmatprep.subr.mxu0 0.0
  %3157 = vmatpush1.msra.mxu0 0.0
  %3158 = vmatprep.subr.mxu0 0.0
  %3159 = vmatpush1.msra.mxu0 0.0
  %3160 = vmatprep.subr.mxu0 0.0
  %3161 = vmatpush1.msra.mxu0 0.0
  %3162 = vmatprep.subr.mxu0 0.0
  %3163 = vmatpush1.msra.mxu0 0.0
  %3164 = vmatprep.subr.mxu0 0.0
  %3165 = vmatpush1.msra.mxu0 0.0
  %3166 = vmatprep.subr.mxu0 0.0
  %3167 = vmatpush1.msra.mxu0 0.0
  %3168 = vmatprep.subr.mxu0 0.0
  %3169 = vmatpush1.msra.mxu0 0.0
  %3170 = vmatprep.subr.mxu0 0.0
  %3171 = vmatpush1.msra.mxu0 0.0
  %3172 = vmatprep.subr.mxu0 0.0
  %3173 = vmatpush1.msra.mxu0 0.0
  %3174 = vmatprep.subr.mxu0 0.0
  %3175 = vmatpush1.msra.mxu0 0.0
  %3176 = vmatprep.subr.mxu0 0.0
  %3177 = vmatpush1.msra.mxu0 0.0
  %3178 = vmatprep.subr.mxu0 0.0
  %3179 = vmatpush1.msra.mxu0 0.0
  %3180 = vmatprep.subr.mxu0 0.0
  %3181 = vmatpush1.msra.mxu0 0.0
  %3182 = vmatprep.subr.mxu0 0.0
  %3183 = vmatpush1.msra.mxu0 0.0
  %3184 = vmatprep.subr.mxu0 0.0
  %3185 = vmatpush1.msra.mxu0 0.0
  %3186 = vmatprep.subr.mxu0 0.0
  %3187 = vmatpush1.msra.mxu0 0.0
  %3188 = vmatprep.subr.mxu0 0.0
  %3189 = vmatpush1.msra.mxu0 0.0
  %3190 = vmatprep.subr.mxu0 0.0
  %3191 = vmatpush1.msra.mxu0 0.0
  %3192 = vmatprep.subr.mxu0 0.0
  %3193 = vmatpush1.msra.mxu0 0.0
  %3194 = vmatprep.subr.mxu0 0.0
  %3195 = vmatpush1.msra.mxu0 0.0
  %3196 = vmatprep.subr.mxu0 0.0
  %3197 = vmatpush1.msra.mxu0 0.0
  %3198 = vmatprep.subr.mxu0 0.0
  %3199 = vmatpush1.msra.mxu0 0.0
  %3200 = vmatprep.subr.mxu0 0.0
  %3201 = vmatpush1.msra.mxu0 0.0
  %3202 = vmatprep.subr.mxu0 0.0
  %3203 = vmatpush1.msra.mxu0 0.0
  %3204 = vmatprep.subr.mxu0 0.0
  %3205 = vmatpush1.msra.mxu0 0.0
  %3206 = vmatprep.subr.mxu0 0.0
  %3207 = vmatpush1.msra.mxu0 0.0
  %3208 = vmatprep.subr.mxu0 0.0
  %3209 = vmatpush1.msra.mxu0 0.0
  %3210 = vmatprep.subr.mxu0 0.0
  %3211 = vmatpush1.msra.mxu0 0.0
  %3212 = vmatprep.mubr.f32.mxu0 0.0
  %3213 = vmatmul.mubr.f32.gmra.mrb[0].mxu0 %v3146
  %v3214 = vpop.f32.mrb[0].mxu0
  %v3215 = vadd.f32 %v3141, %v3214
  %v3216 = vpop.f32.mrb[0].mxu0
  %3217 = vdwg.mxu0
  %3218 = vst [vmem:[%s13] sm:$0xff] %v3215
  // Predicated region
  $region50: #{_forward_impl.1} parent=0 // pred_check
    _
  $region51: #{_forward_impl.1} parent=0 // pred_check_branch
    %3220 = sbr.rel (0) target = $region53
  $region52: #{_forward_impl.1} parent=0 // pred_region
    _
  $region53: #{_forward_impl.1} parent=0 // pred_fallthru
    _
  // Predicated region
  $region54: #{_forward_impl.1} parent=0 // pred_check
    _
  $region55: #{_forward_impl.1} parent=0 // pred_check_branch
    %3222 = sbr.rel (0) target = $region57
  $region56: #{_forward_impl.1} parent=0 // pred_region
    _
  $region57: #{_forward_impl.1} parent=0 // pred_fallthru
    _
  // Predicated region
  $region58: #{_forward_impl.1} parent=0 // pred_check
    _
  $region59: #{_forward_impl.1} parent=0 // pred_check_branch
    %3224 = sbr.rel (0) target = $region61
  $region60: #{_forward_impl.1} parent=0 // pred_region
    _
  $region61: #{_forward_impl.1} parent=0 // pred_fallthru
    _
  // Predicated region
  $region62: #{_forward_impl.1} parent=0 // pred_check
    _
  $region63: #{_forward_impl.1} parent=0 // pred_check_branch
    %3226 = sbr.rel (0) target = $region65
  $region64: #{_forward_impl.1} parent=0 // pred_region
    _
  $region65: #{_forward_impl.1} parent=0 // pred_fallthru
    _

</llo_original>
